<compile_context>
chip_gen: v7x
topology: tpu7x:2x2x1
jax: 0.10.0
libtpu: 0.0.40
codegen_flags: <defaults>
</compile_context>

<pallas_src>
import functools
import math

import jax
import jax.numpy as jnp
from jax.experimental import pallas as pl
from jax.experimental.pallas import tpu as pltpu

D_MODEL = 32
NHEAD = 4
DIM_FF = 64
EPS = 1e-5        # nn.LayerNorm default
NEG_INF = -1e9

# rows of the packed (12, E) bias/LN slab
LN1_G, LN1_B, LN2_G, LN2_B, LN3_G, LN3_B = 0, 1, 2, 3, 4, 5
SA_BO, CA_BQ, CA_BK, CA_BV, CA_BO, B2 = 6, 7, 8, 9, 10, 11
# rows of the packed (5, E, E) weight stack
SA_WO, CA_WQ, CA_WK, CA_WV, CA_WO = 0, 1, 2, 3, 4


# ---------------------------- in-kernel helpers ----------------------------

def _layernorm(x, g, b):
    mu = jnp.mean(x, axis=-1, keepdims=True)
    var = jnp.mean((x - mu) ** 2, axis=-1, keepdims=True)
    return (x - mu) * jax.lax.rsqrt(var + EPS) * g + b


def _mha_heads(q, k, v, nhead, add_mask=None):
    # q: (Lq, E), k/v: (S, E)  ->  (Lq, E) context, heads concatenated (lane-dense).
    E = q.shape[-1]
    hd = E // nhead
    scale = 1.0 / math.sqrt(hd)
    outs = []
    for h in range(nhead):                       # static unroll, all inside one kernel
        lo, hi = h * hd, (h + 1) * hd
        qh = q[:, lo:hi] * scale                 # (Lq, hd)
        kh = k[:, lo:hi]                         # (S,  hd)
        vh = v[:, lo:hi]                         # (S,  hd)
        s = jax.lax.dot_general(qh, kh, (((1,), (1,)), ((), ())),
                                preferred_element_type=jnp.float32)   # (Lq, S)
        if add_mask is not None:
            s = s + add_mask                     # (1, S) additive, broadcasts over Lq
        s = s - jnp.max(s, axis=-1, keepdims=True)
        p = jnp.exp(s)
        p = p * pl.reciprocal(jnp.sum(p, axis=-1, keepdims=True), approx=True)
        outs.append(jnp.dot(p, vh, preferred_element_type=jnp.float32))  # (Lq, hd)
    return jnp.concatenate(outs, axis=-1)        # (Lq, E)


# ---------------------------- fused decoder-layer kernel ----------------------------

def _decoder_layer_kernel(
        # per-batch activation blocks
        q_ref, qpos_ref, mem_ref, mpos_ref,
        # additive key-padding mask, full (B, S)
        mask_ref,
        # packed weights
        sa_wqkv_ref,    # (E, 3E)   fused self-attn QKV projection
        w_stack_ref,    # (5, E, E) [sa_out, ca_q, ca_k, ca_v, ca_out]
        w1_ref,         # (E, F)
        w2_ref,         # (F, E)
        bvec_ref,       # (12, E)   LN gammas/betas + (E,)-wide biases
        bwide_ref,      # (2, 3E)   row0 = QKV bias, row1[:F] = FFN bias1
        # output
        o_ref,
        *, nhead):
    b = pl.program_id(0)
    E = q_ref.shape[-1]
    F = w1_ref.shape[-1]

    x = q_ref[0].astype(jnp.float32)        # (L, E) residual stream (no pos)
    xp = qpos_ref[0].astype(jnp.float32)    # (L, E) query positional embedding
    m = mem_ref[0].astype(jnp.float32)      # (S, E) memory
    mp = mpos_ref[0].astype(jnp.float32)    # (S, E) key positional embedding

    bias = bvec_ref[...]                    # (12, E), resident

    def brow(i):
        return bias[i:i + 1, :]             # (1, E)

    # ---------------- self-attention block ----------------
    src = x + xp                            # q = k = v = query + query_pos
    qkv = jnp.dot(src, sa_wqkv_ref[...],
                  preferred_element_type=jnp.float32) + bwide_ref[0:1, :]   # (L, 3E)
    ctx = _mha_heads(qkv[:, :E], qkv[:, E:2 * E], qkv[:, 2 * E:], nhead)
    sa = jnp.dot(ctx, w_stack_ref[SA_WO],
                 preferred_element_type=jnp.float32) + brow(SA_BO)
    x = _layernorm(x + sa, brow(LN1_G), brow(LN1_B))                        # norm1

    # ---------------- cross-attention block ----------------
    q2 = jnp.dot(x + xp, w_stack_ref[CA_WQ],
                 preferred_element_type=jnp.float32) + brow(CA_BQ)          # (L, E)
    k2 = jnp.dot(m + mp, w_stack_ref[CA_WK],
                 preferred_element_type=jnp.float32) + brow(CA_BK)          # (S, E)
    v2 = jnp.dot(m, w_stack_ref[CA_WV],
                 preferred_element_type=jnp.float32) + brow(CA_BV)          # (S, E)
    add_mask = mask_ref[pl.ds(b, 1), :]                                     # (1, S)
    ctx2 = _mha_heads(q2, k2, v2, nhead, add_mask=add_mask)
    ca = jnp.dot(ctx2, w_stack_ref[CA_WO],
                 preferred_element_type=jnp.float32) + brow(CA_BO)
    x = _layernorm(x + ca, brow(LN2_G), brow(LN2_B))                        # norm2

    # ---------------- feed-forward block ----------------
    h = jnp.maximum(jnp.dot(x, w1_ref[...],
                            preferred_element_type=jnp.float32)
                    + bwide_ref[1:2, :F], 0.0)
    ff = jnp.dot(h, w2_ref[...],
                 preferred_element_type=jnp.float32) + brow(B2)
    x = _layernorm(x + ff, brow(LN3_G), brow(LN3_B))                        # norm3

    o_ref[0] = x.astype(o_ref.dtype)


# ---------------------------- host-side glue ----------------------------

def init_params(key):
    # PyTorch-layout parameters (as nn.MultiheadAttention / nn.Linear store them).
    def nrm(k, shape, std=0.02):
        return std * jax.random.normal(k, shape, jnp.float32)

    ks = jax.random.split(key, 12)
    E, F = D_MODEL, DIM_FF
    return {
        'sa_in_w': nrm(ks[0], (3 * E, E)), 'sa_in_b': nrm(ks[1], (3 * E,)),
        'sa_out_w': nrm(ks[2], (E, E)),    'sa_out_b': nrm(ks[3], (E,)),
        'ca_in_w': nrm(ks[4], (3 * E, E)), 'ca_in_b': nrm(ks[5], (3 * E,)),
        'ca_out_w': nrm(ks[6], (E, E)),    'ca_out_b': nrm(ks[7], (E,)),
        'w1': nrm(ks[8], (F, E)),  'b1': nrm(ks[9], (F,)),
        'w2': nrm(ks[10], (E, F)), 'b2': nrm(ks[11], (E,)),
        'ln1_g': jnp.ones((E,), jnp.float32), 'ln1_b': jnp.zeros((E,), jnp.float32),
        'ln2_g': jnp.ones((E,), jnp.float32), 'ln2_b': jnp.zeros((E,), jnp.float32),
        'ln3_g': jnp.ones((E,), jnp.float32), 'ln3_b': jnp.zeros((E,), jnp.float32),
    }


def prepare_params(p):
    # One-time conversion to kernel layout: (K,N)-transposed weights, fused QKV,
    # all small params packed into a handful of slabs (fewer kernel refs / DMAs).
    E, F = D_MODEL, DIM_FF
    assert F <= 3 * E, "FFN bias1 is packed into the (2, 3E) wide-bias slab"

    w_stack = jnp.stack([
        p['sa_out_w'].T,             # SA_WO
        p['ca_in_w'][:E].T,          # CA_WQ
        p['ca_in_w'][E:2 * E].T,     # CA_WK
        p['ca_in_w'][2 * E:].T,      # CA_WV
        p['ca_out_w'].T,             # CA_WO
    ], axis=0)                       # (5, E, E)

    bvec = jnp.stack([
        p['ln1_g'], p['ln1_b'],
        p['ln2_g'], p['ln2_b'],
        p['ln3_g'], p['ln3_b'],
        p['sa_out_b'],
        p['ca_in_b'][:E], p['ca_in_b'][E:2 * E], p['ca_in_b'][2 * E:],
        p['ca_out_b'], p['b2'],
    ], axis=0)                       # (12, E)

    bwide = jnp.zeros((2, 3 * E), jnp.float32)
    bwide = bwide.at[0, :].set(p['sa_in_b'])
    bwide = bwide.at[1, :F].set(p['b1'])

    return {
        'sa_wqkv': p['sa_in_w'].T,   # (E, 3E)
        'w_stack': w_stack,          # (5, E, E)
        'w1': p['w1'].T,             # (E, F)
        'w2': p['w2'].T,             # (F, E)
        'bvec': bvec,                # (12, E)
        'bwide': bwide,              # (2, 3E)
    }


def _replicated_spec(arr):
    nd = arr.ndim
    return pl.BlockSpec(arr.shape, lambda b, _nd=nd: (0,) * _nd)


def transformer_decoder_layer(prepared, query, key, query_pos=None, key_pos=None,
                              key_mask=None):
    # query: (L, B, E), key: (S, B, E)  -- sequence-first like PyTorch (batch_first=False)
    L, B, E = query.shape
    S = key.shape[0]

    qpos = query_pos if query_pos is not None else jnp.zeros_like(query)
    kpos = key_pos if key_pos is not None else jnp.zeros_like(key)

    # batch-major slabs (one contiguous (rows, E) block per batch element)
    qb, qpb = query.transpose(1, 0, 2), qpos.transpose(1, 0, 2)     # (B, L, E)
    kb, kpb = key.transpose(1, 0, 2), kpos.transpose(1, 0, 2)       # (B, S, E)

    if key_mask is None:
        add_mask = jnp.zeros((B, S), jnp.float32)
    else:
        add_mask = jnp.where(key_mask, NEG_INF, 0.0).astype(jnp.float32)

    weights = (prepared['sa_wqkv'], prepared['w_stack'],
               prepared['w1'], prepared['w2'],
               prepared['bvec'], prepared['bwide'])

    in_specs = [
        pl.BlockSpec((1, L, E), lambda b: (b, 0, 0)),   # query
        pl.BlockSpec((1, L, E), lambda b: (b, 0, 0)),   # query_pos
        pl.BlockSpec((1, S, E), lambda b: (b, 0, 0)),   # memory
        pl.BlockSpec((1, S, E), lambda b: (b, 0, 0)),   # key_pos
        _replicated_spec(add_mask),                     # full (B, S) additive mask
    ] + [_replicated_spec(w) for w in weights]          # weights resident across grid

    out = pl.pallas_call(
        functools.partial(_decoder_layer_kernel, nhead=NHEAD),
        grid=(B,),
        in_specs=in_specs,
        out_specs=pl.BlockSpec((1, L, E), lambda b: (b, 0, 0)),
        out_shape=jax.ShapeDtypeStruct((B, L, E), query.dtype),
        compiler_params=pltpu.CompilerParams(dimension_semantics=("parallel",)),
    )(qb, qpb, kb, kpb, add_mask, *weights)

    return out.transpose(1, 0, 2)                       # back to (L, B, E)


# ---------------------------- pure-JAX reference (for correctness) ----------------------------

def _reference_layer(p, query, key, query_pos, key_pos, key_mask):
    E, H = D_MODEL, NHEAD
    hd = E // H

    def ln(x, g, b):
        mu = x.mean(-1, keepdims=True)
        var = ((x - mu) ** 2).mean(-1, keepdims=True)
        return (x - mu) / jnp.sqrt(var + EPS) * g + b

    def mha(q, k, v, wi, bi, wo, bo, mask=None):
        L, B, _ = q.shape
        S = k.shape[0]
        qp = q @ wi[:E].T + bi[:E]
        kp = k @ wi[E:2 * E].T + bi[E:2 * E]
        vp = v @ wi[2 * E:].T + bi[2 * E:]
        qh = qp.transpose(1, 0, 2).reshape(B, L, H, hd).transpose(0, 2, 1, 3)
        kh = kp.transpose(1, 0, 2).reshape(B, S, H, hd).transpose(0, 2, 1, 3)
        vh = vp.transpose(1, 0, 2).reshape(B, S, H, hd).transpose(0, 2, 1, 3)
        s = jnp.einsum('bhld,bhsd->bhls', qh, kh) / math.sqrt(hd)
        if mask is not None:
            s = s + jnp.where(mask, NEG_INF, 0.0)[:, None, None, :]
        pmat = jax.nn.softmax(s, axis=-1)
        ctx = jnp.einsum('bhls,bhsd->bhld', pmat, vh)
        ctx = ctx.transpose(0, 2, 1, 3).reshape(B, L, E).transpose(1, 0, 2)
        return ctx @ wo.T + bo

    qpos = query_pos if query_pos is not None else jnp.zeros_like(query)
    kpos = key_pos if key_pos is not None else jnp.zeros_like(key)

    src = query + qpos
    sa = mha(src, src, src, p['sa_in_w'], p['sa_in_b'], p['sa_out_w'], p['sa_out_b'])
    x = ln(query + sa, p['ln1_g'], p['ln1_b'])

    ca = mha(x + qpos, key + kpos, key,
             p['ca_in_w'], p['ca_in_b'], p['ca_out_w'], p['ca_out_b'],
             mask=key_mask)
    x = ln(x + ca, p['ln2_g'], p['ln2_b'])

    h = jax.nn.relu(x @ p['w1'].T + p['b1'])
    ff = h @ p['w2'].T + p['b2']
    x = ln(x + ff, p['ln3_g'], p['ln3_b'])
    return x


if __name__ == "__main__":
    root = jax.random.PRNGKey(0)
    k1, k2, k3, k4, kp = jax.random.split(root, 5)

    Lq, Lk, B = 8, 10, 2
    query = jax.random.normal(k1, (Lq, B, D_MODEL), jnp.float32)
    memory = jax.random.normal(k2, (Lk, B, D_MODEL), jnp.float32)
    query_pos = jax.random.normal(k3, (Lq, B, D_MODEL), jnp.float32)
    key_pos = jax.random.normal(k4, (Lk, B, D_MODEL), jnp.float32)
    key_mask = jnp.zeros((B, Lk), bool).at[:, -2:].set(True)   # pad last 2 keys

    params = init_params(kp)
    prepared = prepare_params(params)                   # one-time weight re-layout

    layer = jax.jit(transformer_decoder_layer)
    out = layer(prepared, query, memory, query_pos, key_pos, key_mask)
    out = jax.block_until_ready(out)

    ref = _reference_layer(params, query, memory, query_pos, key_pos, key_mask)

    assert out.shape == (Lq, B, D_MODEL)
    assert bool(jnp.all(jnp.isfinite(out)))
    assert bool(jnp.allclose(out, ref, atol=2e-2, rtol=2e-2)), \
        float(jnp.max(jnp.abs(out - ref)))
    print("KERNEL_OK")
</pallas_src>

<mosaic_0001>
module attributes {stable_mosaic.version = 11 : i64} {
  func.func @_decoder_layer_kernel(%arg0: i32, %arg1: memref<1x8x32xf32, #tpu.memory_space<vmem>>, %arg2: memref<1x8x32xf32, #tpu.memory_space<vmem>>, %arg3: memref<1x10x32xf32, #tpu.memory_space<vmem>>, %arg4: memref<1x10x32xf32, #tpu.memory_space<vmem>>, %arg5: memref<2x10xf32, #tpu.memory_space<vmem>>, %arg6: memref<32x96xf32, #tpu.memory_space<vmem>>, %arg7: memref<5x32x32xf32, #tpu.memory_space<vmem>>, %arg8: memref<32x64xf32, #tpu.memory_space<vmem>>, %arg9: memref<64x32xf32, #tpu.memory_space<vmem>>, %arg10: memref<12x32xf32, #tpu.memory_space<vmem>>, %arg11: memref<2x96xf32, #tpu.memory_space<vmem>>, %arg12: memref<1x8x32xf32, #tpu.memory_space<vmem>>) attributes {dimension_semantics = [#tpu.dimension_semantics<parallel>], iteration_bounds = array<i64: 2>, scalar_prefetch = 0 : i64, scratch_operands = 0 : i64, tpu.core_type = #tpu.core_type<tc>, window_params = [{transform_indices = @transform_0, window_bounds = array<i64: 1, 8, 32>}, {transform_indices = @transform_1, window_bounds = array<i64: 1, 8, 32>}, {transform_indices = @transform_2, window_bounds = array<i64: 1, 10, 32>}, {transform_indices = @transform_3, window_bounds = array<i64: 1, 10, 32>}, {pipeline_mode = #tpu.pipeline_mode<synchronous>, transform_indices = @transform_4, window_bounds = array<i64: 2, 10>}, {pipeline_mode = #tpu.pipeline_mode<synchronous>, transform_indices = @transform_5, window_bounds = array<i64: 32, 96>}, {pipeline_mode = #tpu.pipeline_mode<synchronous>, transform_indices = @transform_6, window_bounds = array<i64: 5, 32, 32>}, {pipeline_mode = #tpu.pipeline_mode<synchronous>, transform_indices = @transform_7, window_bounds = array<i64: 32, 64>}, {pipeline_mode = #tpu.pipeline_mode<synchronous>, transform_indices = @transform_8, window_bounds = array<i64: 64, 32>}, {pipeline_mode = #tpu.pipeline_mode<synchronous>, transform_indices = @transform_9, window_bounds = array<i64: 12, 32>}, {pipeline_mode = #tpu.pipeline_mode<synchronous>, transform_indices = @transform_10, window_bounds = array<i64: 2, 96>}, {transform_indices = @transform_11, window_bounds = array<i64: 1, 8, 32>}]} {
    %c0 = arith.constant 0 : index
    %c0_0 = arith.constant 0 : index
    %c0_1 = arith.constant 0 : index
    %0 = vector.load %arg1[%c0, %c0_0, %c0_1] : memref<1x8x32xf32, #tpu.memory_space<vmem>>, vector<1x8x32xf32>
    %1 = vector.shape_cast %0 : vector<1x8x32xf32> to vector<8x32xf32>
    %c0_2 = arith.constant 0 : index
    %c0_3 = arith.constant 0 : index
    %c0_4 = arith.constant 0 : index
    %2 = vector.load %arg2[%c0_2, %c0_3, %c0_4] : memref<1x8x32xf32, #tpu.memory_space<vmem>>, vector<1x8x32xf32>
    %3 = vector.shape_cast %2 : vector<1x8x32xf32> to vector<8x32xf32>
    %c0_5 = arith.constant 0 : index
    %c0_6 = arith.constant 0 : index
    %c0_7 = arith.constant 0 : index
    %4 = vector.load %arg3[%c0_5, %c0_6, %c0_7] : memref<1x10x32xf32, #tpu.memory_space<vmem>>, vector<1x10x32xf32>
    %5 = vector.shape_cast %4 : vector<1x10x32xf32> to vector<10x32xf32>
    %c0_8 = arith.constant 0 : index
    %c0_9 = arith.constant 0 : index
    %c0_10 = arith.constant 0 : index
    %6 = vector.load %arg4[%c0_8, %c0_9, %c0_10] : memref<1x10x32xf32, #tpu.memory_space<vmem>>, vector<1x10x32xf32>
    %7 = vector.shape_cast %6 : vector<1x10x32xf32> to vector<10x32xf32>
    %c0_11 = arith.constant 0 : index
    %c0_12 = arith.constant 0 : index
    %8 = vector.load %arg10[%c0_11, %c0_12] : memref<12x32xf32, #tpu.memory_space<vmem>>, vector<12x32xf32>
    %9 = arith.addf %1, %3 : vector<8x32xf32>
    %c0_13 = arith.constant 0 : index
    %c0_14 = arith.constant 0 : index
    %10 = vector.load %arg6[%c0_13, %c0_14] : memref<32x96xf32, #tpu.memory_space<vmem>>, vector<32x96xf32>
    %cst = arith.constant dense<0.000000e+00> : vector<8x96xf32>
    %11 = tpu.matmul %9, %10, %cst {dimension_numbers = #tpu.dot_dimension_numbers<[1], [0], [0], [1], [0, 0, 1, 1], [], []>} : vector<8x32xf32>, vector<32x96xf32>, vector<8x96xf32> -> vector<8x96xf32>
    %c0_15 = arith.constant 0 : index
    %c0_16 = arith.constant 0 : index
    %12 = vector.load %arg11[%c0_15, %c0_16] : memref<2x96xf32, #tpu.memory_space<vmem>>, vector<1x96xf32>
    %13 = vector.broadcast %12 : vector<1x96xf32> to vector<8x96xf32>
    %14 = arith.addf %11, %13 : vector<8x96xf32>
    %15 = vector.extract_strided_slice %14 {offsets = [0, 0], sizes = [8, 32], strides = [1, 1]} : vector<8x96xf32> to vector<8x32xf32>
    %16 = vector.extract_strided_slice %14 {offsets = [0, 32], sizes = [8, 32], strides = [1, 1]} : vector<8x96xf32> to vector<8x32xf32>
    %17 = vector.extract_strided_slice %14 {offsets = [0, 64], sizes = [8, 32], strides = [1, 1]} : vector<8x96xf32> to vector<8x32xf32>
    %18 = vector.extract_strided_slice %15 {offsets = [0, 0], sizes = [8, 8], strides = [1, 1]} : vector<8x32xf32> to vector<8x8xf32>
    %cst_17 = arith.constant 0.353553385 : f32
    %19 = vector.broadcast %cst_17 : f32 to vector<8x8xf32>
    %20 = arith.mulf %18, %19 : vector<8x8xf32>
    %21 = vector.extract_strided_slice %16 {offsets = [0, 0], sizes = [8, 8], strides = [1, 1]} : vector<8x32xf32> to vector<8x8xf32>
    %22 = vector.extract_strided_slice %17 {offsets = [0, 0], sizes = [8, 8], strides = [1, 1]} : vector<8x32xf32> to vector<8x8xf32>
    %cst_18 = arith.constant dense<0.000000e+00> : vector<8x8xf32>
    %23 = tpu.matmul %20, %21, %cst_18 {dimension_numbers = #tpu.dot_dimension_numbers<[1], [1], [0], [0], [0, 0, 1, 0], [], []>} : vector<8x8xf32>, vector<8x8xf32>, vector<8x8xf32> -> vector<8x8xf32>
    %cst_19 = arith.constant dense<0xFF800000> : vector<8xf32>
    %24 = vector.multi_reduction <maximumf>, %23, %cst_19 [1] : vector<8x8xf32> to vector<8xf32>
    %25 = vector.shape_cast %24 : vector<8xf32> to vector<8x1xf32>
    %26 = vector.broadcast %25 : vector<8x1xf32> to vector<8x8xf32>
    %27 = arith.subf %23, %26 : vector<8x8xf32>
    %28 = math.exp %27 : vector<8x8xf32>
    %cst_20 = arith.constant dense<0.000000e+00> : vector<8xf32>
    %29 = vector.multi_reduction <add>, %28, %cst_20 [1] : vector<8x8xf32> to vector<8xf32>
    %30 = vector.shape_cast %29 : vector<8xf32> to vector<8x1xf32>
    %31 = tpu.reciprocal %30 {approx = true} : vector<8x1xf32> -> vector<8x1xf32>
    %32 = vector.broadcast %31 : vector<8x1xf32> to vector<8x8xf32>
    %33 = arith.mulf %28, %32 : vector<8x8xf32>
    %cst_21 = arith.constant dense<0.000000e+00> : vector<8x8xf32>
    %34 = tpu.matmul %33, %22, %cst_21 {dimension_numbers = #tpu.dot_dimension_numbers<[1], [0], [0], [1], [0, 0, 1, 1], [], []>} : vector<8x8xf32>, vector<8x8xf32>, vector<8x8xf32> -> vector<8x8xf32>
    %35 = vector.extract_strided_slice %15 {offsets = [0, 8], sizes = [8, 8], strides = [1, 1]} : vector<8x32xf32> to vector<8x8xf32>
    %cst_22 = arith.constant 0.353553385 : f32
    %36 = vector.broadcast %cst_22 : f32 to vector<8x8xf32>
    %37 = arith.mulf %35, %36 : vector<8x8xf32>
    %38 = vector.extract_strided_slice %16 {offsets = [0, 8], sizes = [8, 8], strides = [1, 1]} : vector<8x32xf32> to vector<8x8xf32>
    %39 = vector.extract_strided_slice %17 {offsets = [0, 8], sizes = [8, 8], strides = [1, 1]} : vector<8x32xf32> to vector<8x8xf32>
    %cst_23 = arith.constant dense<0.000000e+00> : vector<8x8xf32>
    %40 = tpu.matmul %37, %38, %cst_23 {dimension_numbers = #tpu.dot_dimension_numbers<[1], [1], [0], [0], [0, 0, 1, 0], [], []>} : vector<8x8xf32>, vector<8x8xf32>, vector<8x8xf32> -> vector<8x8xf32>
    %cst_24 = arith.constant dense<0xFF800000> : vector<8xf32>
    %41 = vector.multi_reduction <maximumf>, %40, %cst_24 [1] : vector<8x8xf32> to vector<8xf32>
    %42 = vector.shape_cast %41 : vector<8xf32> to vector<8x1xf32>
    %43 = vector.broadcast %42 : vector<8x1xf32> to vector<8x8xf32>
    %44 = arith.subf %40, %43 : vector<8x8xf32>
    %45 = math.exp %44 : vector<8x8xf32>
    %cst_25 = arith.constant dense<0.000000e+00> : vector<8xf32>
    %46 = vector.multi_reduction <add>, %45, %cst_25 [1] : vector<8x8xf32> to vector<8xf32>
    %47 = vector.shape_cast %46 : vector<8xf32> to vector<8x1xf32>
    %48 = tpu.reciprocal %47 {approx = true} : vector<8x1xf32> -> vector<8x1xf32>
    %49 = vector.broadcast %48 : vector<8x1xf32> to vector<8x8xf32>
    %50 = arith.mulf %45, %49 : vector<8x8xf32>
    %cst_26 = arith.constant dense<0.000000e+00> : vector<8x8xf32>
    %51 = tpu.matmul %50, %39, %cst_26 {dimension_numbers = #tpu.dot_dimension_numbers<[1], [0], [0], [1], [0, 0, 1, 1], [], []>} : vector<8x8xf32>, vector<8x8xf32>, vector<8x8xf32> -> vector<8x8xf32>
    %52 = vector.extract_strided_slice %15 {offsets = [0, 16], sizes = [8, 8], strides = [1, 1]} : vector<8x32xf32> to vector<8x8xf32>
    %cst_27 = arith.constant 0.353553385 : f32
    %53 = vector.broadcast %cst_27 : f32 to vector<8x8xf32>
    %54 = arith.mulf %52, %53 : vector<8x8xf32>
    %55 = vector.extract_strided_slice %16 {offsets = [0, 16], sizes = [8, 8], strides = [1, 1]} : vector<8x32xf32> to vector<8x8xf32>
    %56 = vector.extract_strided_slice %17 {offsets = [0, 16], sizes = [8, 8], strides = [1, 1]} : vector<8x32xf32> to vector<8x8xf32>
    %cst_28 = arith.constant dense<0.000000e+00> : vector<8x8xf32>
    %57 = tpu.matmul %54, %55, %cst_28 {dimension_numbers = #tpu.dot_dimension_numbers<[1], [1], [0], [0], [0, 0, 1, 0], [], []>} : vector<8x8xf32>, vector<8x8xf32>, vector<8x8xf32> -> vector<8x8xf32>
    %cst_29 = arith.constant dense<0xFF800000> : vector<8xf32>
    %58 = vector.multi_reduction <maximumf>, %57, %cst_29 [1] : vector<8x8xf32> to vector<8xf32>
    %59 = vector.shape_cast %58 : vector<8xf32> to vector<8x1xf32>
    %60 = vector.broadcast %59 : vector<8x1xf32> to vector<8x8xf32>
    %61 = arith.subf %57, %60 : vector<8x8xf32>
    %62 = math.exp %61 : vector<8x8xf32>
    %cst_30 = arith.constant dense<0.000000e+00> : vector<8xf32>
    %63 = vector.multi_reduction <add>, %62, %cst_30 [1] : vector<8x8xf32> to vector<8xf32>
    %64 = vector.shape_cast %63 : vector<8xf32> to vector<8x1xf32>
    %65 = tpu.reciprocal %64 {approx = true} : vector<8x1xf32> -> vector<8x1xf32>
    %66 = vector.broadcast %65 : vector<8x1xf32> to vector<8x8xf32>
    %67 = arith.mulf %62, %66 : vector<8x8xf32>
    %cst_31 = arith.constant dense<0.000000e+00> : vector<8x8xf32>
    %68 = tpu.matmul %67, %56, %cst_31 {dimension_numbers = #tpu.dot_dimension_numbers<[1], [0], [0], [1], [0, 0, 1, 1], [], []>} : vector<8x8xf32>, vector<8x8xf32>, vector<8x8xf32> -> vector<8x8xf32>
    %69 = vector.extract_strided_slice %15 {offsets = [0, 24], sizes = [8, 8], strides = [1, 1]} : vector<8x32xf32> to vector<8x8xf32>
    %cst_32 = arith.constant 0.353553385 : f32
    %70 = vector.broadcast %cst_32 : f32 to vector<8x8xf32>
    %71 = arith.mulf %69, %70 : vector<8x8xf32>
    %72 = vector.extract_strided_slice %16 {offsets = [0, 24], sizes = [8, 8], strides = [1, 1]} : vector<8x32xf32> to vector<8x8xf32>
    %73 = vector.extract_strided_slice %17 {offsets = [0, 24], sizes = [8, 8], strides = [1, 1]} : vector<8x32xf32> to vector<8x8xf32>
    %cst_33 = arith.constant dense<0.000000e+00> : vector<8x8xf32>
    %74 = tpu.matmul %71, %72, %cst_33 {dimension_numbers = #tpu.dot_dimension_numbers<[1], [1], [0], [0], [0, 0, 1, 0], [], []>} : vector<8x8xf32>, vector<8x8xf32>, vector<8x8xf32> -> vector<8x8xf32>
    %cst_34 = arith.constant dense<0xFF800000> : vector<8xf32>
    %75 = vector.multi_reduction <maximumf>, %74, %cst_34 [1] : vector<8x8xf32> to vector<8xf32>
    %76 = vector.shape_cast %75 : vector<8xf32> to vector<8x1xf32>
    %77 = vector.broadcast %76 : vector<8x1xf32> to vector<8x8xf32>
    %78 = arith.subf %74, %77 : vector<8x8xf32>
    %79 = math.exp %78 : vector<8x8xf32>
    %cst_35 = arith.constant dense<0.000000e+00> : vector<8xf32>
    %80 = vector.multi_reduction <add>, %79, %cst_35 [1] : vector<8x8xf32> to vector<8xf32>
    %81 = vector.shape_cast %80 : vector<8xf32> to vector<8x1xf32>
    %82 = tpu.reciprocal %81 {approx = true} : vector<8x1xf32> -> vector<8x1xf32>
    %83 = vector.broadcast %82 : vector<8x1xf32> to vector<8x8xf32>
    %84 = arith.mulf %79, %83 : vector<8x8xf32>
    %cst_36 = arith.constant dense<0.000000e+00> : vector<8x8xf32>
    %85 = tpu.matmul %84, %73, %cst_36 {dimension_numbers = #tpu.dot_dimension_numbers<[1], [0], [0], [1], [0, 0, 1, 1], [], []>} : vector<8x8xf32>, vector<8x8xf32>, vector<8x8xf32> -> vector<8x8xf32>
    %86 = tpu.concatenate %34, %51, %68, %85 in 1 : vector<8x8xf32>, vector<8x8xf32>, vector<8x8xf32>, vector<8x8xf32> -> vector<8x32xf32>
    %c0_37 = arith.constant 0 : index
    %c0_38 = arith.constant 0 : index
    %c0_39 = arith.constant 0 : index
    %87 = vector.load %arg7[%c0_37, %c0_38, %c0_39] : memref<5x32x32xf32, #tpu.memory_space<vmem>>, vector<1x32x32xf32>
    %88 = vector.shape_cast %87 : vector<1x32x32xf32> to vector<32x32xf32>
    %cst_40 = arith.constant dense<0.000000e+00> : vector<8x32xf32>
    %89 = tpu.matmul %86, %88, %cst_40 {dimension_numbers = #tpu.dot_dimension_numbers<[1], [0], [0], [1], [0, 0, 1, 1], [], []>} : vector<8x32xf32>, vector<32x32xf32>, vector<8x32xf32> -> vector<8x32xf32>
    %90 = vector.extract_strided_slice %8 {offsets = [6, 0], sizes = [1, 32], strides = [1, 1]} : vector<12x32xf32> to vector<1x32xf32>
    %91 = vector.broadcast %90 : vector<1x32xf32> to vector<8x32xf32>
    %92 = arith.addf %89, %91 : vector<8x32xf32>
    %93 = arith.addf %1, %92 : vector<8x32xf32>
    %94 = vector.extract_strided_slice %8 {offsets = [0, 0], sizes = [1, 32], strides = [1, 1]} : vector<12x32xf32> to vector<1x32xf32>
    %95 = vector.extract_strided_slice %8 {offsets = [1, 0], sizes = [1, 32], strides = [1, 1]} : vector<12x32xf32> to vector<1x32xf32>
    %cst_41 = arith.constant dense<0.000000e+00> : vector<8xf32>
    %96 = vector.multi_reduction <add>, %93, %cst_41 [1] : vector<8x32xf32> to vector<8xf32>
    %97 = vector.shape_cast %96 : vector<8xf32> to vector<8x1xf32>
    %cst_42 = arith.constant 3.200000e+01 : f32
    %98 = vector.broadcast %cst_42 : f32 to vector<8x1xf32>
    %99 = arith.divf %97, %98 : vector<8x1xf32>
    %100 = vector.broadcast %99 : vector<8x1xf32> to vector<8x32xf32>
    %101 = arith.subf %93, %100 : vector<8x32xf32>
    %102 = arith.mulf %101, %101 : vector<8x32xf32>
    %cst_43 = arith.constant dense<0.000000e+00> : vector<8xf32>
    %103 = vector.multi_reduction <add>, %102, %cst_43 [1] : vector<8x32xf32> to vector<8xf32>
    %104 = vector.shape_cast %103 : vector<8xf32> to vector<8x1xf32>
    %cst_44 = arith.constant 3.200000e+01 : f32
    %105 = vector.broadcast %cst_44 : f32 to vector<8x1xf32>
    %106 = arith.divf %104, %105 : vector<8x1xf32>
    %107 = vector.broadcast %99 : vector<8x1xf32> to vector<8x32xf32>
    %108 = arith.subf %93, %107 : vector<8x32xf32>
    %cst_45 = arith.constant 9.99999974E-6 : f32
    %109 = vector.broadcast %cst_45 : f32 to vector<8x1xf32>
    %110 = arith.addf %106, %109 : vector<8x1xf32>
    %111 = math.rsqrt %110 : vector<8x1xf32>
    %112 = vector.broadcast %111 : vector<8x1xf32> to vector<8x32xf32>
    %113 = arith.mulf %108, %112 : vector<8x32xf32>
    %114 = vector.broadcast %94 : vector<1x32xf32> to vector<8x32xf32>
    %115 = arith.mulf %113, %114 : vector<8x32xf32>
    %116 = vector.broadcast %95 : vector<1x32xf32> to vector<8x32xf32>
    %117 = arith.addf %115, %116 : vector<8x32xf32>
    %118 = arith.addf %117, %3 : vector<8x32xf32>
    %c1 = arith.constant 1 : index
    %c0_46 = arith.constant 0 : index
    %c0_47 = arith.constant 0 : index
    %119 = vector.load %arg7[%c1, %c0_46, %c0_47] : memref<5x32x32xf32, #tpu.memory_space<vmem>>, vector<1x32x32xf32>
    %120 = vector.shape_cast %119 : vector<1x32x32xf32> to vector<32x32xf32>
    %cst_48 = arith.constant dense<0.000000e+00> : vector<8x32xf32>
    %121 = tpu.matmul %118, %120, %cst_48 {dimension_numbers = #tpu.dot_dimension_numbers<[1], [0], [0], [1], [0, 0, 1, 1], [], []>} : vector<8x32xf32>, vector<32x32xf32>, vector<8x32xf32> -> vector<8x32xf32>
    %122 = vector.extract_strided_slice %8 {offsets = [7, 0], sizes = [1, 32], strides = [1, 1]} : vector<12x32xf32> to vector<1x32xf32>
    %123 = vector.broadcast %122 : vector<1x32xf32> to vector<8x32xf32>
    %124 = arith.addf %121, %123 : vector<8x32xf32>
    %125 = arith.addf %5, %7 : vector<10x32xf32>
    %c2 = arith.constant 2 : index
    %c0_49 = arith.constant 0 : index
    %c0_50 = arith.constant 0 : index
    %126 = vector.load %arg7[%c2, %c0_49, %c0_50] : memref<5x32x32xf32, #tpu.memory_space<vmem>>, vector<1x32x32xf32>
    %127 = vector.shape_cast %126 : vector<1x32x32xf32> to vector<32x32xf32>
    %cst_51 = arith.constant dense<0.000000e+00> : vector<10x32xf32>
    %128 = tpu.matmul %125, %127, %cst_51 {dimension_numbers = #tpu.dot_dimension_numbers<[1], [0], [0], [1], [0, 0, 1, 1], [], []>} : vector<10x32xf32>, vector<32x32xf32>, vector<10x32xf32> -> vector<10x32xf32>
    %129 = vector.extract_strided_slice %8 {offsets = [8, 0], sizes = [1, 32], strides = [1, 1]} : vector<12x32xf32> to vector<1x32xf32>
    %130 = vector.broadcast %129 : vector<1x32xf32> to vector<10x32xf32>
    %131 = arith.addf %128, %130 : vector<10x32xf32>
    %c3 = arith.constant 3 : index
    %c0_52 = arith.constant 0 : index
    %c0_53 = arith.constant 0 : index
    %132 = vector.load %arg7[%c3, %c0_52, %c0_53] : memref<5x32x32xf32, #tpu.memory_space<vmem>>, vector<1x32x32xf32>
    %133 = vector.shape_cast %132 : vector<1x32x32xf32> to vector<32x32xf32>
    %cst_54 = arith.constant dense<0.000000e+00> : vector<10x32xf32>
    %134 = tpu.matmul %5, %133, %cst_54 {dimension_numbers = #tpu.dot_dimension_numbers<[1], [0], [0], [1], [0, 0, 1, 1], [], []>} : vector<10x32xf32>, vector<32x32xf32>, vector<10x32xf32> -> vector<10x32xf32>
    %135 = vector.extract_strided_slice %8 {offsets = [9, 0], sizes = [1, 32], strides = [1, 1]} : vector<12x32xf32> to vector<1x32xf32>
    %136 = vector.broadcast %135 : vector<1x32xf32> to vector<10x32xf32>
    %137 = arith.addf %134, %136 : vector<10x32xf32>
    %138 = arith.index_cast %arg0 : i32 to index
    %c0_55 = arith.constant 0 : index
    %139 = vector.load %arg5[%138, %c0_55] : memref<2x10xf32, #tpu.memory_space<vmem>>, vector<1x10xf32>
    %140 = vector.extract_strided_slice %124 {offsets = [0, 0], sizes = [8, 8], strides = [1, 1]} : vector<8x32xf32> to vector<8x8xf32>
    %cst_56 = arith.constant 0.353553385 : f32
    %141 = vector.broadcast %cst_56 : f32 to vector<8x8xf32>
    %142 = arith.mulf %140, %141 : vector<8x8xf32>
    %143 = vector.extract_strided_slice %131 {offsets = [0, 0], sizes = [10, 8], strides = [1, 1]} : vector<10x32xf32> to vector<10x8xf32>
    %144 = vector.extract_strided_slice %137 {offsets = [0, 0], sizes = [10, 8], strides = [1, 1]} : vector<10x32xf32> to vector<10x8xf32>
    %cst_57 = arith.constant dense<0.000000e+00> : vector<8x10xf32>
    %145 = tpu.matmul %142, %143, %cst_57 {dimension_numbers = #tpu.dot_dimension_numbers<[1], [1], [0], [0], [0, 0, 1, 0], [], []>} : vector<8x8xf32>, vector<10x8xf32>, vector<8x10xf32> -> vector<8x10xf32>
    %146 = vector.broadcast %139 : vector<1x10xf32> to vector<8x10xf32>
    %147 = arith.addf %145, %146 : vector<8x10xf32>
    %cst_58 = arith.constant dense<0xFF800000> : vector<8xf32>
    %148 = vector.multi_reduction <maximumf>, %147, %cst_58 [1] : vector<8x10xf32> to vector<8xf32>
    %149 = vector.shape_cast %148 : vector<8xf32> to vector<8x1xf32>
    %150 = vector.broadcast %149 : vector<8x1xf32> to vector<8x10xf32>
    %151 = arith.subf %147, %150 : vector<8x10xf32>
    %152 = math.exp %151 : vector<8x10xf32>
    %cst_59 = arith.constant dense<0.000000e+00> : vector<8xf32>
    %153 = vector.multi_reduction <add>, %152, %cst_59 [1] : vector<8x10xf32> to vector<8xf32>
    %154 = vector.shape_cast %153 : vector<8xf32> to vector<8x1xf32>
    %155 = tpu.reciprocal %154 {approx = true} : vector<8x1xf32> -> vector<8x1xf32>
    %156 = vector.broadcast %155 : vector<8x1xf32> to vector<8x10xf32>
    %157 = arith.mulf %152, %156 : vector<8x10xf32>
    %cst_60 = arith.constant dense<0.000000e+00> : vector<8x8xf32>
    %158 = tpu.matmul %157, %144, %cst_60 {dimension_numbers = #tpu.dot_dimension_numbers<[1], [0], [0], [1], [0, 0, 1, 1], [], []>} : vector<8x10xf32>, vector<10x8xf32>, vector<8x8xf32> -> vector<8x8xf32>
    %159 = vector.extract_strided_slice %124 {offsets = [0, 8], sizes = [8, 8], strides = [1, 1]} : vector<8x32xf32> to vector<8x8xf32>
    %cst_61 = arith.constant 0.353553385 : f32
    %160 = vector.broadcast %cst_61 : f32 to vector<8x8xf32>
    %161 = arith.mulf %159, %160 : vector<8x8xf32>
    %162 = vector.extract_strided_slice %131 {offsets = [0, 8], sizes = [10, 8], strides = [1, 1]} : vector<10x32xf32> to vector<10x8xf32>
    %163 = vector.extract_strided_slice %137 {offsets = [0, 8], sizes = [10, 8], strides = [1, 1]} : vector<10x32xf32> to vector<10x8xf32>
    %cst_62 = arith.constant dense<0.000000e+00> : vector<8x10xf32>
    %164 = tpu.matmul %161, %162, %cst_62 {dimension_numbers = #tpu.dot_dimension_numbers<[1], [1], [0], [0], [0, 0, 1, 0], [], []>} : vector<8x8xf32>, vector<10x8xf32>, vector<8x10xf32> -> vector<8x10xf32>
    %165 = vector.broadcast %139 : vector<1x10xf32> to vector<8x10xf32>
    %166 = arith.addf %164, %165 : vector<8x10xf32>
    %cst_63 = arith.constant dense<0xFF800000> : vector<8xf32>
    %167 = vector.multi_reduction <maximumf>, %166, %cst_63 [1] : vector<8x10xf32> to vector<8xf32>
    %168 = vector.shape_cast %167 : vector<8xf32> to vector<8x1xf32>
    %169 = vector.broadcast %168 : vector<8x1xf32> to vector<8x10xf32>
    %170 = arith.subf %166, %169 : vector<8x10xf32>
    %171 = math.exp %170 : vector<8x10xf32>
    %cst_64 = arith.constant dense<0.000000e+00> : vector<8xf32>
    %172 = vector.multi_reduction <add>, %171, %cst_64 [1] : vector<8x10xf32> to vector<8xf32>
    %173 = vector.shape_cast %172 : vector<8xf32> to vector<8x1xf32>
    %174 = tpu.reciprocal %173 {approx = true} : vector<8x1xf32> -> vector<8x1xf32>
    %175 = vector.broadcast %174 : vector<8x1xf32> to vector<8x10xf32>
    %176 = arith.mulf %171, %175 : vector<8x10xf32>
    %cst_65 = arith.constant dense<0.000000e+00> : vector<8x8xf32>
    %177 = tpu.matmul %176, %163, %cst_65 {dimension_numbers = #tpu.dot_dimension_numbers<[1], [0], [0], [1], [0, 0, 1, 1], [], []>} : vector<8x10xf32>, vector<10x8xf32>, vector<8x8xf32> -> vector<8x8xf32>
    %178 = vector.extract_strided_slice %124 {offsets = [0, 16], sizes = [8, 8], strides = [1, 1]} : vector<8x32xf32> to vector<8x8xf32>
    %cst_66 = arith.constant 0.353553385 : f32
    %179 = vector.broadcast %cst_66 : f32 to vector<8x8xf32>
    %180 = arith.mulf %178, %179 : vector<8x8xf32>
    %181 = vector.extract_strided_slice %131 {offsets = [0, 16], sizes = [10, 8], strides = [1, 1]} : vector<10x32xf32> to vector<10x8xf32>
    %182 = vector.extract_strided_slice %137 {offsets = [0, 16], sizes = [10, 8], strides = [1, 1]} : vector<10x32xf32> to vector<10x8xf32>
    %cst_67 = arith.constant dense<0.000000e+00> : vector<8x10xf32>
    %183 = tpu.matmul %180, %181, %cst_67 {dimension_numbers = #tpu.dot_dimension_numbers<[1], [1], [0], [0], [0, 0, 1, 0], [], []>} : vector<8x8xf32>, vector<10x8xf32>, vector<8x10xf32> -> vector<8x10xf32>
    %184 = vector.broadcast %139 : vector<1x10xf32> to vector<8x10xf32>
    %185 = arith.addf %183, %184 : vector<8x10xf32>
    %cst_68 = arith.constant dense<0xFF800000> : vector<8xf32>
    %186 = vector.multi_reduction <maximumf>, %185, %cst_68 [1] : vector<8x10xf32> to vector<8xf32>
    %187 = vector.shape_cast %186 : vector<8xf32> to vector<8x1xf32>
    %188 = vector.broadcast %187 : vector<8x1xf32> to vector<8x10xf32>
    %189 = arith.subf %185, %188 : vector<8x10xf32>
    %190 = math.exp %189 : vector<8x10xf32>
    %cst_69 = arith.constant dense<0.000000e+00> : vector<8xf32>
    %191 = vector.multi_reduction <add>, %190, %cst_69 [1] : vector<8x10xf32> to vector<8xf32>
    %192 = vector.shape_cast %191 : vector<8xf32> to vector<8x1xf32>
    %193 = tpu.reciprocal %192 {approx = true} : vector<8x1xf32> -> vector<8x1xf32>
    %194 = vector.broadcast %193 : vector<8x1xf32> to vector<8x10xf32>
    %195 = arith.mulf %190, %194 : vector<8x10xf32>
    %cst_70 = arith.constant dense<0.000000e+00> : vector<8x8xf32>
    %196 = tpu.matmul %195, %182, %cst_70 {dimension_numbers = #tpu.dot_dimension_numbers<[1], [0], [0], [1], [0, 0, 1, 1], [], []>} : vector<8x10xf32>, vector<10x8xf32>, vector<8x8xf32> -> vector<8x8xf32>
    %197 = vector.extract_strided_slice %124 {offsets = [0, 24], sizes = [8, 8], strides = [1, 1]} : vector<8x32xf32> to vector<8x8xf32>
    %cst_71 = arith.constant 0.353553385 : f32
    %198 = vector.broadcast %cst_71 : f32 to vector<8x8xf32>
    %199 = arith.mulf %197, %198 : vector<8x8xf32>
    %200 = vector.extract_strided_slice %131 {offsets = [0, 24], sizes = [10, 8], strides = [1, 1]} : vector<10x32xf32> to vector<10x8xf32>
    %201 = vector.extract_strided_slice %137 {offsets = [0, 24], sizes = [10, 8], strides = [1, 1]} : vector<10x32xf32> to vector<10x8xf32>
    %cst_72 = arith.constant dense<0.000000e+00> : vector<8x10xf32>
    %202 = tpu.matmul %199, %200, %cst_72 {dimension_numbers = #tpu.dot_dimension_numbers<[1], [1], [0], [0], [0, 0, 1, 0], [], []>} : vector<8x8xf32>, vector<10x8xf32>, vector<8x10xf32> -> vector<8x10xf32>
    %203 = vector.broadcast %139 : vector<1x10xf32> to vector<8x10xf32>
    %204 = arith.addf %202, %203 : vector<8x10xf32>
    %cst_73 = arith.constant dense<0xFF800000> : vector<8xf32>
    %205 = vector.multi_reduction <maximumf>, %204, %cst_73 [1] : vector<8x10xf32> to vector<8xf32>
    %206 = vector.shape_cast %205 : vector<8xf32> to vector<8x1xf32>
    %207 = vector.broadcast %206 : vector<8x1xf32> to vector<8x10xf32>
    %208 = arith.subf %204, %207 : vector<8x10xf32>
    %209 = math.exp %208 : vector<8x10xf32>
    %cst_74 = arith.constant dense<0.000000e+00> : vector<8xf32>
    %210 = vector.multi_reduction <add>, %209, %cst_74 [1] : vector<8x10xf32> to vector<8xf32>
    %211 = vector.shape_cast %210 : vector<8xf32> to vector<8x1xf32>
    %212 = tpu.reciprocal %211 {approx = true} : vector<8x1xf32> -> vector<8x1xf32>
    %213 = vector.broadcast %212 : vector<8x1xf32> to vector<8x10xf32>
    %214 = arith.mulf %209, %213 : vector<8x10xf32>
    %cst_75 = arith.constant dense<0.000000e+00> : vector<8x8xf32>
    %215 = tpu.matmul %214, %201, %cst_75 {dimension_numbers = #tpu.dot_dimension_numbers<[1], [0], [0], [1], [0, 0, 1, 1], [], []>} : vector<8x10xf32>, vector<10x8xf32>, vector<8x8xf32> -> vector<8x8xf32>
    %216 = tpu.concatenate %158, %177, %196, %215 in 1 : vector<8x8xf32>, vector<8x8xf32>, vector<8x8xf32>, vector<8x8xf32> -> vector<8x32xf32>
    %c4 = arith.constant 4 : index
    %c0_76 = arith.constant 0 : index
    %c0_77 = arith.constant 0 : index
    %217 = vector.load %arg7[%c4, %c0_76, %c0_77] : memref<5x32x32xf32, #tpu.memory_space<vmem>>, vector<1x32x32xf32>
    %218 = vector.shape_cast %217 : vector<1x32x32xf32> to vector<32x32xf32>
    %cst_78 = arith.constant dense<0.000000e+00> : vector<8x32xf32>
    %219 = tpu.matmul %216, %218, %cst_78 {dimension_numbers = #tpu.dot_dimension_numbers<[1], [0], [0], [1], [0, 0, 1, 1], [], []>} : vector<8x32xf32>, vector<32x32xf32>, vector<8x32xf32> -> vector<8x32xf32>
    %220 = vector.extract_strided_slice %8 {offsets = [10, 0], sizes = [1, 32], strides = [1, 1]} : vector<12x32xf32> to vector<1x32xf32>
    %221 = vector.broadcast %220 : vector<1x32xf32> to vector<8x32xf32>
    %222 = arith.addf %219, %221 : vector<8x32xf32>
    %223 = arith.addf %117, %222 : vector<8x32xf32>
    %224 = vector.extract_strided_slice %8 {offsets = [2, 0], sizes = [1, 32], strides = [1, 1]} : vector<12x32xf32> to vector<1x32xf32>
    %225 = vector.extract_strided_slice %8 {offsets = [3, 0], sizes = [1, 32], strides = [1, 1]} : vector<12x32xf32> to vector<1x32xf32>
    %cst_79 = arith.constant dense<0.000000e+00> : vector<8xf32>
    %226 = vector.multi_reduction <add>, %223, %cst_79 [1] : vector<8x32xf32> to vector<8xf32>
    %227 = vector.shape_cast %226 : vector<8xf32> to vector<8x1xf32>
    %cst_80 = arith.constant 3.200000e+01 : f32
    %228 = vector.broadcast %cst_80 : f32 to vector<8x1xf32>
    %229 = arith.divf %227, %228 : vector<8x1xf32>
    %230 = vector.broadcast %229 : vector<8x1xf32> to vector<8x32xf32>
    %231 = arith.subf %223, %230 : vector<8x32xf32>
    %232 = arith.mulf %231, %231 : vector<8x32xf32>
    %cst_81 = arith.constant dense<0.000000e+00> : vector<8xf32>
    %233 = vector.multi_reduction <add>, %232, %cst_81 [1] : vector<8x32xf32> to vector<8xf32>
    %234 = vector.shape_cast %233 : vector<8xf32> to vector<8x1xf32>
    %cst_82 = arith.constant 3.200000e+01 : f32
    %235 = vector.broadcast %cst_82 : f32 to vector<8x1xf32>
    %236 = arith.divf %234, %235 : vector<8x1xf32>
    %237 = vector.broadcast %229 : vector<8x1xf32> to vector<8x32xf32>
    %238 = arith.subf %223, %237 : vector<8x32xf32>
    %cst_83 = arith.constant 9.99999974E-6 : f32
    %239 = vector.broadcast %cst_83 : f32 to vector<8x1xf32>
    %240 = arith.addf %236, %239 : vector<8x1xf32>
    %241 = math.rsqrt %240 : vector<8x1xf32>
    %242 = vector.broadcast %241 : vector<8x1xf32> to vector<8x32xf32>
    %243 = arith.mulf %238, %242 : vector<8x32xf32>
    %244 = vector.broadcast %224 : vector<1x32xf32> to vector<8x32xf32>
    %245 = arith.mulf %243, %244 : vector<8x32xf32>
    %246 = vector.broadcast %225 : vector<1x32xf32> to vector<8x32xf32>
    %247 = arith.addf %245, %246 : vector<8x32xf32>
    %c0_84 = arith.constant 0 : index
    %c0_85 = arith.constant 0 : index
    %248 = vector.load %arg8[%c0_84, %c0_85] : memref<32x64xf32, #tpu.memory_space<vmem>>, vector<32x64xf32>
    %cst_86 = arith.constant dense<0.000000e+00> : vector<8x64xf32>
    %249 = tpu.matmul %247, %248, %cst_86 {dimension_numbers = #tpu.dot_dimension_numbers<[1], [0], [0], [1], [0, 0, 1, 1], [], []>} : vector<8x32xf32>, vector<32x64xf32>, vector<8x64xf32> -> vector<8x64xf32>
    %c1_87 = arith.constant 1 : index
    %c0_88 = arith.constant 0 : index
    %250 = vector.load %arg11[%c1_87, %c0_88] : memref<2x96xf32, #tpu.memory_space<vmem>>, vector<1x64xf32>
    %251 = vector.broadcast %250 : vector<1x64xf32> to vector<8x64xf32>
    %252 = arith.addf %249, %251 : vector<8x64xf32>
    %cst_89 = arith.constant 0.000000e+00 : f32
    %253 = vector.broadcast %cst_89 : f32 to vector<8x64xf32>
    %254 = arith.maximumf %252, %253 : vector<8x64xf32>
    %c0_90 = arith.constant 0 : index
    %c0_91 = arith.constant 0 : index
    %255 = vector.load %arg9[%c0_90, %c0_91] : memref<64x32xf32, #tpu.memory_space<vmem>>, vector<64x32xf32>
    %cst_92 = arith.constant dense<0.000000e+00> : vector<8x32xf32>
    %256 = tpu.matmul %254, %255, %cst_92 {dimension_numbers = #tpu.dot_dimension_numbers<[1], [0], [0], [1], [0, 0, 1, 1], [], []>} : vector<8x64xf32>, vector<64x32xf32>, vector<8x32xf32> -> vector<8x32xf32>
    %257 = vector.extract_strided_slice %8 {offsets = [11, 0], sizes = [1, 32], strides = [1, 1]} : vector<12x32xf32> to vector<1x32xf32>
    %258 = vector.broadcast %257 : vector<1x32xf32> to vector<8x32xf32>
    %259 = arith.addf %256, %258 : vector<8x32xf32>
    %260 = arith.addf %247, %259 : vector<8x32xf32>
    %261 = vector.extract_strided_slice %8 {offsets = [4, 0], sizes = [1, 32], strides = [1, 1]} : vector<12x32xf32> to vector<1x32xf32>
    %262 = vector.extract_strided_slice %8 {offsets = [5, 0], sizes = [1, 32], strides = [1, 1]} : vector<12x32xf32> to vector<1x32xf32>
    %cst_93 = arith.constant dense<0.000000e+00> : vector<8xf32>
    %263 = vector.multi_reduction <add>, %260, %cst_93 [1] : vector<8x32xf32> to vector<8xf32>
    %264 = vector.shape_cast %263 : vector<8xf32> to vector<8x1xf32>
    %cst_94 = arith.constant 3.200000e+01 : f32
    %265 = vector.broadcast %cst_94 : f32 to vector<8x1xf32>
    %266 = arith.divf %264, %265 : vector<8x1xf32>
    %267 = vector.broadcast %266 : vector<8x1xf32> to vector<8x32xf32>
    %268 = arith.subf %260, %267 : vector<8x32xf32>
    %269 = arith.mulf %268, %268 : vector<8x32xf32>
    %cst_95 = arith.constant dense<0.000000e+00> : vector<8xf32>
    %270 = vector.multi_reduction <add>, %269, %cst_95 [1] : vector<8x32xf32> to vector<8xf32>
    %271 = vector.shape_cast %270 : vector<8xf32> to vector<8x1xf32>
    %cst_96 = arith.constant 3.200000e+01 : f32
    %272 = vector.broadcast %cst_96 : f32 to vector<8x1xf32>
    %273 = arith.divf %271, %272 : vector<8x1xf32>
    %274 = vector.broadcast %266 : vector<8x1xf32> to vector<8x32xf32>
    %275 = arith.subf %260, %274 : vector<8x32xf32>
    %cst_97 = arith.constant 9.99999974E-6 : f32
    %276 = vector.broadcast %cst_97 : f32 to vector<8x1xf32>
    %277 = arith.addf %273, %276 : vector<8x1xf32>
    %278 = math.rsqrt %277 : vector<8x1xf32>
    %279 = vector.broadcast %278 : vector<8x1xf32> to vector<8x32xf32>
    %280 = arith.mulf %275, %279 : vector<8x32xf32>
    %281 = vector.broadcast %261 : vector<1x32xf32> to vector<8x32xf32>
    %282 = arith.mulf %280, %281 : vector<8x32xf32>
    %283 = vector.broadcast %262 : vector<1x32xf32> to vector<8x32xf32>
    %284 = arith.addf %282, %283 : vector<8x32xf32>
    %c0_98 = arith.constant 0 : index
    %c0_99 = arith.constant 0 : index
    %c0_100 = arith.constant 0 : index
    %285 = vector.load %arg12[%c0_98, %c0_99, %c0_100] : memref<1x8x32xf32, #tpu.memory_space<vmem>>, vector<1x8x32xf32>
    %286 = vector.shape_cast %285 : vector<1x8x32xf32> to vector<8x32xf32>
    %287 = vector.shape_cast %284 : vector<8x32xf32> to vector<1x8x32xf32>
    tpu.vector_store %arg12[%c0_98, %c0_99, %c0_100], %287 {strides = array<i32>} : memref<1x8x32xf32, #tpu.memory_space<vmem>>, vector<1x8x32xf32>,
    return
  }
  func.func @transform_0(%arg0: i32) -> (i32, i32, i32) {
    %c0_i32 = arith.constant 0 : i32
    %c0_i32_0 = arith.constant 0 : i32
    %c0_i32_1 = arith.constant 0 : i32
    return %arg0, %c0_i32, %c0_i32_0 : i32, i32, i32
  }
  func.func @transform_1(%arg0: i32) -> (i32, i32, i32) {
    %c0_i32 = arith.constant 0 : i32
    %c0_i32_0 = arith.constant 0 : i32
    %c0_i32_1 = arith.constant 0 : i32
    return %arg0, %c0_i32, %c0_i32_0 : i32, i32, i32
  }
  func.func @transform_2(%arg0: i32) -> (i32, i32, i32) {
    %c0_i32 = arith.constant 0 : i32
    %c0_i32_0 = arith.constant 0 : i32
    %c0_i32_1 = arith.constant 0 : i32
    return %arg0, %c0_i32, %c0_i32_0 : i32, i32, i32
  }
  func.func @transform_3(%arg0: i32) -> (i32, i32, i32) {
    %c0_i32 = arith.constant 0 : i32
    %c0_i32_0 = arith.constant 0 : i32
    %c0_i32_1 = arith.constant 0 : i32
    return %arg0, %c0_i32, %c0_i32_0 : i32, i32, i32
  }
  func.func @transform_4(%arg0: i32) -> (i32, i32) {
    %c0_i32 = arith.constant 0 : i32
    %c0_i32_0 = arith.constant 0 : i32
    %c0_i32_1 = arith.constant 0 : i32
    return %c0_i32, %c0_i32_0 : i32, i32
  }
  func.func @transform_5(%arg0: i32) -> (i32, i32) {
    %c0_i32 = arith.constant 0 : i32
    %c0_i32_0 = arith.constant 0 : i32
    %c0_i32_1 = arith.constant 0 : i32
    return %c0_i32, %c0_i32_0 : i32, i32
  }
  func.func @transform_6(%arg0: i32) -> (i32, i32, i32) {
    %c0_i32 = arith.constant 0 : i32
    %c0_i32_0 = arith.constant 0 : i32
    %c0_i32_1 = arith.constant 0 : i32
    %c0_i32_2 = arith.constant 0 : i32
    return %c0_i32, %c0_i32_0, %c0_i32_1 : i32, i32, i32
  }
  func.func @transform_7(%arg0: i32) -> (i32, i32) {
    %c0_i32 = arith.constant 0 : i32
    %c0_i32_0 = arith.constant 0 : i32
    %c0_i32_1 = arith.constant 0 : i32
    return %c0_i32, %c0_i32_0 : i32, i32
  }
  func.func @transform_8(%arg0: i32) -> (i32, i32) {
    %c0_i32 = arith.constant 0 : i32
    %c0_i32_0 = arith.constant 0 : i32
    %c0_i32_1 = arith.constant 0 : i32
    return %c0_i32, %c0_i32_0 : i32, i32
  }
  func.func @transform_9(%arg0: i32) -> (i32, i32) {
    %c0_i32 = arith.constant 0 : i32
    %c0_i32_0 = arith.constant 0 : i32
    %c0_i32_1 = arith.constant 0 : i32
    return %c0_i32, %c0_i32_0 : i32, i32
  }
  func.func @transform_10(%arg0: i32) -> (i32, i32) {
    %c0_i32 = arith.constant 0 : i32
    %c0_i32_0 = arith.constant 0 : i32
    %c0_i32_1 = arith.constant 0 : i32
    return %c0_i32, %c0_i32_0 : i32, i32
  }
  func.func @transform_11(%arg0: i32) -> (i32, i32, i32) {
    %c0_i32 = arith.constant 0 : i32
    %c0_i32_0 = arith.constant 0 : i32
    %c0_i32_1 = arith.constant 0 : i32
    return %arg0, %c0_i32, %c0_i32_0 : i32, i32, i32
  }
}

</mosaic_0001>

<llo_original>
// kernel: transformer_decoder_layer.1
$region0: #{transformer_decoder_layer.1}
  #allocation0 [shape = 'u32[]', space=smem, size = 0x4, offset = 0x4, fixed_abs, tag = 'smem constant byte address 0x4 - core index']
  #allocation1 [shape = 'u32[144,128]{1,0:T(1,128)}', space=vmem, size = 0x12000, scoped, tag = 'internal scratch']
  %s0 = inlined_call_operand.vmem [shape: f32[2,8,32], index: 0, kind: input, shape index: {}]
  %s1 = inlined_call_operand.vmem [shape: f32[2,8,32], index: 1, kind: input, shape index: {}]
  %s2 = inlined_call_operand.vmem [shape: f32[2,10,32], index: 2, kind: input, shape index: {}]
  %s3 = inlined_call_operand.vmem [shape: f32[2,10,32], index: 3, kind: input, shape index: {}]
  %s4 = inlined_call_operand.vmem [shape: f32[2,10], index: 4, kind: input, shape index: {}]
  %s5 = inlined_call_operand.vmem [shape: f32[32,96], index: 5, kind: input, shape index: {}]
  %s6 = inlined_call_operand.vmem [shape: f32[5,32,32], index: 6, kind: input, shape index: {}]
  %s7 = inlined_call_operand.vmem [shape: f32[32,64], index: 7, kind: input, shape index: {}]
  %s8 = inlined_call_operand.vmem [shape: f32[64,32], index: 8, kind: input, shape index: {}]
  %s9 = inlined_call_operand.vmem [shape: f32[12,32], index: 9, kind: input, shape index: {}]
  %s10 = inlined_call_operand.vmem [shape: f32[2,96], index: 10, kind: input, shape index: {}]
  %s11 = inlined_call_operand.vmem [shape: f32[2,8,32], index: 11, kind: output, shape index: {}]
  %s12 = sld [smem:[#allocation0]]
  $region77: #{transformer_decoder_layer.1} parent=0
    _
  %s14 = ssub.s32 1, %s12
  %s15 = scalar_select 0, %s14, %s12
  loop: start=0, step=1, limit=4
  $region2: #{transformer_decoder_layer.1} parent=0 // loop_pre_header
    _
  $region3: #{transformer_decoder_layer.1} parent=0 // loop_header
    %s17 = sphi 0, %s21
    %p18 = scmp.ge.s32.totalorder %s17, 4
    %s27 = sphi 0, %s29
    %s30 = sphi 0, %s27
    %s31 = sphi 0, %s30
    %s47 = sphi 0, %s31
    %s53 = sphi 0, %s55
    %s56 = sphi 0, %s53
    %s57 = sphi 0, %s56
    %s73 = sphi 0, %s57
    %s79 = sphi 0, %s81
    %s82 = sphi 0, %s79
    %s83 = sphi 0, %s82
    %s99 = sphi 0, %s83
    %s105 = sphi 0, %s107
    %s108 = sphi 0, %s105
    %s109 = sphi 0, %s108
    %s125 = sphi 0, %s109
    %s129 = sphi 0, %s129
    %s131 = sphi 0, %s129
    %s132 = sphi 0, %s131
    %s146 = sphi 0, %s132
    %s150 = sphi 0, %s150
    %s152 = sphi 0, %s150
    %s153 = sphi 0, %s152
    %s167 = sphi 0, %s153
    %s171 = sphi 0, %s171
    %s173 = sphi 0, %s171
    %s174 = sphi 0, %s173
    %s188 = sphi 0, %s174
    %s192 = sphi 0, %s192
    %s194 = sphi 0, %s192
    %s195 = sphi 0, %s194
    %s209 = sphi 0, %s195
    %s213 = sphi 0, %s213
    %s215 = sphi 0, %s213
    %s216 = sphi 0, %s215
    %s230 = sphi 0, %s216
    %s234 = sphi 0, %s234
    %s236 = sphi 0, %s234
    %s237 = sphi 0, %s236
    %s251 = sphi 0, %s237
    %s255 = sphi 0, %s255
    %s257 = sphi 0, %s255
    %s258 = sphi 0, %s257
    %s272 = sphi 0, %s258
    %s278 = sphi 0, %s280
    %s281 = sphi 0, %s278
    %s282 = sphi 0, %s281
    %s298 = sphi 0, %s282
  $region4: #{transformer_decoder_layer.1} parent=0 // loop_header_branch
    %20 = sbr.rel (%p18) target = $region8
  $region5: #{transformer_decoder_layer.1} parent=0 // loop_body
    %s22 = ssub.s32 %s17, 1
    %s23 = ssub.s32 %s17, 2
    %s24 = sadd.s32 %s17, 1
    %s25 = ssub.s32 %s17, %s24
    %p26 = scmp.eq.s32.totalorder %s25, 0
    %s28 = sadd.s32 %s27, 1
    %s29 = scalar_select %p26, %s27, %s28
    %p32 = pneg %p26
    %p33 = scmp.eq.s32.totalorder %s17, 1
    %p34 = por %p32, %p33
    %p35 = scmp.ne.s32.totalorder %s27, %s30
    %p36 = scmp.eq.s32.totalorder %s17, 0
    %p37 = por %p35, %p36
    %p38 = scmp.ne.s32.totalorder %s27, %s30
    %p39 = scmp.eq.s32.totalorder %s22, 1
    %p40 = por %p38, %p39
    %p41 = scmp.ne.s32.totalorder %s30, %s31
    %p42 = scmp.eq.s32.totalorder %s22, 0
    %p43 = por %p41, %p42
    %p44 = scmp.ne.s32.totalorder %s30, %s31
    %p45 = scmp.eq.s32.totalorder %s23, 1
    %p46 = por %p44, %p45
    %p48 = scmp.ne.s32.totalorder %s31, %s47
    %p49 = scmp.eq.s32.totalorder %s23, 0
    %p50 = por %p48, %p49
    %s51 = ssub.s32 %s17, %s24
    %p52 = scmp.eq.s32.totalorder %s51, 0
    %s54 = sadd.s32 %s53, 1
    %s55 = scalar_select %p52, %s53, %s54
    %p58 = pneg %p52
    %p59 = scmp.eq.s32.totalorder %s17, 1
    %p60 = por %p58, %p59
    %p61 = scmp.ne.s32.totalorder %s53, %s56
    %p62 = scmp.eq.s32.totalorder %s17, 0
    %p63 = por %p61, %p62
    %p64 = scmp.ne.s32.totalorder %s53, %s56
    %p65 = scmp.eq.s32.totalorder %s22, 1
    %p66 = por %p64, %p65
    %p67 = scmp.ne.s32.totalorder %s56, %s57
    %p68 = scmp.eq.s32.totalorder %s22, 0
    %p69 = por %p67, %p68
    %p70 = scmp.ne.s32.totalorder %s56, %s57
    %p71 = scmp.eq.s32.totalorder %s23, 1
    %p72 = por %p70, %p71
    %p74 = scmp.ne.s32.totalorder %s57, %s73
    %p75 = scmp.eq.s32.totalorder %s23, 0
    %p76 = por %p74, %p75
    %s77 = ssub.s32 %s17, %s24
    %p78 = scmp.eq.s32.totalorder %s77, 0
    %s80 = sadd.s32 %s79, 1
    %s81 = scalar_select %p78, %s79, %s80
    %p84 = pneg %p78
    %p85 = scmp.eq.s32.totalorder %s17, 1
    %p86 = por %p84, %p85
    %p87 = scmp.ne.s32.totalorder %s79, %s82
    %p88 = scmp.eq.s32.totalorder %s17, 0
    %p89 = por %p87, %p88
    %p90 = scmp.ne.s32.totalorder %s79, %s82
    %p91 = scmp.eq.s32.totalorder %s22, 1
    %p92 = por %p90, %p91
    %p93 = scmp.ne.s32.totalorder %s82, %s83
    %p94 = scmp.eq.s32.totalorder %s22, 0
    %p95 = por %p93, %p94
    %p96 = scmp.ne.s32.totalorder %s82, %s83
    %p97 = scmp.eq.s32.totalorder %s23, 1
    %p98 = por %p96, %p97
    %p100 = scmp.ne.s32.totalorder %s83, %s99
    %p101 = scmp.eq.s32.totalorder %s23, 0
    %p102 = por %p100, %p101
    %s103 = ssub.s32 %s17, %s24
    %p104 = scmp.eq.s32.totalorder %s103, 0
    %s106 = sadd.s32 %s105, 1
    %s107 = scalar_select %p104, %s105, %s106
    %p110 = pneg %p104
    %p111 = scmp.eq.s32.totalorder %s17, 1
    %p112 = por %p110, %p111
    %p113 = scmp.ne.s32.totalorder %s105, %s108
    %p114 = scmp.eq.s32.totalorder %s17, 0
    %p115 = por %p113, %p114
    %p116 = scmp.ne.s32.totalorder %s105, %s108
    %p117 = scmp.eq.s32.totalorder %s22, 1
    %p118 = por %p116, %p117
    %p119 = scmp.ne.s32.totalorder %s108, %s109
    %p120 = scmp.eq.s32.totalorder %s22, 0
    %p121 = por %p119, %p120
    %p122 = scmp.ne.s32.totalorder %s108, %s109
    %p123 = scmp.eq.s32.totalorder %s23, 1
    %p124 = por %p122, %p123
    %p126 = scmp.ne.s32.totalorder %s109, %s125
    %p127 = scmp.eq.s32.totalorder %s23, 0
    %p128 = por %p126, %p127
    %s130 = sadd.s32 %s129, 1
    %p133 = scmp.eq.s32.totalorder %s17, 1
    %p134 = scmp.ne.s32.totalorder %s129, %s131
    %p135 = scmp.eq.s32.totalorder %s17, 0
    %p136 = por %p134, %p135
    %p137 = scmp.ne.s32.totalorder %s129, %s131
    %p138 = scmp.eq.s32.totalorder %s22, 1
    %p139 = por %p137, %p138
    %p140 = scmp.ne.s32.totalorder %s131, %s132
    %p141 = scmp.eq.s32.totalorder %s22, 0
    %p142 = por %p140, %p141
    %p143 = scmp.ne.s32.totalorder %s131, %s132
    %p144 = scmp.eq.s32.totalorder %s23, 1
    %p145 = por %p143, %p144
    %p147 = scmp.ne.s32.totalorder %s132, %s146
    %p148 = scmp.eq.s32.totalorder %s23, 0
    %p149 = por %p147, %p148
    %s151 = sadd.s32 %s150, 1
    %p154 = scmp.eq.s32.totalorder %s17, 1
    %p155 = scmp.ne.s32.totalorder %s150, %s152
    %p156 = scmp.eq.s32.totalorder %s17, 0
    %p157 = por %p155, %p156
    %p158 = scmp.ne.s32.totalorder %s150, %s152
    %p159 = scmp.eq.s32.totalorder %s22, 1
    %p160 = por %p158, %p159
    %p161 = scmp.ne.s32.totalorder %s152, %s153
    %p162 = scmp.eq.s32.totalorder %s22, 0
    %p163 = por %p161, %p162
    %p164 = scmp.ne.s32.totalorder %s152, %s153
    %p165 = scmp.eq.s32.totalorder %s23, 1
    %p166 = por %p164, %p165
    %p168 = scmp.ne.s32.totalorder %s153, %s167
    %p169 = scmp.eq.s32.totalorder %s23, 0
    %p170 = por %p168, %p169
    %s172 = sadd.s32 %s171, 1
    %p175 = scmp.eq.s32.totalorder %s17, 1
    %p176 = scmp.ne.s32.totalorder %s171, %s173
    %p177 = scmp.eq.s32.totalorder %s17, 0
    %p178 = por %p176, %p177
    %p179 = scmp.ne.s32.totalorder %s171, %s173
    %p180 = scmp.eq.s32.totalorder %s22, 1
    %p181 = por %p179, %p180
    %p182 = scmp.ne.s32.totalorder %s173, %s174
    %p183 = scmp.eq.s32.totalorder %s22, 0
    %p184 = por %p182, %p183
    %p185 = scmp.ne.s32.totalorder %s173, %s174
    %p186 = scmp.eq.s32.totalorder %s23, 1
    %p187 = por %p185, %p186
    %p189 = scmp.ne.s32.totalorder %s174, %s188
    %p190 = scmp.eq.s32.totalorder %s23, 0
    %p191 = por %p189, %p190
    %s193 = sadd.s32 %s192, 1
    %p196 = scmp.eq.s32.totalorder %s17, 1
    %p197 = scmp.ne.s32.totalorder %s192, %s194
    %p198 = scmp.eq.s32.totalorder %s17, 0
    %p199 = por %p197, %p198
    %p200 = scmp.ne.s32.totalorder %s192, %s194
    %p201 = scmp.eq.s32.totalorder %s22, 1
    %p202 = por %p200, %p201
    %p203 = scmp.ne.s32.totalorder %s194, %s195
    %p204 = scmp.eq.s32.totalorder %s22, 0
    %p205 = por %p203, %p204
    %p206 = scmp.ne.s32.totalorder %s194, %s195
    %p207 = scmp.eq.s32.totalorder %s23, 1
    %p208 = por %p206, %p207
    %p210 = scmp.ne.s32.totalorder %s195, %s209
    %p211 = scmp.eq.s32.totalorder %s23, 0
    %p212 = por %p210, %p211
    %s214 = sadd.s32 %s213, 1
    %p217 = scmp.eq.s32.totalorder %s17, 1
    %p218 = scmp.ne.s32.totalorder %s213, %s215
    %p219 = scmp.eq.s32.totalorder %s17, 0
    %p220 = por %p218, %p219
    %p221 = scmp.ne.s32.totalorder %s213, %s215
    %p222 = scmp.eq.s32.totalorder %s22, 1
    %p223 = por %p221, %p222
    %p224 = scmp.ne.s32.totalorder %s215, %s216
    %p225 = scmp.eq.s32.totalorder %s22, 0
    %p226 = por %p224, %p225
    %p227 = scmp.ne.s32.totalorder %s215, %s216
    %p228 = scmp.eq.s32.totalorder %s23, 1
    %p229 = por %p227, %p228
    %p231 = scmp.ne.s32.totalorder %s216, %s230
    %p232 = scmp.eq.s32.totalorder %s23, 0
    %p233 = por %p231, %p232
    %s235 = sadd.s32 %s234, 1
    %p238 = scmp.eq.s32.totalorder %s17, 1
    %p239 = scmp.ne.s32.totalorder %s234, %s236
    %p240 = scmp.eq.s32.totalorder %s17, 0
    %p241 = por %p239, %p240
    %p242 = scmp.ne.s32.totalorder %s234, %s236
    %p243 = scmp.eq.s32.totalorder %s22, 1
    %p244 = por %p242, %p243
    %p245 = scmp.ne.s32.totalorder %s236, %s237
    %p246 = scmp.eq.s32.totalorder %s22, 0
    %p247 = por %p245, %p246
    %p248 = scmp.ne.s32.totalorder %s236, %s237
    %p249 = scmp.eq.s32.totalorder %s23, 1
    %p250 = por %p248, %p249
    %p252 = scmp.ne.s32.totalorder %s237, %s251
    %p253 = scmp.eq.s32.totalorder %s23, 0
    %p254 = por %p252, %p253
    %s256 = sadd.s32 %s255, 1
    %p259 = scmp.eq.s32.totalorder %s17, 1
    %p260 = scmp.ne.s32.totalorder %s255, %s257
    %p261 = scmp.eq.s32.totalorder %s17, 0
    %p262 = por %p260, %p261
    %p263 = scmp.ne.s32.totalorder %s255, %s257
    %p264 = scmp.eq.s32.totalorder %s22, 1
    %p265 = por %p263, %p264
    %p266 = scmp.ne.s32.totalorder %s257, %s258
    %p267 = scmp.eq.s32.totalorder %s22, 0
    %p268 = por %p266, %p267
    %p269 = scmp.ne.s32.totalorder %s257, %s258
    %p270 = scmp.eq.s32.totalorder %s23, 1
    %p271 = por %p269, %p270
    %p273 = scmp.ne.s32.totalorder %s258, %s272
    %p274 = scmp.eq.s32.totalorder %s23, 0
    %p275 = por %p273, %p274
    %s276 = ssub.s32 %s17, %s24
    %p277 = scmp.eq.s32.totalorder %s276, 0
    %s279 = sadd.s32 %s278, 1
    %s280 = scalar_select %p277, %s278, %s279
    %p283 = pneg %p277
    %p284 = scmp.eq.s32.totalorder %s17, 1
    %p285 = por %p283, %p284
    %p286 = scmp.ne.s32.totalorder %s278, %s281
    %p287 = scmp.eq.s32.totalorder %s17, 0
    %p288 = por %p286, %p287
    %p289 = scmp.ne.s32.totalorder %s278, %s281
    %p290 = scmp.eq.s32.totalorder %s22, 1
    %p291 = por %p289, %p290
    %p292 = scmp.ne.s32.totalorder %s281, %s282
    %p293 = scmp.eq.s32.totalorder %s22, 0
    %p294 = por %p292, %p293
    %p295 = scmp.ne.s32.totalorder %s281, %s282
    %p296 = scmp.eq.s32.totalorder %s23, 1
    %p297 = por %p295, %p296
    %p299 = scmp.ne.s32.totalorder %s282, %s298
    %p300 = scmp.eq.s32.totalorder %s23, 0
    %p301 = por %p299, %p300
    %p302 = scmp.le.s32.totalorder 1, %s17
    %p303 = scmp.lt.s32.totalorder %s17, 3
    %p304 = pnand %p302, %p303
    %p305 = pneg %p304
    // Predicated region
    $region9: #{transformer_decoder_layer.1} parent=5 // pred_check
      _
    $region10: #{transformer_decoder_layer.1} parent=5 // pred_check_branch
      %307 = sbr.rel (%p304) target = $region12
    $region11: #{transformer_decoder_layer.1} parent=5 // pred_region
      %s308 = ssub.s32 %s17, 1
      // Predicated region
      $region13: #{transformer_decoder_layer.1} parent=11 // pred_check
        %p309 = pneg %p142
      $region14: #{transformer_decoder_layer.1} parent=11 // pred_check_branch
        %311 = sbr.rel (%p309) target = $region16
      $region15: #{transformer_decoder_layer.1} parent=11 // pred_region
        _
      $region16: #{transformer_decoder_layer.1} parent=11 // pred_fallthru
        _
      // Predicated region
      $region17: #{transformer_decoder_layer.1} parent=11 // pred_check
        %p312 = pneg %p163
      $region18: #{transformer_decoder_layer.1} parent=11 // pred_check_branch
        %314 = sbr.rel (%p312) target = $region20
      $region19: #{transformer_decoder_layer.1} parent=11 // pred_region
        _
      $region20: #{transformer_decoder_layer.1} parent=11 // pred_fallthru
        _
      // Predicated region
      $region21: #{transformer_decoder_layer.1} parent=11 // pred_check
        %p315 = pneg %p184
      $region22: #{transformer_decoder_layer.1} parent=11 // pred_check_branch
        %317 = sbr.rel (%p315) target = $region24
      $region23: #{transformer_decoder_layer.1} parent=11 // pred_region
        _
      $region24: #{transformer_decoder_layer.1} parent=11 // pred_fallthru
        _
      // Predicated region
      $region25: #{transformer_decoder_layer.1} parent=11 // pred_check
        %p318 = pneg %p205
      $region26: #{transformer_decoder_layer.1} parent=11 // pred_check_branch
        %320 = sbr.rel (%p318) target = $region28
      $region27: #{transformer_decoder_layer.1} parent=11 // pred_region
        _
      $region28: #{transformer_decoder_layer.1} parent=11 // pred_fallthru
        _
      // Predicated region
      $region29: #{transformer_decoder_layer.1} parent=11 // pred_check
        %p321 = pneg %p226
      $region30: #{transformer_decoder_layer.1} parent=11 // pred_check_branch
        %323 = sbr.rel (%p321) target = $region32
      $region31: #{transformer_decoder_layer.1} parent=11 // pred_region
        _
      $region32: #{transformer_decoder_layer.1} parent=11 // pred_fallthru
        _
      // Predicated region
      $region33: #{transformer_decoder_layer.1} parent=11 // pred_check
        %p324 = pneg %p247
      $region34: #{transformer_decoder_layer.1} parent=11 // pred_check_branch
        %326 = sbr.rel (%p324) target = $region36
      $region35: #{transformer_decoder_layer.1} parent=11 // pred_region
        _
      $region36: #{transformer_decoder_layer.1} parent=11 // pred_fallthru
        _
      // Predicated region
      $region37: #{transformer_decoder_layer.1} parent=11 // pred_check
        %p327 = pneg %p268
      $region38: #{transformer_decoder_layer.1} parent=11 // pred_check_branch
        %329 = sbr.rel (%p327) target = $region40
      $region39: #{transformer_decoder_layer.1} parent=11 // pred_region
        _
      $region40: #{transformer_decoder_layer.1} parent=11 // pred_fallthru
        _
    $region12: #{transformer_decoder_layer.1} parent=5 // pred_fallthru
      _
    %p330 = scmp.lt.s32.totalorder %s17, 2
    // Predicated region
    $region41: #{transformer_decoder_layer.1} parent=5 // pred_check
      %p331 = pneg %p330
    $region42: #{transformer_decoder_layer.1} parent=5 // pred_check_branch
      %333 = sbr.rel (%p331) target = $region44
    $region43: #{transformer_decoder_layer.1} parent=5 // pred_region
      // Predicated region
      $region45: #{transformer_decoder_layer.1} parent=43 // pred_check
        %p334 = pneg %p37
      $region46: #{transformer_decoder_layer.1} parent=43 // pred_check_branch
        %336 = sbr.rel (%p334) target = $region48
      $region47: #{transformer_decoder_layer.1} parent=43 // pred_region
        %p337 = scmp.lt.s32.totalorder %s17, 1
        %s338 = scalar_select %p337, %s17, 1
        %s339 = smul.addr %s338, 8
        %s340 = scalar_lea.vmem %s0, %s339
      $region48: #{transformer_decoder_layer.1} parent=43 // pred_fallthru
        _
      // Predicated region
      $region49: #{transformer_decoder_layer.1} parent=43 // pred_check
        %p341 = pneg %p63
      $region50: #{transformer_decoder_layer.1} parent=43 // pred_check_branch
        %343 = sbr.rel (%p341) target = $region52
      $region51: #{transformer_decoder_layer.1} parent=43 // pred_region
        %p344 = scmp.lt.s32.totalorder %s17, 1
        %s345 = scalar_select %p344, %s17, 1
        %s346 = smul.addr %s345, 8
        %s347 = scalar_lea.vmem %s1, %s346
      $region52: #{transformer_decoder_layer.1} parent=43 // pred_fallthru
        _
      // Predicated region
      $region53: #{transformer_decoder_layer.1} parent=43 // pred_check
        %p348 = pneg %p89
      $region54: #{transformer_decoder_layer.1} parent=43 // pred_check_branch
        %350 = sbr.rel (%p348) target = $region56
      $region55: #{transformer_decoder_layer.1} parent=43 // pred_region
        %p351 = scmp.lt.s32.totalorder %s17, 1
        %s352 = scalar_select %p351, %s17, 1
        %s353 = smul.addr %s352, 2
        %s354 = smul.addr %s353, 8
        %s355 = scalar_lea.vmem %s2, %s354
      $region56: #{transformer_decoder_layer.1} parent=43 // pred_fallthru
        _
      // Predicated region
      $region57: #{transformer_decoder_layer.1} parent=43 // pred_check
        %p356 = pneg %p115
      $region58: #{transformer_decoder_layer.1} parent=43 // pred_check_branch
        %358 = sbr.rel (%p356) target = $region60
      $region59: #{transformer_decoder_layer.1} parent=43 // pred_region
        %p359 = scmp.lt.s32.totalorder %s17, 1
        %s360 = scalar_select %p359, %s17, 1
        %s361 = smul.addr %s360, 2
        %s362 = smul.addr %s361, 8
        %s363 = scalar_lea.vmem %s3, %s362
      $region60: #{transformer_decoder_layer.1} parent=43 // pred_fallthru
        _
    $region44: #{transformer_decoder_layer.1} parent=5 // pred_fallthru
      _
    %p364 = scmp.le.s32.totalorder 1, %s17
    %p365 = scmp.lt.s32.totalorder %s17, 3
    %p366 = pnand %p364, %p365
    %p367 = pneg %p366
    // Predicated region
    $region61: #{transformer_decoder_layer.1} parent=5 // pred_check
      _
    $region62: #{transformer_decoder_layer.1} parent=5 // pred_check_branch
      %369 = sbr.rel (%p366) target = $region64
    $region63: #{transformer_decoder_layer.1} parent=5 // pred_region
      %s370 = ssub.s32 %s17, 1
      %p371 = scmp.lt.s32.totalorder %s22, 1
      %s372 = scalar_select %p371, %s22, 1
      %s373 = smul.addr %s372, 8
      %s374 = scalar_lea.vmem %s0, %s373
      %p375 = pneg %p43
      %p376 = pneg %p40
      %p377 = scmp.lt.s32.totalorder %s22, 1
      %s378 = scalar_select %p377, %s22, 1
      %s379 = smul.addr %s378, 8
      %s380 = scalar_lea.vmem %s1, %s379
      %p381 = pneg %p69
      %p382 = pneg %p66
      %p383 = scmp.lt.s32.totalorder %s22, 1
      %s384 = scalar_select %p383, %s22, 1
      %s385 = smul.addr %s384, 2
      %s386 = smul.addr %s385, 8
      %s387 = scalar_lea.vmem %s2, %s386
      %p388 = pneg %p95
      %p389 = pneg %p92
      %p390 = scmp.lt.s32.totalorder %s22, 1
      %s391 = scalar_select %p390, %s22, 1
      %s392 = smul.addr %s391, 2
      %s393 = smul.addr %s392, 8
      %s394 = scalar_lea.vmem %s3, %s393
      %p395 = pneg %p121
      %p396 = pneg %p118
      %p397 = pneg %p142
      %p398 = pneg %p139
      %p399 = pneg %p163
      %p400 = pneg %p160
      %p401 = pneg %p184
      %p402 = pneg %p181
      %p403 = pneg %p205
      %p404 = pneg %p202
      %p405 = pneg %p226
      %p406 = pneg %p223
      %p407 = pneg %p247
      %p408 = pneg %p244
      %p409 = pneg %p268
      %p410 = pneg %p265
      %p411 = pneg %p294
      %p412 = pneg %p291
      %p413 = scmp.lt.s32.totalorder %s22, 1
      %s414 = scalar_select %p413, %s22, 1
      %s415 = smul.addr %s414, 8
      %s416 = scalar_lea.vmem %s11, %s415
      %p417 = scmp.lt.s32.totalorder %s22, 1
      %s418 = scalar_select %p417, %s22, 1
      %s419 = smul.addr %s418, 8
      %s420 = scalar_lea.vmem %s0, %s419
      %p421 = scmp.lt.s32.totalorder %s22, 1
      %s422 = scalar_select %p421, %s22, 1
      %s423 = smul.addr %s422, 8
      %s424 = scalar_lea.vmem %s1, %s423
      %p425 = scmp.lt.s32.totalorder %s22, 1
      %s426 = scalar_select %p425, %s22, 1
      %s427 = smul.addr %s426, 2
      %s428 = smul.addr %s427, 8
      %s429 = scalar_lea.vmem %s2, %s428
      %p430 = scmp.lt.s32.totalorder %s22, 1
      %s431 = scalar_select %p430, %s22, 1
      %s432 = smul.addr %s431, 2
      %s433 = smul.addr %s432, 8
      %s434 = scalar_lea.vmem %s3, %s433
      %p435 = scmp.lt.s32.totalorder %s22, 1
      %s436 = scalar_select %p435, %s22, 1
      %s437 = smul.addr %s436, 8
      %s438 = scalar_lea.vmem %s11, %s437
      %v439 = vld [vmem:[%s420] sm:$0xff]
      %v440 = vld [vmem:[%s424] sm:$0xff]
      %v441 = vld [vmem:[%s429] sm:$0xff]
      %v442 = vld [vmem:[%s429 + $0x8] sm:$0x3]
      %v443 = vld [vmem:[%s434] sm:$0xff]
      %v444 = vld [vmem:[%s434 + $0x8] sm:$0x3]
      %v445 = vld [vmem:[%s9] sm:$0xff]
      %v446 = vld [vmem:[%s9 + $0x8] sm:$0xf]
      %v447 = vadd.f32 %v439, %v440
      %v448 = vld [vmem:[%s5] sm:$0xff]
      %v449 = vld [vmem:[%s5 + $0x8] sm:$0xff]
      %v450 = vld [vmem:[%s5 + $0x10] sm:$0xff]
      %v451 = vld [vmem:[%s5 + $0x18] sm:$0xff]
      %v452 = vld [vmem:[%s10] sm:$0x1]
      %v453 = vlaneseq
      %v454 = vshrl.u32 %v453, 7
      %v455 = vsub.s32 0, %v454
      %v456 = vrot.slane %v452, %v455
      %vm457 = vcmask 261120
      %v459 = vsel %vm457, %v447, 0
      %461 = vmatprep.subr.mxu0 0.0
      %462 = vmatpush1.msra.mxu0 %v448
      %463 = vmatprep.subr.mxu0 0.0
      %464 = vmatpush1.msra.mxu0 %v449
      %465 = vmatprep.subr.mxu0 0.0
      %466 = vmatpush1.msra.mxu0 %v450
      %467 = vmatprep.subr.mxu0 0.0
      %468 = vmatpush1.msra.mxu0 %v451
      %469 = vmatprep.subr.mxu0 0.0
      %470 = vmatpush1.msra.mxu0 0.0
      %471 = vmatprep.subr.mxu0 0.0
      %472 = vmatpush1.msra.mxu0 0.0
      %473 = vmatprep.subr.mxu0 0.0
      %474 = vmatpush1.msra.mxu0 0.0
      %475 = vmatprep.subr.mxu0 0.0
      %476 = vmatpush1.msra.mxu0 0.0
      %477 = vmatprep.subr.mxu0 0.0
      %478 = vmatpush1.msra.mxu0 0.0
      %479 = vmatprep.subr.mxu0 0.0
      %480 = vmatpush1.msra.mxu0 0.0
      %481 = vmatprep.subr.mxu0 0.0
      %482 = vmatpush1.msra.mxu0 0.0
      %483 = vmatprep.subr.mxu0 0.0
      %484 = vmatpush1.msra.mxu0 0.0
      %485 = vmatprep.subr.mxu0 0.0
      %486 = vmatpush1.msra.mxu0 0.0
      %487 = vmatprep.subr.mxu0 0.0
      %488 = vmatpush1.msra.mxu0 0.0
      %489 = vmatprep.subr.mxu0 0.0
      %490 = vmatpush1.msra.mxu0 0.0
      %491 = vmatprep.subr.mxu0 0.0
      %492 = vmatpush1.msra.mxu0 0.0
      %493 = vmatprep.subr.mxu0 0.0
      %494 = vmatpush1.msra.mxu0 0.0
      %495 = vmatprep.subr.mxu0 0.0
      %496 = vmatpush1.msra.mxu0 0.0
      %497 = vmatprep.subr.mxu0 0.0
      %498 = vmatpush1.msra.mxu0 0.0
      %499 = vmatprep.subr.mxu0 0.0
      %500 = vmatpush1.msra.mxu0 0.0
      %501 = vmatprep.subr.mxu0 0.0
      %502 = vmatpush1.msra.mxu0 0.0
      %503 = vmatprep.subr.mxu0 0.0
      %504 = vmatpush1.msra.mxu0 0.0
      %505 = vmatprep.subr.mxu0 0.0
      %506 = vmatpush1.msra.mxu0 0.0
      %507 = vmatprep.subr.mxu0 0.0
      %508 = vmatpush1.msra.mxu0 0.0
      %509 = vmatprep.subr.mxu0 0.0
      %510 = vmatpush1.msra.mxu0 0.0
      %511 = vmatprep.subr.mxu0 0.0
      %512 = vmatpush1.msra.mxu0 0.0
      %513 = vmatprep.subr.mxu0 0.0
      %514 = vmatpush1.msra.mxu0 0.0
      %515 = vmatprep.subr.mxu0 0.0
      %516 = vmatpush1.msra.mxu0 0.0
      %517 = vmatprep.subr.mxu0 0.0
      %518 = vmatpush1.msra.mxu0 0.0
      %519 = vmatprep.subr.mxu0 0.0
      %520 = vmatpush1.msra.mxu0 0.0
      %521 = vmatprep.subr.mxu0 0.0
      %522 = vmatpush1.msra.mxu0 0.0
      %523 = vmatprep.subr.mxu0 0.0
      %524 = vmatpush1.msra.mxu0 0.0
      %525 = vmatprep.mubr.f32.mxu0 0.0
      %526 = vmatmul.mubr.f32.gmra.mrb[0].mxu0 %v459
      %v527 = vpop.f32.mrb[0].mxu0
      %v528 = vadd.f32 %v456, %v527
      %v529 = vpop.f32.mrb[0].mxu0
      %530 = vdwg.mxu0
      %v531 = vmul.f32 %v528, 0.35355338
      %533 = vrot.lane.b32.xlu0 %v528, 96
      %v534 = vpop.permute.xlu0 %533
      %vm535 = vcmask 64512
      %v537 = vsel %vm535, %v531, 0
      %v539 = vsel %vm535, %v534, 0
      %541 = vmatprep.subr.mxu0 0.0
      %542 = vmatpush1.xpose.msra.mxu0 %v539
      %543 = vmatprep.subr.mxu0 0.0
      %544 = vmatpush1.xpose.msra.mxu0 0.0
      %545 = vmatprep.subr.mxu0 0.0
      %546 = vmatpush1.xpose.msra.mxu0 0.0
      %547 = vmatprep.subr.mxu0 0.0
      %548 = vmatpush1.xpose.msra.mxu0 0.0
      %549 = vmatprep.subr.mxu0 0.0
      %550 = vmatpush1.xpose.msra.mxu0 0.0
      %551 = vmatprep.subr.mxu0 0.0
      %552 = vmatpush1.xpose.msra.mxu0 0.0
      %553 = vmatprep.subr.mxu0 0.0
      %554 = vmatpush1.xpose.msra.mxu0 0.0
      %555 = vmatprep.subr.mxu0 0.0
      %556 = vmatpush1.xpose.msra.mxu0 0.0
      %557 = vmatprep.subr.mxu0 0.0
      %558 = vmatpush1.xpose.msra.mxu0 0.0
      %559 = vmatprep.subr.mxu0 0.0
      %560 = vmatpush1.xpose.msra.mxu0 0.0
      %561 = vmatprep.subr.mxu0 0.0
      %562 = vmatpush1.xpose.msra.mxu0 0.0
      %563 = vmatprep.subr.mxu0 0.0
      %564 = vmatpush1.xpose.msra.mxu0 0.0
      %565 = vmatprep.subr.mxu0 0.0
      %566 = vmatpush1.xpose.msra.mxu0 0.0
      %567 = vmatprep.subr.mxu0 0.0
      %568 = vmatpush1.xpose.msra.mxu0 0.0
      %569 = vmatprep.subr.mxu0 0.0
      %570 = vmatpush1.xpose.msra.mxu0 0.0
      %571 = vmatprep.subr.mxu0 0.0
      %572 = vmatpush1.xpose.msra.mxu0 0.0
      %573 = vmatprep.subr.mxu0 0.0
      %574 = vmatpush1.xpose.msra.mxu0 0.0
      %575 = vmatprep.subr.mxu0 0.0
      %576 = vmatpush1.xpose.msra.mxu0 0.0
      %577 = vmatprep.subr.mxu0 0.0
      %578 = vmatpush1.xpose.msra.mxu0 0.0
      %579 = vmatprep.subr.mxu0 0.0
      %580 = vmatpush1.xpose.msra.mxu0 0.0
      %581 = vmatprep.subr.mxu0 0.0
      %582 = vmatpush1.xpose.msra.mxu0 0.0
      %583 = vmatprep.subr.mxu0 0.0
      %584 = vmatpush1.xpose.msra.mxu0 0.0
      %585 = vmatprep.subr.mxu0 0.0
      %586 = vmatpush1.xpose.msra.mxu0 0.0
      %587 = vmatprep.subr.mxu0 0.0
      %588 = vmatpush1.xpose.msra.mxu0 0.0
      %589 = vmatprep.subr.mxu0 0.0
      %590 = vmatpush1.xpose.msra.mxu0 0.0
      %591 = vmatprep.subr.mxu0 0.0
      %592 = vmatpush1.xpose.msra.mxu0 0.0
      %593 = vmatprep.subr.mxu0 0.0
      %594 = vmatpush1.xpose.msra.mxu0 0.0
      %595 = vmatprep.subr.mxu0 0.0
      %596 = vmatpush1.xpose.msra.mxu0 0.0
      %597 = vmatprep.subr.mxu0 0.0
      %598 = vmatpush1.xpose.msra.mxu0 0.0
      %599 = vmatprep.subr.mxu0 0.0
      %600 = vmatpush1.xpose.msra.mxu0 0.0
      %601 = vmatprep.subr.mxu0 0.0
      %602 = vmatpush1.xpose.msra.mxu0 0.0
      %603 = vmatprep.subr.mxu0 0.0
      %604 = vmatpush1.xpose.msra.mxu0 0.0
      %605 = vmatprep.mubr.f32.mxu0 0.0
      %606 = vmatmul.mubr.f32.gmra.mrb[0].mxu0 %v537
      %v607 = vpop.f32.mrb[0].mxu0
      %v608 = vadd.f32 0.0, %v607
      %v609 = vpop.f32.mrb[0].mxu0
      %610 = vdwg.mxu0
      %v611 = vsel %vm535, %v608, -inf
      %612 = vmax.xlane.f32.xlu0 %v611
      %v613 = vpop.xlane.xlu0 %612
      %v614 = vsub.f32 %v608, %v613
      %v615 = vmul.f32 %v614, 1.442695
      %v616 = vpow.pop %v615
      %v617 = vsel %vm535, %v616, 0.0
      %618 = vadd.xlane.f32.xlu0 %v617
      %v619 = vpop.xlane.xlu0 %618
      %v620 = vrcp.pop %v619
      %v621 = vmul.f32 %v616, %v620
      %622 = vrot.lane.b32.xlu0 %v528, 64
      %v623 = vpop.permute.xlu0 %622
      %v626 = vsel %vm535, %v621, 0
      %628 = vmatprep.subr.mxu0 0.0
      %629 = vmatpush1.msra.mxu0 %v623
      %630 = vmatprep.subr.mxu0 0.0
      %631 = vmatpush1.msra.mxu0 0.0
      %632 = vmatprep.subr.mxu0 0.0
      %633 = vmatpush1.msra.mxu0 0.0
      %634 = vmatprep.subr.mxu0 0.0
      %635 = vmatpush1.msra.mxu0 0.0
      %636 = vmatprep.subr.mxu0 0.0
      %637 = vmatpush1.msra.mxu0 0.0
      %638 = vmatprep.subr.mxu0 0.0
      %639 = vmatpush1.msra.mxu0 0.0
      %640 = vmatprep.subr.mxu0 0.0
      %641 = vmatpush1.msra.mxu0 0.0
      %642 = vmatprep.subr.mxu0 0.0
      %643 = vmatpush1.msra.mxu0 0.0
      %644 = vmatprep.subr.mxu0 0.0
      %645 = vmatpush1.msra.mxu0 0.0
      %646 = vmatprep.subr.mxu0 0.0
      %647 = vmatpush1.msra.mxu0 0.0
      %648 = vmatprep.subr.mxu0 0.0
      %649 = vmatpush1.msra.mxu0 0.0
      %650 = vmatprep.subr.mxu0 0.0
      %651 = vmatpush1.msra.mxu0 0.0
      %652 = vmatprep.subr.mxu0 0.0
      %653 = vmatpush1.msra.mxu0 0.0
      %654 = vmatprep.subr.mxu0 0.0
      %655 = vmatpush1.msra.mxu0 0.0
      %656 = vmatprep.subr.mxu0 0.0
      %657 = vmatpush1.msra.mxu0 0.0
      %658 = vmatprep.subr.mxu0 0.0
      %659 = vmatpush1.msra.mxu0 0.0
      %660 = vmatprep.subr.mxu0 0.0
      %661 = vmatpush1.msra.mxu0 0.0
      %662 = vmatprep.subr.mxu0 0.0
      %663 = vmatpush1.msra.mxu0 0.0
      %664 = vmatprep.subr.mxu0 0.0
      %665 = vmatpush1.msra.mxu0 0.0
      %666 = vmatprep.subr.mxu0 0.0
      %667 = vmatpush1.msra.mxu0 0.0
      %668 = vmatprep.subr.mxu0 0.0
      %669 = vmatpush1.msra.mxu0 0.0
      %670 = vmatprep.subr.mxu0 0.0
      %671 = vmatpush1.msra.mxu0 0.0
      %672 = vmatprep.subr.mxu0 0.0
      %673 = vmatpush1.msra.mxu0 0.0
      %674 = vmatprep.subr.mxu0 0.0
      %675 = vmatpush1.msra.mxu0 0.0
      %676 = vmatprep.subr.mxu0 0.0
      %677 = vmatpush1.msra.mxu0 0.0
      %678 = vmatprep.subr.mxu0 0.0
      %679 = vmatpush1.msra.mxu0 0.0
      %680 = vmatprep.subr.mxu0 0.0
      %681 = vmatpush1.msra.mxu0 0.0
      %682 = vmatprep.subr.mxu0 0.0
      %683 = vmatpush1.msra.mxu0 0.0
      %684 = vmatprep.subr.mxu0 0.0
      %685 = vmatpush1.msra.mxu0 0.0
      %686 = vmatprep.subr.mxu0 0.0
      %687 = vmatpush1.msra.mxu0 0.0
      %688 = vmatprep.subr.mxu0 0.0
      %689 = vmatpush1.msra.mxu0 0.0
      %690 = vmatprep.subr.mxu0 0.0
      %691 = vmatpush1.msra.mxu0 0.0
      %692 = vmatprep.mubr.f32.mxu0 0.0
      %693 = vmatmul.mubr.f32.gmra.mrb[0].mxu0 %v626
      %v694 = vpop.f32.mrb[0].mxu0
      %v695 = vadd.f32 0.0, %v694
      %v696 = vpop.f32.mrb[0].mxu0
      %697 = vdwg.mxu0
      %698 = vrot.lane.b32.xlu0 %v531, 120
      %v699 = vpop.permute.xlu0 %698
      %700 = vrot.lane.b32.xlu0 %v528, 88
      %v701 = vpop.permute.xlu0 %700
      %v702 = vsel %vm535, %v699, 0
      %v704 = vsel %vm535, %v701, 0
      %706 = vmatprep.subr.mxu0 0.0
      %707 = vmatpush1.xpose.msra.mxu0 %v704
      %708 = vmatprep.subr.mxu0 0.0
      %709 = vmatpush1.xpose.msra.mxu0 0.0
      %710 = vmatprep.subr.mxu0 0.0
      %711 = vmatpush1.xpose.msra.mxu0 0.0
      %712 = vmatprep.subr.mxu0 0.0
      %713 = vmatpush1.xpose.msra.mxu0 0.0
      %714 = vmatprep.subr.mxu0 0.0
      %715 = vmatpush1.xpose.msra.mxu0 0.0
      %716 = vmatprep.subr.mxu0 0.0
      %717 = vmatpush1.xpose.msra.mxu0 0.0
      %718 = vmatprep.subr.mxu0 0.0
      %719 = vmatpush1.xpose.msra.mxu0 0.0
      %720 = vmatprep.subr.mxu0 0.0
      %721 = vmatpush1.xpose.msra.mxu0 0.0
      %722 = vmatprep.subr.mxu0 0.0
      %723 = vmatpush1.xpose.msra.mxu0 0.0
      %724 = vmatprep.subr.mxu0 0.0
      %725 = vmatpush1.xpose.msra.mxu0 0.0
      %726 = vmatprep.subr.mxu0 0.0
      %727 = vmatpush1.xpose.msra.mxu0 0.0
      %728 = vmatprep.subr.mxu0 0.0
      %729 = vmatpush1.xpose.msra.mxu0 0.0
      %730 = vmatprep.subr.mxu0 0.0
      %731 = vmatpush1.xpose.msra.mxu0 0.0
      %732 = vmatprep.subr.mxu0 0.0
      %733 = vmatpush1.xpose.msra.mxu0 0.0
      %734 = vmatprep.subr.mxu0 0.0
      %735 = vmatpush1.xpose.msra.mxu0 0.0
      %736 = vmatprep.subr.mxu0 0.0
      %737 = vmatpush1.xpose.msra.mxu0 0.0
      %738 = vmatprep.subr.mxu0 0.0
      %739 = vmatpush1.xpose.msra.mxu0 0.0
      %740 = vmatprep.subr.mxu0 0.0
      %741 = vmatpush1.xpose.msra.mxu0 0.0
      %742 = vmatprep.subr.mxu0 0.0
      %743 = vmatpush1.xpose.msra.mxu0 0.0
      %744 = vmatprep.subr.mxu0 0.0
      %745 = vmatpush1.xpose.msra.mxu0 0.0
      %746 = vmatprep.subr.mxu0 0.0
      %747 = vmatpush1.xpose.msra.mxu0 0.0
      %748 = vmatprep.subr.mxu0 0.0
      %749 = vmatpush1.xpose.msra.mxu0 0.0
      %750 = vmatprep.subr.mxu0 0.0
      %751 = vmatpush1.xpose.msra.mxu0 0.0
      %752 = vmatprep.subr.mxu0 0.0
      %753 = vmatpush1.xpose.msra.mxu0 0.0
      %754 = vmatprep.subr.mxu0 0.0
      %755 = vmatpush1.xpose.msra.mxu0 0.0
      %756 = vmatprep.subr.mxu0 0.0
      %757 = vmatpush1.xpose.msra.mxu0 0.0
      %758 = vmatprep.subr.mxu0 0.0
      %759 = vmatpush1.xpose.msra.mxu0 0.0
      %760 = vmatprep.subr.mxu0 0.0
      %761 = vmatpush1.xpose.msra.mxu0 0.0
      %762 = vmatprep.subr.mxu0 0.0
      %763 = vmatpush1.xpose.msra.mxu0 0.0
      %764 = vmatprep.subr.mxu0 0.0
      %765 = vmatpush1.xpose.msra.mxu0 0.0
      %766 = vmatprep.subr.mxu0 0.0
      %767 = vmatpush1.xpose.msra.mxu0 0.0
      %768 = vmatprep.subr.mxu0 0.0
      %769 = vmatpush1.xpose.msra.mxu0 0.0
      %770 = vmatprep.mubr.f32.mxu0 0.0
      %771 = vmatmul.mubr.f32.gmra.mrb[0].mxu0 %v702
      %v772 = vpop.f32.mrb[0].mxu0
      %v773 = vadd.f32 0.0, %v772
      %v774 = vpop.f32.mrb[0].mxu0
      %775 = vdwg.mxu0
      %v776 = vsel %vm535, %v773, -inf
      %777 = vmax.xlane.f32.xlu0 %v776
      %v778 = vpop.xlane.xlu0 %777
      %v779 = vsub.f32 %v773, %v778
      %v780 = vmul.f32 %v779, 1.442695
      %v781 = vpow.pop %v780
      %v782 = vsel %vm535, %v781, 0.0
      %783 = vadd.xlane.f32.xlu0 %v782
      %v784 = vpop.xlane.xlu0 %783
      %v785 = vrcp.pop %v784
      %v786 = vmul.f32 %v781, %v785
      %787 = vrot.lane.b32.xlu0 %v528, 56
      %v788 = vpop.permute.xlu0 %787
      %v791 = vsel %vm535, %v786, 0
      %793 = vmatprep.subr.mxu0 0.0
      %794 = vmatpush1.msra.mxu0 %v788
      %795 = vmatprep.subr.mxu0 0.0
      %796 = vmatpush1.msra.mxu0 0.0
      %797 = vmatprep.subr.mxu0 0.0
      %798 = vmatpush1.msra.mxu0 0.0
      %799 = vmatprep.subr.mxu0 0.0
      %800 = vmatpush1.msra.mxu0 0.0
      %801 = vmatprep.subr.mxu0 0.0
      %802 = vmatpush1.msra.mxu0 0.0
      %803 = vmatprep.subr.mxu0 0.0
      %804 = vmatpush1.msra.mxu0 0.0
      %805 = vmatprep.subr.mxu0 0.0
      %806 = vmatpush1.msra.mxu0 0.0
      %807 = vmatprep.subr.mxu0 0.0
      %808 = vmatpush1.msra.mxu0 0.0
      %809 = vmatprep.subr.mxu0 0.0
      %810 = vmatpush1.msra.mxu0 0.0
      %811 = vmatprep.subr.mxu0 0.0
      %812 = vmatpush1.msra.mxu0 0.0
      %813 = vmatprep.subr.mxu0 0.0
      %814 = vmatpush1.msra.mxu0 0.0
      %815 = vmatprep.subr.mxu0 0.0
      %816 = vmatpush1.msra.mxu0 0.0
      %817 = vmatprep.subr.mxu0 0.0
      %818 = vmatpush1.msra.mxu0 0.0
      %819 = vmatprep.subr.mxu0 0.0
      %820 = vmatpush1.msra.mxu0 0.0
      %821 = vmatprep.subr.mxu0 0.0
      %822 = vmatpush1.msra.mxu0 0.0
      %823 = vmatprep.subr.mxu0 0.0
      %824 = vmatpush1.msra.mxu0 0.0
      %825 = vmatprep.subr.mxu0 0.0
      %826 = vmatpush1.msra.mxu0 0.0
      %827 = vmatprep.subr.mxu0 0.0
      %828 = vmatpush1.msra.mxu0 0.0
      %829 = vmatprep.subr.mxu0 0.0
      %830 = vmatpush1.msra.mxu0 0.0
      %831 = vmatprep.subr.mxu0 0.0
      %832 = vmatpush1.msra.mxu0 0.0
      %833 = vmatprep.subr.mxu0 0.0
      %834 = vmatpush1.msra.mxu0 0.0
      %835 = vmatprep.subr.mxu0 0.0
      %836 = vmatpush1.msra.mxu0 0.0
      %837 = vmatprep.subr.mxu0 0.0
      %838 = vmatpush1.msra.mxu0 0.0
      %839 = vmatprep.subr.mxu0 0.0
      %840 = vmatpush1.msra.mxu0 0.0
      %841 = vmatprep.subr.mxu0 0.0
      %842 = vmatpush1.msra.mxu0 0.0
      %843 = vmatprep.subr.mxu0 0.0
      %844 = vmatpush1.msra.mxu0 0.0
      %845 = vmatprep.subr.mxu0 0.0
      %846 = vmatpush1.msra.mxu0 0.0
      %847 = vmatprep.subr.mxu0 0.0
      %848 = vmatpush1.msra.mxu0 0.0
      %849 = vmatprep.subr.mxu0 0.0
      %850 = vmatpush1.msra.mxu0 0.0
      %851 = vmatprep.subr.mxu0 0.0
      %852 = vmatpush1.msra.mxu0 0.0
      %853 = vmatprep.subr.mxu0 0.0
      %854 = vmatpush1.msra.mxu0 0.0
      %855 = vmatprep.subr.mxu0 0.0
      %856 = vmatpush1.msra.mxu0 0.0
      %857 = vmatprep.mubr.f32.mxu0 0.0
      %858 = vmatmul.mubr.f32.gmra.mrb[0].mxu0 %v791
      %v859 = vpop.f32.mrb[0].mxu0
      %v860 = vadd.f32 0.0, %v859
      %v861 = vpop.f32.mrb[0].mxu0
      %862 = vdwg.mxu0
      %863 = vrot.lane.b32.xlu0 %v531, 112
      %v864 = vpop.permute.xlu0 %863
      %865 = vrot.lane.b32.xlu0 %v528, 80
      %v866 = vpop.permute.xlu0 %865
      %v867 = vsel %vm535, %v864, 0
      %v869 = vsel %vm535, %v866, 0
      %871 = vmatprep.subr.mxu0 0.0
      %872 = vmatpush1.xpose.msra.mxu0 %v869
      %873 = vmatprep.subr.mxu0 0.0
      %874 = vmatpush1.xpose.msra.mxu0 0.0
      %875 = vmatprep.subr.mxu0 0.0
      %876 = vmatpush1.xpose.msra.mxu0 0.0
      %877 = vmatprep.subr.mxu0 0.0
      %878 = vmatpush1.xpose.msra.mxu0 0.0
      %879 = vmatprep.subr.mxu0 0.0
      %880 = vmatpush1.xpose.msra.mxu0 0.0
      %881 = vmatprep.subr.mxu0 0.0
      %882 = vmatpush1.xpose.msra.mxu0 0.0
      %883 = vmatprep.subr.mxu0 0.0
      %884 = vmatpush1.xpose.msra.mxu0 0.0
      %885 = vmatprep.subr.mxu0 0.0
      %886 = vmatpush1.xpose.msra.mxu0 0.0
      %887 = vmatprep.subr.mxu0 0.0
      %888 = vmatpush1.xpose.msra.mxu0 0.0
      %889 = vmatprep.subr.mxu0 0.0
      %890 = vmatpush1.xpose.msra.mxu0 0.0
      %891 = vmatprep.subr.mxu0 0.0
      %892 = vmatpush1.xpose.msra.mxu0 0.0
      %893 = vmatprep.subr.mxu0 0.0
      %894 = vmatpush1.xpose.msra.mxu0 0.0
      %895 = vmatprep.subr.mxu0 0.0
      %896 = vmatpush1.xpose.msra.mxu0 0.0
      %897 = vmatprep.subr.mxu0 0.0
      %898 = vmatpush1.xpose.msra.mxu0 0.0
      %899 = vmatprep.subr.mxu0 0.0
      %900 = vmatpush1.xpose.msra.mxu0 0.0
      %901 = vmatprep.subr.mxu0 0.0
      %902 = vmatpush1.xpose.msra.mxu0 0.0
      %903 = vmatprep.subr.mxu0 0.0
      %904 = vmatpush1.xpose.msra.mxu0 0.0
      %905 = vmatprep.subr.mxu0 0.0
      %906 = vmatpush1.xpose.msra.mxu0 0.0
      %907 = vmatprep.subr.mxu0 0.0
      %908 = vmatpush1.xpose.msra.mxu0 0.0
      %909 = vmatprep.subr.mxu0 0.0
      %910 = vmatpush1.xpose.msra.mxu0 0.0
      %911 = vmatprep.subr.mxu0 0.0
      %912 = vmatpush1.xpose.msra.mxu0 0.0
      %913 = vmatprep.subr.mxu0 0.0
      %914 = vmatpush1.xpose.msra.mxu0 0.0
      %915 = vmatprep.subr.mxu0 0.0
      %916 = vmatpush1.xpose.msra.mxu0 0.0
      %917 = vmatprep.subr.mxu0 0.0
      %918 = vmatpush1.xpose.msra.mxu0 0.0
      %919 = vmatprep.subr.mxu0 0.0
      %920 = vmatpush1.xpose.msra.mxu0 0.0
      %921 = vmatprep.subr.mxu0 0.0
      %922 = vmatpush1.xpose.msra.mxu0 0.0
      %923 = vmatprep.subr.mxu0 0.0
      %924 = vmatpush1.xpose.msra.mxu0 0.0
      %925 = vmatprep.subr.mxu0 0.0
      %926 = vmatpush1.xpose.msra.mxu0 0.0
      %927 = vmatprep.subr.mxu0 0.0
      %928 = vmatpush1.xpose.msra.mxu0 0.0
      %929 = vmatprep.subr.mxu0 0.0
      %930 = vmatpush1.xpose.msra.mxu0 0.0
      %931 = vmatprep.subr.mxu0 0.0
      %932 = vmatpush1.xpose.msra.mxu0 0.0
      %933 = vmatprep.subr.mxu0 0.0
      %934 = vmatpush1.xpose.msra.mxu0 0.0
      %935 = vmatprep.mubr.f32.mxu0 0.0
      %936 = vmatmul.mubr.f32.gmra.mrb[0].mxu0 %v867
      %v937 = vpop.f32.mrb[0].mxu0
      %v938 = vadd.f32 0.0, %v937
      %v939 = vpop.f32.mrb[0].mxu0
      %940 = vdwg.mxu0
      %v941 = vsel %vm535, %v938, -inf
      %942 = vmax.xlane.f32.xlu0 %v941
      %v943 = vpop.xlane.xlu0 %942
      %v944 = vsub.f32 %v938, %v943
      %v945 = vmul.f32 %v944, 1.442695
      %v946 = vpow.pop %v945
      %v947 = vsel %vm535, %v946, 0.0
      %948 = vadd.xlane.f32.xlu0 %v947
      %v949 = vpop.xlane.xlu0 %948
      %v950 = vrcp.pop %v949
      %v951 = vmul.f32 %v946, %v950
      %952 = vrot.lane.b32.xlu0 %v528, 48
      %v953 = vpop.permute.xlu0 %952
      %v956 = vsel %vm535, %v951, 0
      %958 = vmatprep.subr.mxu0 0.0
      %959 = vmatpush1.msra.mxu0 %v953
      %960 = vmatprep.subr.mxu0 0.0
      %961 = vmatpush1.msra.mxu0 0.0
      %962 = vmatprep.subr.mxu0 0.0
      %963 = vmatpush1.msra.mxu0 0.0
      %964 = vmatprep.subr.mxu0 0.0
      %965 = vmatpush1.msra.mxu0 0.0
      %966 = vmatprep.subr.mxu0 0.0
      %967 = vmatpush1.msra.mxu0 0.0
      %968 = vmatprep.subr.mxu0 0.0
      %969 = vmatpush1.msra.mxu0 0.0
      %970 = vmatprep.subr.mxu0 0.0
      %971 = vmatpush1.msra.mxu0 0.0
      %972 = vmatprep.subr.mxu0 0.0
      %973 = vmatpush1.msra.mxu0 0.0
      %974 = vmatprep.subr.mxu0 0.0
      %975 = vmatpush1.msra.mxu0 0.0
      %976 = vmatprep.subr.mxu0 0.0
      %977 = vmatpush1.msra.mxu0 0.0
      %978 = vmatprep.subr.mxu0 0.0
      %979 = vmatpush1.msra.mxu0 0.0
      %980 = vmatprep.subr.mxu0 0.0
      %981 = vmatpush1.msra.mxu0 0.0
      %982 = vmatprep.subr.mxu0 0.0
      %983 = vmatpush1.msra.mxu0 0.0
      %984 = vmatprep.subr.mxu0 0.0
      %985 = vmatpush1.msra.mxu0 0.0
      %986 = vmatprep.subr.mxu0 0.0
      %987 = vmatpush1.msra.mxu0 0.0
      %988 = vmatprep.subr.mxu0 0.0
      %989 = vmatpush1.msra.mxu0 0.0
      %990 = vmatprep.subr.mxu0 0.0
      %991 = vmatpush1.msra.mxu0 0.0
      %992 = vmatprep.subr.mxu0 0.0
      %993 = vmatpush1.msra.mxu0 0.0
      %994 = vmatprep.subr.mxu0 0.0
      %995 = vmatpush1.msra.mxu0 0.0
      %996 = vmatprep.subr.mxu0 0.0
      %997 = vmatpush1.msra.mxu0 0.0
      %998 = vmatprep.subr.mxu0 0.0
      %999 = vmatpush1.msra.mxu0 0.0
      %1000 = vmatprep.subr.mxu0 0.0
      %1001 = vmatpush1.msra.mxu0 0.0
      %1002 = vmatprep.subr.mxu0 0.0
      %1003 = vmatpush1.msra.mxu0 0.0
      %1004 = vmatprep.subr.mxu0 0.0
      %1005 = vmatpush1.msra.mxu0 0.0
      %1006 = vmatprep.subr.mxu0 0.0
      %1007 = vmatpush1.msra.mxu0 0.0
      %1008 = vmatprep.subr.mxu0 0.0
      %1009 = vmatpush1.msra.mxu0 0.0
      %1010 = vmatprep.subr.mxu0 0.0
      %1011 = vmatpush1.msra.mxu0 0.0
      %1012 = vmatprep.subr.mxu0 0.0
      %1013 = vmatpush1.msra.mxu0 0.0
      %1014 = vmatprep.subr.mxu0 0.0
      %1015 = vmatpush1.msra.mxu0 0.0
      %1016 = vmatprep.subr.mxu0 0.0
      %1017 = vmatpush1.msra.mxu0 0.0
      %1018 = vmatprep.subr.mxu0 0.0
      %1019 = vmatpush1.msra.mxu0 0.0
      %1020 = vmatprep.subr.mxu0 0.0
      %1021 = vmatpush1.msra.mxu0 0.0
      %1022 = vmatprep.mubr.f32.mxu0 0.0
      %1023 = vmatmul.mubr.f32.gmra.mrb[0].mxu0 %v956
      %v1024 = vpop.f32.mrb[0].mxu0
      %v1025 = vadd.f32 0.0, %v1024
      %v1026 = vpop.f32.mrb[0].mxu0
      %1027 = vdwg.mxu0
      %1028 = vrot.lane.b32.xlu0 %v531, 104
      %v1029 = vpop.permute.xlu0 %1028
      %1030 = vrot.lane.b32.xlu0 %v528, 72
      %v1031 = vpop.permute.xlu0 %1030
      %v1032 = vsel %vm535, %v1029, 0
      %v1034 = vsel %vm535, %v1031, 0
      %1036 = vmatprep.subr.mxu0 0.0
      %1037 = vmatpush1.xpose.msra.mxu0 %v1034
      %1038 = vmatprep.subr.mxu0 0.0
      %1039 = vmatpush1.xpose.msra.mxu0 0.0
      %1040 = vmatprep.subr.mxu0 0.0
      %1041 = vmatpush1.xpose.msra.mxu0 0.0
      %1042 = vmatprep.subr.mxu0 0.0
      %1043 = vmatpush1.xpose.msra.mxu0 0.0
      %1044 = vmatprep.subr.mxu0 0.0
      %1045 = vmatpush1.xpose.msra.mxu0 0.0
      %1046 = vmatprep.subr.mxu0 0.0
      %1047 = vmatpush1.xpose.msra.mxu0 0.0
      %1048 = vmatprep.subr.mxu0 0.0
      %1049 = vmatpush1.xpose.msra.mxu0 0.0
      %1050 = vmatprep.subr.mxu0 0.0
      %1051 = vmatpush1.xpose.msra.mxu0 0.0
      %1052 = vmatprep.subr.mxu0 0.0
      %1053 = vmatpush1.xpose.msra.mxu0 0.0
      %1054 = vmatprep.subr.mxu0 0.0
      %1055 = vmatpush1.xpose.msra.mxu0 0.0
      %1056 = vmatprep.subr.mxu0 0.0
      %1057 = vmatpush1.xpose.msra.mxu0 0.0
      %1058 = vmatprep.subr.mxu0 0.0
      %1059 = vmatpush1.xpose.msra.mxu0 0.0
      %1060 = vmatprep.subr.mxu0 0.0
      %1061 = vmatpush1.xpose.msra.mxu0 0.0
      %1062 = vmatprep.subr.mxu0 0.0
      %1063 = vmatpush1.xpose.msra.mxu0 0.0
      %1064 = vmatprep.subr.mxu0 0.0
      %1065 = vmatpush1.xpose.msra.mxu0 0.0
      %1066 = vmatprep.subr.mxu0 0.0
      %1067 = vmatpush1.xpose.msra.mxu0 0.0
      %1068 = vmatprep.subr.mxu0 0.0
      %1069 = vmatpush1.xpose.msra.mxu0 0.0
      %1070 = vmatprep.subr.mxu0 0.0
      %1071 = vmatpush1.xpose.msra.mxu0 0.0
      %1072 = vmatprep.subr.mxu0 0.0
      %1073 = vmatpush1.xpose.msra.mxu0 0.0
      %1074 = vmatprep.subr.mxu0 0.0
      %1075 = vmatpush1.xpose.msra.mxu0 0.0
      %1076 = vmatprep.subr.mxu0 0.0
      %1077 = vmatpush1.xpose.msra.mxu0 0.0
      %1078 = vmatprep.subr.mxu0 0.0
      %1079 = vmatpush1.xpose.msra.mxu0 0.0
      %1080 = vmatprep.subr.mxu0 0.0
      %1081 = vmatpush1.xpose.msra.mxu0 0.0
      %1082 = vmatprep.subr.mxu0 0.0
      %1083 = vmatpush1.xpose.msra.mxu0 0.0
      %1084 = vmatprep.subr.mxu0 0.0
      %1085 = vmatpush1.xpose.msra.mxu0 0.0
      %1086 = vmatprep.subr.mxu0 0.0
      %1087 = vmatpush1.xpose.msra.mxu0 0.0
      %1088 = vmatprep.subr.mxu0 0.0
      %1089 = vmatpush1.xpose.msra.mxu0 0.0
      %1090 = vmatprep.subr.mxu0 0.0
      %1091 = vmatpush1.xpose.msra.mxu0 0.0
      %1092 = vmatprep.subr.mxu0 0.0
      %1093 = vmatpush1.xpose.msra.mxu0 0.0
      %1094 = vmatprep.subr.mxu0 0.0
      %1095 = vmatpush1.xpose.msra.mxu0 0.0
      %1096 = vmatprep.subr.mxu0 0.0
      %1097 = vmatpush1.xpose.msra.mxu0 0.0
      %1098 = vmatprep.subr.mxu0 0.0
      %1099 = vmatpush1.xpose.msra.mxu0 0.0
      %1100 = vmatprep.mubr.f32.mxu0 0.0
      %1101 = vmatmul.mubr.f32.gmra.mrb[0].mxu0 %v1032
      %v1102 = vpop.f32.mrb[0].mxu0
      %v1103 = vadd.f32 0.0, %v1102
      %v1104 = vpop.f32.mrb[0].mxu0
      %1105 = vdwg.mxu0
      %v1106 = vsel %vm535, %v1103, -inf
      %1107 = vmax.xlane.f32.xlu0 %v1106
      %v1108 = vpop.xlane.xlu0 %1107
      %v1109 = vsub.f32 %v1103, %v1108
      %v1110 = vmul.f32 %v1109, 1.442695
      %v1111 = vpow.pop %v1110
      %v1112 = vsel %vm535, %v1111, 0.0
      %1113 = vadd.xlane.f32.xlu0 %v1112
      %v1114 = vpop.xlane.xlu0 %1113
      %v1115 = vrcp.pop %v1114
      %v1116 = vmul.f32 %v1111, %v1115
      %1117 = vrot.lane.b32.xlu0 %v528, 40
      %v1118 = vpop.permute.xlu0 %1117
      %v1121 = vsel %vm535, %v1116, 0
      %1123 = vmatprep.subr.mxu0 0.0
      %1124 = vmatpush1.msra.mxu0 %v1118
      %1125 = vmatprep.subr.mxu0 0.0
      %1126 = vmatpush1.msra.mxu0 0.0
      %1127 = vmatprep.subr.mxu0 0.0
      %1128 = vmatpush1.msra.mxu0 0.0
      %1129 = vmatprep.subr.mxu0 0.0
      %1130 = vmatpush1.msra.mxu0 0.0
      %1131 = vmatprep.subr.mxu0 0.0
      %1132 = vmatpush1.msra.mxu0 0.0
      %1133 = vmatprep.subr.mxu0 0.0
      %1134 = vmatpush1.msra.mxu0 0.0
      %1135 = vmatprep.subr.mxu0 0.0
      %1136 = vmatpush1.msra.mxu0 0.0
      %1137 = vmatprep.subr.mxu0 0.0
      %1138 = vmatpush1.msra.mxu0 0.0
      %1139 = vmatprep.subr.mxu0 0.0
      %1140 = vmatpush1.msra.mxu0 0.0
      %1141 = vmatprep.subr.mxu0 0.0
      %1142 = vmatpush1.msra.mxu0 0.0
      %1143 = vmatprep.subr.mxu0 0.0
      %1144 = vmatpush1.msra.mxu0 0.0
      %1145 = vmatprep.subr.mxu0 0.0
      %1146 = vmatpush1.msra.mxu0 0.0
      %1147 = vmatprep.subr.mxu0 0.0
      %1148 = vmatpush1.msra.mxu0 0.0
      %1149 = vmatprep.subr.mxu0 0.0
      %1150 = vmatpush1.msra.mxu0 0.0
      %1151 = vmatprep.subr.mxu0 0.0
      %1152 = vmatpush1.msra.mxu0 0.0
      %1153 = vmatprep.subr.mxu0 0.0
      %1154 = vmatpush1.msra.mxu0 0.0
      %1155 = vmatprep.subr.mxu0 0.0
      %1156 = vmatpush1.msra.mxu0 0.0
      %1157 = vmatprep.subr.mxu0 0.0
      %1158 = vmatpush1.msra.mxu0 0.0
      %1159 = vmatprep.subr.mxu0 0.0
      %1160 = vmatpush1.msra.mxu0 0.0
      %1161 = vmatprep.subr.mxu0 0.0
      %1162 = vmatpush1.msra.mxu0 0.0
      %1163 = vmatprep.subr.mxu0 0.0
      %1164 = vmatpush1.msra.mxu0 0.0
      %1165 = vmatprep.subr.mxu0 0.0
      %1166 = vmatpush1.msra.mxu0 0.0
      %1167 = vmatprep.subr.mxu0 0.0
      %1168 = vmatpush1.msra.mxu0 0.0
      %1169 = vmatprep.subr.mxu0 0.0
      %1170 = vmatpush1.msra.mxu0 0.0
      %1171 = vmatprep.subr.mxu0 0.0
      %1172 = vmatpush1.msra.mxu0 0.0
      %1173 = vmatprep.subr.mxu0 0.0
      %1174 = vmatpush1.msra.mxu0 0.0
      %1175 = vmatprep.subr.mxu0 0.0
      %1176 = vmatpush1.msra.mxu0 0.0
      %1177 = vmatprep.subr.mxu0 0.0
      %1178 = vmatpush1.msra.mxu0 0.0
      %1179 = vmatprep.subr.mxu0 0.0
      %1180 = vmatpush1.msra.mxu0 0.0
      %1181 = vmatprep.subr.mxu0 0.0
      %1182 = vmatpush1.msra.mxu0 0.0
      %1183 = vmatprep.subr.mxu0 0.0
      %1184 = vmatpush1.msra.mxu0 0.0
      %1185 = vmatprep.subr.mxu0 0.0
      %1186 = vmatpush1.msra.mxu0 0.0
      %1187 = vmatprep.mubr.f32.mxu0 0.0
      %1188 = vmatmul.mubr.f32.gmra.mrb[0].mxu0 %v1121
      %v1189 = vpop.f32.mrb[0].mxu0
      %v1190 = vadd.f32 0.0, %v1189
      %v1191 = vpop.f32.mrb[0].mxu0
      %1192 = vdwg.mxu0
      %1194 = vrot.lane.b32.xlu0 %v860, 8
      %v1195 = vpop.permute.xlu0 %1194
      %1198 = vrot.lane.b32.xlu0 %v1025, 16
      %v1199 = vpop.permute.xlu0 %1198
      %1202 = vrot.lane.b32.xlu0 %v1190, 24
      %v1203 = vpop.permute.xlu0 %1202
      %v1205 = vsel %vm535, %v695, %v1195
      %vm1206 = vcmask 130048
      %v1207 = vsel %vm1206, %v1205, %v1199
      %vm1208 = vcmask 195584
      %v1209 = vsel %vm1208, %v1207, %v1203
      %v1210 = vld [vmem:[%s6] sm:$0xff]
      %v1211 = vld [vmem:[%s6 + $0x8] sm:$0xff]
      %v1212 = vld [vmem:[%s6 + $0x10] sm:$0xff]
      %v1213 = vld [vmem:[%s6 + $0x18] sm:$0xff]
      %v1214 = vlaneseq
      %v1215 = vshrl.u32 %v1214, 7
      %v1216 = vsub.s32 6, %v1215
      %v1217 = vrot.slane %v445, %v1216
      %v1219 = vsel %vm457, %v1209, 0
      %1221 = vmatprep.subr.mxu0 0.0
      %1222 = vmatpush1.msra.mxu0 %v1210
      %1223 = vmatprep.subr.mxu0 0.0
      %1224 = vmatpush1.msra.mxu0 %v1211
      %1225 = vmatprep.subr.mxu0 0.0
      %1226 = vmatpush1.msra.mxu0 %v1212
      %1227 = vmatprep.subr.mxu0 0.0
      %1228 = vmatpush1.msra.mxu0 %v1213
      %1229 = vmatprep.subr.mxu0 0.0
      %1230 = vmatpush1.msra.mxu0 0.0
      %1231 = vmatprep.subr.mxu0 0.0
      %1232 = vmatpush1.msra.mxu0 0.0
      %1233 = vmatprep.subr.mxu0 0.0
      %1234 = vmatpush1.msra.mxu0 0.0
      %1235 = vmatprep.subr.mxu0 0.0
      %1236 = vmatpush1.msra.mxu0 0.0
      %1237 = vmatprep.subr.mxu0 0.0
      %1238 = vmatpush1.msra.mxu0 0.0
      %1239 = vmatprep.subr.mxu0 0.0
      %1240 = vmatpush1.msra.mxu0 0.0
      %1241 = vmatprep.subr.mxu0 0.0
      %1242 = vmatpush1.msra.mxu0 0.0
      %1243 = vmatprep.subr.mxu0 0.0
      %1244 = vmatpush1.msra.mxu0 0.0
      %1245 = vmatprep.subr.mxu0 0.0
      %1246 = vmatpush1.msra.mxu0 0.0
      %1247 = vmatprep.subr.mxu0 0.0
      %1248 = vmatpush1.msra.mxu0 0.0
      %1249 = vmatprep.subr.mxu0 0.0
      %1250 = vmatpush1.msra.mxu0 0.0
      %1251 = vmatprep.subr.mxu0 0.0
      %1252 = vmatpush1.msra.mxu0 0.0
      %1253 = vmatprep.subr.mxu0 0.0
      %1254 = vmatpush1.msra.mxu0 0.0
      %1255 = vmatprep.subr.mxu0 0.0
      %1256 = vmatpush1.msra.mxu0 0.0
      %1257 = vmatprep.subr.mxu0 0.0
      %1258 = vmatpush1.msra.mxu0 0.0
      %1259 = vmatprep.subr.mxu0 0.0
      %1260 = vmatpush1.msra.mxu0 0.0
      %1261 = vmatprep.subr.mxu0 0.0
      %1262 = vmatpush1.msra.mxu0 0.0
      %1263 = vmatprep.subr.mxu0 0.0
      %1264 = vmatpush1.msra.mxu0 0.0
      %1265 = vmatprep.subr.mxu0 0.0
      %1266 = vmatpush1.msra.mxu0 0.0
      %1267 = vmatprep.subr.mxu0 0.0
      %1268 = vmatpush1.msra.mxu0 0.0
      %1269 = vmatprep.subr.mxu0 0.0
      %1270 = vmatpush1.msra.mxu0 0.0
      %1271 = vmatprep.subr.mxu0 0.0
      %1272 = vmatpush1.msra.mxu0 0.0
      %1273 = vmatprep.subr.mxu0 0.0
      %1274 = vmatpush1.msra.mxu0 0.0
      %1275 = vmatprep.subr.mxu0 0.0
      %1276 = vmatpush1.msra.mxu0 0.0
      %1277 = vmatprep.subr.mxu0 0.0
      %1278 = vmatpush1.msra.mxu0 0.0
      %1279 = vmatprep.subr.mxu0 0.0
      %1280 = vmatpush1.msra.mxu0 0.0
      %1281 = vmatprep.subr.mxu0 0.0
      %1282 = vmatpush1.msra.mxu0 0.0
      %1283 = vmatprep.subr.mxu0 0.0
      %1284 = vmatpush1.msra.mxu0 0.0
      %1285 = vmatprep.mubr.f32.mxu0 0.0
      %1286 = vmatmul.mubr.f32.gmra.mrb[0].mxu0 %v1219
      %v1287 = vpop.f32.mrb[0].mxu0
      %v1288 = vadd.f32 %v1217, %v1287
      %v1289 = vpop.f32.mrb[0].mxu0
      %1290 = vdwg.mxu0
      %v1291 = vadd.f32 %v439, %v1288
      %v1292 = vsel %vm457, %v1291, 0.0
      %1293 = vadd.xlane.f32.xlu0 %v1292
      %v1294 = vpop.xlane.xlu0 %1293
      %v1295 = vrcp.pop 32.0
      %v1296 = vmul.f32 %v1294, %v1295
      %v1297 = vsub.f32 %v1291, %v1296
      %v1298 = vmul.f32 %v1297, %v1297
      %v1299 = vsel %vm457, %v1298, 0.0
      %1300 = vadd.xlane.f32.xlu0 %v1299
      %v1301 = vpop.xlane.xlu0 %1300
      %v1302 = vmul.f32 %v1301, %v1295
      %v1303 = vadd.f32 %v1302, 1e-05
      %v1304 = vrsqrt.pop %v1303
      %v1305 = vmul.f32 %v1297, %v1304
      %v1306 = vlaneseq
      %v1307 = vshrl.u32 %v1306, 7
      %v1308 = vsub.s32 0, %v1307
      %v1309 = vrot.slane %v445, %v1308
      %v1310 = vmul.f32 %v1305, %v1309
      %v1311 = vlaneseq
      %v1312 = vshrl.u32 %v1311, 7
      %v1313 = vsub.s32 1, %v1312
      %v1314 = vrot.slane %v445, %v1313
      %v1315 = vadd.f32 %v1310, %v1314
      %v1316 = vadd.f32 %v1315, %v440
      %s1317 = scalar_lea.vmem %s6, 32
      %v1318 = vld [vmem:[%s1317] sm:$0xff]
      %v1319 = vld [vmem:[%s1317 + $0x8] sm:$0xff]
      %v1320 = vld [vmem:[%s1317 + $0x10] sm:$0xff]
      %v1321 = vld [vmem:[%s1317 + $0x18] sm:$0xff]
      %v1322 = vlaneseq
      %v1323 = vshrl.u32 %v1322, 7
      %v1324 = vsub.s32 7, %v1323
      %v1325 = vrot.slane %v445, %v1324
      %v1327 = vsel %vm457, %v1316, 0
      %1329 = vmatprep.subr.mxu0 0.0
      %1330 = vmatpush1.msra.mxu0 %v1318
      %1331 = vmatprep.subr.mxu0 0.0
      %1332 = vmatpush1.msra.mxu0 %v1319
      %1333 = vmatprep.subr.mxu0 0.0
      %1334 = vmatpush1.msra.mxu0 %v1320
      %1335 = vmatprep.subr.mxu0 0.0
      %1336 = vmatpush1.msra.mxu0 %v1321
      %1337 = vmatprep.subr.mxu0 0.0
      %1338 = vmatpush1.msra.mxu0 0.0
      %1339 = vmatprep.subr.mxu0 0.0
      %1340 = vmatpush1.msra.mxu0 0.0
      %1341 = vmatprep.subr.mxu0 0.0
      %1342 = vmatpush1.msra.mxu0 0.0
      %1343 = vmatprep.subr.mxu0 0.0
      %1344 = vmatpush1.msra.mxu0 0.0
      %1345 = vmatprep.subr.mxu0 0.0
      %1346 = vmatpush1.msra.mxu0 0.0
      %1347 = vmatprep.subr.mxu0 0.0
      %1348 = vmatpush1.msra.mxu0 0.0
      %1349 = vmatprep.subr.mxu0 0.0
      %1350 = vmatpush1.msra.mxu0 0.0
      %1351 = vmatprep.subr.mxu0 0.0
      %1352 = vmatpush1.msra.mxu0 0.0
      %1353 = vmatprep.subr.mxu0 0.0
      %1354 = vmatpush1.msra.mxu0 0.0
      %1355 = vmatprep.subr.mxu0 0.0
      %1356 = vmatpush1.msra.mxu0 0.0
      %1357 = vmatprep.subr.mxu0 0.0
      %1358 = vmatpush1.msra.mxu0 0.0
      %1359 = vmatprep.subr.mxu0 0.0
      %1360 = vmatpush1.msra.mxu0 0.0
      %1361 = vmatprep.subr.mxu0 0.0
      %1362 = vmatpush1.msra.mxu0 0.0
      %1363 = vmatprep.subr.mxu0 0.0
      %1364 = vmatpush1.msra.mxu0 0.0
      %1365 = vmatprep.subr.mxu0 0.0
      %1366 = vmatpush1.msra.mxu0 0.0
      %1367 = vmatprep.subr.mxu0 0.0
      %1368 = vmatpush1.msra.mxu0 0.0
      %1369 = vmatprep.subr.mxu0 0.0
      %1370 = vmatpush1.msra.mxu0 0.0
      %1371 = vmatprep.subr.mxu0 0.0
      %1372 = vmatpush1.msra.mxu0 0.0
      %1373 = vmatprep.subr.mxu0 0.0
      %1374 = vmatpush1.msra.mxu0 0.0
      %1375 = vmatprep.subr.mxu0 0.0
      %1376 = vmatpush1.msra.mxu0 0.0
      %1377 = vmatprep.subr.mxu0 0.0
      %1378 = vmatpush1.msra.mxu0 0.0
      %1379 = vmatprep.subr.mxu0 0.0
      %1380 = vmatpush1.msra.mxu0 0.0
      %1381 = vmatprep.subr.mxu0 0.0
      %1382 = vmatpush1.msra.mxu0 0.0
      %1383 = vmatprep.subr.mxu0 0.0
      %1384 = vmatpush1.msra.mxu0 0.0
      %1385 = vmatprep.subr.mxu0 0.0
      %1386 = vmatpush1.msra.mxu0 0.0
      %1387 = vmatprep.subr.mxu0 0.0
      %1388 = vmatpush1.msra.mxu0 0.0
      %1389 = vmatprep.subr.mxu0 0.0
      %1390 = vmatpush1.msra.mxu0 0.0
      %1391 = vmatprep.subr.mxu0 0.0
      %1392 = vmatpush1.msra.mxu0 0.0
      %1393 = vmatprep.mubr.f32.mxu0 0.0
      %1394 = vmatmul.mubr.f32.gmra.mrb[0].mxu0 %v1327
      %v1395 = vpop.f32.mrb[0].mxu0
      %v1396 = vadd.f32 %v1325, %v1395
      %v1397 = vpop.f32.mrb[0].mxu0
      %1398 = vdwg.mxu0
      %v1399 = vadd.f32 %v441, %v443
      %v1400 = vadd.f32 %v442, %v444
      %s1401 = scalar_lea.vmem %s6, 64
      %v1402 = vld [vmem:[%s1401] sm:$0xff]
      %v1403 = vld [vmem:[%s1401 + $0x8] sm:$0xff]
      %v1404 = vld [vmem:[%s1401 + $0x10] sm:$0xff]
      %v1405 = vld [vmem:[%s1401 + $0x18] sm:$0xff]
      %v1406 = vlaneseq
      %v1407 = vshrl.u32 %v1406, 7
      %v1408 = vsub.s32 0, %v1407
      %v1409 = vrot.slane %v446, %v1408
      %v1411 = vsel %vm457, %v1399, 0
      %v1414 = vsel %vm457, %v1400, 0
      %1416 = vmatprep.subr.mxu0 0.0
      %1417 = vmatpush1.msra.mxu0 %v1402
      %1418 = vmatprep.subr.mxu0 0.0
      %1419 = vmatpush1.msra.mxu0 %v1403
      %1420 = vmatprep.subr.mxu0 0.0
      %1421 = vmatpush1.msra.mxu0 %v1404
      %1422 = vmatprep.subr.mxu0 0.0
      %1423 = vmatpush1.msra.mxu0 %v1405
      %1424 = vmatprep.subr.mxu0 0.0
      %1425 = vmatpush1.msra.mxu0 0.0
      %1426 = vmatprep.subr.mxu0 0.0
      %1427 = vmatpush1.msra.mxu0 0.0
      %1428 = vmatprep.subr.mxu0 0.0
      %1429 = vmatpush1.msra.mxu0 0.0
      %1430 = vmatprep.subr.mxu0 0.0
      %1431 = vmatpush1.msra.mxu0 0.0
      %1432 = vmatprep.subr.mxu0 0.0
      %1433 = vmatpush1.msra.mxu0 0.0
      %1434 = vmatprep.subr.mxu0 0.0
      %1435 = vmatpush1.msra.mxu0 0.0
      %1436 = vmatprep.subr.mxu0 0.0
      %1437 = vmatpush1.msra.mxu0 0.0
      %1438 = vmatprep.subr.mxu0 0.0
      %1439 = vmatpush1.msra.mxu0 0.0
      %1440 = vmatprep.subr.mxu0 0.0
      %1441 = vmatpush1.msra.mxu0 0.0
      %1442 = vmatprep.subr.mxu0 0.0
      %1443 = vmatpush1.msra.mxu0 0.0
      %1444 = vmatprep.subr.mxu0 0.0
      %1445 = vmatpush1.msra.mxu0 0.0
      %1446 = vmatprep.subr.mxu0 0.0
      %1447 = vmatpush1.msra.mxu0 0.0
      %1448 = vmatprep.subr.mxu0 0.0
      %1449 = vmatpush1.msra.mxu0 0.0
      %1450 = vmatprep.subr.mxu0 0.0
      %1451 = vmatpush1.msra.mxu0 0.0
      %1452 = vmatprep.subr.mxu0 0.0
      %1453 = vmatpush1.msra.mxu0 0.0
      %1454 = vmatprep.subr.mxu0 0.0
      %1455 = vmatpush1.msra.mxu0 0.0
      %1456 = vmatprep.subr.mxu0 0.0
      %1457 = vmatpush1.msra.mxu0 0.0
      %1458 = vmatprep.subr.mxu0 0.0
      %1459 = vmatpush1.msra.mxu0 0.0
      %1460 = vmatprep.subr.mxu0 0.0
      %1461 = vmatpush1.msra.mxu0 0.0
      %1462 = vmatprep.subr.mxu0 0.0
      %1463 = vmatpush1.msra.mxu0 0.0
      %1464 = vmatprep.subr.mxu0 0.0
      %1465 = vmatpush1.msra.mxu0 0.0
      %1466 = vmatprep.subr.mxu0 0.0
      %1467 = vmatpush1.msra.mxu0 0.0
      %1468 = vmatprep.subr.mxu0 0.0
      %1469 = vmatpush1.msra.mxu0 0.0
      %1470 = vmatprep.subr.mxu0 0.0
      %1471 = vmatpush1.msra.mxu0 0.0
      %1472 = vmatprep.subr.mxu0 0.0
      %1473 = vmatpush1.msra.mxu0 0.0
      %1474 = vmatprep.subr.mxu0 0.0
      %1475 = vmatpush1.msra.mxu0 0.0
      %1476 = vmatprep.subr.mxu0 0.0
      %1477 = vmatpush1.msra.mxu0 0.0
      %1478 = vmatprep.subr.mxu0 0.0
      %1479 = vmatpush1.msra.mxu0 0.0
      %1480 = vmatprep.mubr.f32.mxu0 0.0
      %1481 = vmatmul.mubr.f32.gmra.mrb[0].mxu0 %v1411
      %v1482 = vpop.f32.mrb[0].mxu0
      %v1483 = vadd.f32 %v1409, %v1482
      %v1484 = vpop.f32.mrb[0].mxu0
      %1485 = vmatprep.mubr.f32.mxu0 0.0
      %1486 = vmatmul.mubr.f32.gmra.mrb[0].mxu0 %v1414
      %v1487 = vpop.f32.mrb[0].mxu0
      %v1488 = vadd.f32 %v1409, %v1487
      %v1489 = vpop.f32.mrb[0].mxu0
      %1490 = vdwg.mxu0
      %s1491 = scalar_lea.vmem %s6, 96
      %v1492 = vld [vmem:[%s1491] sm:$0xff]
      %v1493 = vld [vmem:[%s1491 + $0x8] sm:$0xff]
      %v1494 = vld [vmem:[%s1491 + $0x10] sm:$0xff]
      %v1495 = vld [vmem:[%s1491 + $0x18] sm:$0xff]
      %v1496 = vlaneseq
      %v1497 = vshrl.u32 %v1496, 7
      %v1498 = vsub.s32 1, %v1497
      %v1499 = vrot.slane %v446, %v1498
      %v1501 = vsel %vm457, %v441, 0
      %v1504 = vsel %vm457, %v442, 0
      %1506 = vmatprep.subr.mxu0 0.0
      %1507 = vmatpush1.msra.mxu0 %v1492
      %1508 = vmatprep.subr.mxu0 0.0
      %1509 = vmatpush1.msra.mxu0 %v1493
      %1510 = vmatprep.subr.mxu0 0.0
      %1511 = vmatpush1.msra.mxu0 %v1494
      %1512 = vmatprep.subr.mxu0 0.0
      %1513 = vmatpush1.msra.mxu0 %v1495
      %1514 = vmatprep.subr.mxu0 0.0
      %1515 = vmatpush1.msra.mxu0 0.0
      %1516 = vmatprep.subr.mxu0 0.0
      %1517 = vmatpush1.msra.mxu0 0.0
      %1518 = vmatprep.subr.mxu0 0.0
      %1519 = vmatpush1.msra.mxu0 0.0
      %1520 = vmatprep.subr.mxu0 0.0
      %1521 = vmatpush1.msra.mxu0 0.0
      %1522 = vmatprep.subr.mxu0 0.0
      %1523 = vmatpush1.msra.mxu0 0.0
      %1524 = vmatprep.subr.mxu0 0.0
      %1525 = vmatpush1.msra.mxu0 0.0
      %1526 = vmatprep.subr.mxu0 0.0
      %1527 = vmatpush1.msra.mxu0 0.0
      %1528 = vmatprep.subr.mxu0 0.0
      %1529 = vmatpush1.msra.mxu0 0.0
      %1530 = vmatprep.subr.mxu0 0.0
      %1531 = vmatpush1.msra.mxu0 0.0
      %1532 = vmatprep.subr.mxu0 0.0
      %1533 = vmatpush1.msra.mxu0 0.0
      %1534 = vmatprep.subr.mxu0 0.0
      %1535 = vmatpush1.msra.mxu0 0.0
      %1536 = vmatprep.subr.mxu0 0.0
      %1537 = vmatpush1.msra.mxu0 0.0
      %1538 = vmatprep.subr.mxu0 0.0
      %1539 = vmatpush1.msra.mxu0 0.0
      %1540 = vmatprep.subr.mxu0 0.0
      %1541 = vmatpush1.msra.mxu0 0.0
      %1542 = vmatprep.subr.mxu0 0.0
      %1543 = vmatpush1.msra.mxu0 0.0
      %1544 = vmatprep.subr.mxu0 0.0
      %1545 = vmatpush1.msra.mxu0 0.0
      %1546 = vmatprep.subr.mxu0 0.0
      %1547 = vmatpush1.msra.mxu0 0.0
      %1548 = vmatprep.subr.mxu0 0.0
      %1549 = vmatpush1.msra.mxu0 0.0
      %1550 = vmatprep.subr.mxu0 0.0
      %1551 = vmatpush1.msra.mxu0 0.0
      %1552 = vmatprep.subr.mxu0 0.0
      %1553 = vmatpush1.msra.mxu0 0.0
      %1554 = vmatprep.subr.mxu0 0.0
      %1555 = vmatpush1.msra.mxu0 0.0
      %1556 = vmatprep.subr.mxu0 0.0
      %1557 = vmatpush1.msra.mxu0 0.0
      %1558 = vmatprep.subr.mxu0 0.0
      %1559 = vmatpush1.msra.mxu0 0.0
      %1560 = vmatprep.subr.mxu0 0.0
      %1561 = vmatpush1.msra.mxu0 0.0
      %1562 = vmatprep.subr.mxu0 0.0
      %1563 = vmatpush1.msra.mxu0 0.0
      %1564 = vmatprep.subr.mxu0 0.0
      %1565 = vmatpush1.msra.mxu0 0.0
      %1566 = vmatprep.subr.mxu0 0.0
      %1567 = vmatpush1.msra.mxu0 0.0
      %1568 = vmatprep.subr.mxu0 0.0
      %1569 = vmatpush1.msra.mxu0 0.0
      %1570 = vmatprep.mubr.f32.mxu0 0.0
      %1571 = vmatmul.mubr.f32.gmra.mrb[0].mxu0 %v1501
      %v1572 = vpop.f32.mrb[0].mxu0
      %v1573 = vadd.f32 %v1499, %v1572
      %v1574 = vpop.f32.mrb[0].mxu0
      %1575 = vmatprep.mubr.f32.mxu0 0.0
      %1576 = vmatmul.mubr.f32.gmra.mrb[0].mxu0 %v1504
      %v1577 = vpop.f32.mrb[0].mxu0
      %v1578 = vadd.f32 %v1499, %v1577
      %v1579 = vpop.f32.mrb[0].mxu0
      %1580 = vdwg.mxu0
      %s1581 = scalar_lea.vmem %s4, %s22
      %v1582 = vld [vmem:[%s1581] sm:$0x1]
      %v1583 = vmul.f32 %v1396, 0.35355338
      %v1584 = vlaneseq
      %v1585 = vshrl.u32 %v1584, 7
      %v1586 = vsub.s32 0, %v1585
      %v1587 = vrot.slane %v1582, %v1586
      %v1589 = vsel %vm535, %v1583, 0
      %v1592 = vsel %vm535, %v1483, 0
      %v1595 = vsel %vm535, %v1488, 0
      %1597 = vmatprep.subr.mxu0 0.0
      %1598 = vmatpush1.xpose.msra.mxu0 %v1592
      %1599 = vmatprep.subr.mxu0 0.0
      %1600 = vmatpush1.xpose.msra.mxu0 %v1595
      %1601 = vmatprep.subr.mxu0 0.0
      %1602 = vmatpush1.xpose.msra.mxu0 0.0
      %1603 = vmatprep.subr.mxu0 0.0
      %1604 = vmatpush1.xpose.msra.mxu0 0.0
      %1605 = vmatprep.subr.mxu0 0.0
      %1606 = vmatpush1.xpose.msra.mxu0 0.0
      %1607 = vmatprep.subr.mxu0 0.0
      %1608 = vmatpush1.xpose.msra.mxu0 0.0
      %1609 = vmatprep.subr.mxu0 0.0
      %1610 = vmatpush1.xpose.msra.mxu0 0.0
      %1611 = vmatprep.subr.mxu0 0.0
      %1612 = vmatpush1.xpose.msra.mxu0 0.0
      %1613 = vmatprep.subr.mxu0 0.0
      %1614 = vmatpush1.xpose.msra.mxu0 0.0
      %1615 = vmatprep.subr.mxu0 0.0
      %1616 = vmatpush1.xpose.msra.mxu0 0.0
      %1617 = vmatprep.subr.mxu0 0.0
      %1618 = vmatpush1.xpose.msra.mxu0 0.0
      %1619 = vmatprep.subr.mxu0 0.0
      %1620 = vmatpush1.xpose.msra.mxu0 0.0
      %1621 = vmatprep.subr.mxu0 0.0
      %1622 = vmatpush1.xpose.msra.mxu0 0.0
      %1623 = vmatprep.subr.mxu0 0.0
      %1624 = vmatpush1.xpose.msra.mxu0 0.0
      %1625 = vmatprep.subr.mxu0 0.0
      %1626 = vmatpush1.xpose.msra.mxu0 0.0
      %1627 = vmatprep.subr.mxu0 0.0
      %1628 = vmatpush1.xpose.msra.mxu0 0.0
      %1629 = vmatprep.subr.mxu0 0.0
      %1630 = vmatpush1.xpose.msra.mxu0 0.0
      %1631 = vmatprep.subr.mxu0 0.0
      %1632 = vmatpush1.xpose.msra.mxu0 0.0
      %1633 = vmatprep.subr.mxu0 0.0
      %1634 = vmatpush1.xpose.msra.mxu0 0.0
      %1635 = vmatprep.subr.mxu0 0.0
      %1636 = vmatpush1.xpose.msra.mxu0 0.0
      %1637 = vmatprep.subr.mxu0 0.0
      %1638 = vmatpush1.xpose.msra.mxu0 0.0
      %1639 = vmatprep.subr.mxu0 0.0
      %1640 = vmatpush1.xpose.msra.mxu0 0.0
      %1641 = vmatprep.subr.mxu0 0.0
      %1642 = vmatpush1.xpose.msra.mxu0 0.0
      %1643 = vmatprep.subr.mxu0 0.0
      %1644 = vmatpush1.xpose.msra.mxu0 0.0
      %1645 = vmatprep.subr.mxu0 0.0
      %1646 = vmatpush1.xpose.msra.mxu0 0.0
      %1647 = vmatprep.subr.mxu0 0.0
      %1648 = vmatpush1.xpose.msra.mxu0 0.0
      %1649 = vmatprep.subr.mxu0 0.0
      %1650 = vmatpush1.xpose.msra.mxu0 0.0
      %1651 = vmatprep.subr.mxu0 0.0
      %1652 = vmatpush1.xpose.msra.mxu0 0.0
      %1653 = vmatprep.subr.mxu0 0.0
      %1654 = vmatpush1.xpose.msra.mxu0 0.0
      %1655 = vmatprep.subr.mxu0 0.0
      %1656 = vmatpush1.xpose.msra.mxu0 0.0
      %1657 = vmatprep.subr.mxu0 0.0
      %1658 = vmatpush1.xpose.msra.mxu0 0.0
      %1659 = vmatprep.subr.mxu0 0.0
      %1660 = vmatpush1.xpose.msra.mxu0 0.0
      %1661 = vmatprep.mubr.f32.mxu0 0.0
      %1662 = vmatmul.mubr.f32.gmra.mrb[0].mxu0 %v1589
      %v1663 = vpop.f32.mrb[0].mxu0
      %v1664 = vadd.f32 %v1587, %v1663
      %v1665 = vpop.f32.mrb[0].mxu0
      %1666 = vdwg.mxu0
      %vm1667 = vcmask 80896
      %v1668 = vsel %vm1667, %v1664, -inf
      %1669 = vmax.xlane.f32.xlu0 %v1668
      %v1670 = vpop.xlane.xlu0 %1669
      %v1671 = vsub.f32 %v1664, %v1670
      %v1672 = vmul.f32 %v1671, 1.442695
      %v1673 = vpow.pop %v1672
      %v1674 = vsel %vm1667, %v1673, 0.0
      %1675 = vadd.xlane.f32.xlu0 %v1674
      %v1676 = vpop.xlane.xlu0 %1675
      %v1677 = vrcp.pop %v1676
      %v1678 = vmul.f32 %v1673, %v1677
      %v1680 = vsel %vm1667, %v1678, 0
      %vm1682 = vcmask 1041408
      %v1684 = vsel %vm1682, %v1578, 0
      %1686 = vmatprep.subr.mxu0 0.0
      %1687 = vmatpush1.msra.mxu0 %v1573
      %1688 = vmatprep.subr.mxu0 0.0
      %1689 = vmatpush1.msra.mxu0 %v1684
      %1690 = vmatprep.subr.mxu0 0.0
      %1691 = vmatpush1.msra.mxu0 0.0
      %1692 = vmatprep.subr.mxu0 0.0
      %1693 = vmatpush1.msra.mxu0 0.0
      %1694 = vmatprep.subr.mxu0 0.0
      %1695 = vmatpush1.msra.mxu0 0.0
      %1696 = vmatprep.subr.mxu0 0.0
      %1697 = vmatpush1.msra.mxu0 0.0
      %1698 = vmatprep.subr.mxu0 0.0
      %1699 = vmatpush1.msra.mxu0 0.0
      %1700 = vmatprep.subr.mxu0 0.0
      %1701 = vmatpush1.msra.mxu0 0.0
      %1702 = vmatprep.subr.mxu0 0.0
      %1703 = vmatpush1.msra.mxu0 0.0
      %1704 = vmatprep.subr.mxu0 0.0
      %1705 = vmatpush1.msra.mxu0 0.0
      %1706 = vmatprep.subr.mxu0 0.0
      %1707 = vmatpush1.msra.mxu0 0.0
      %1708 = vmatprep.subr.mxu0 0.0
      %1709 = vmatpush1.msra.mxu0 0.0
      %1710 = vmatprep.subr.mxu0 0.0
      %1711 = vmatpush1.msra.mxu0 0.0
      %1712 = vmatprep.subr.mxu0 0.0
      %1713 = vmatpush1.msra.mxu0 0.0
      %1714 = vmatprep.subr.mxu0 0.0
      %1715 = vmatpush1.msra.mxu0 0.0
      %1716 = vmatprep.subr.mxu0 0.0
      %1717 = vmatpush1.msra.mxu0 0.0
      %1718 = vmatprep.subr.mxu0 0.0
      %1719 = vmatpush1.msra.mxu0 0.0
      %1720 = vmatprep.subr.mxu0 0.0
      %1721 = vmatpush1.msra.mxu0 0.0
      %1722 = vmatprep.subr.mxu0 0.0
      %1723 = vmatpush1.msra.mxu0 0.0
      %1724 = vmatprep.subr.mxu0 0.0
      %1725 = vmatpush1.msra.mxu0 0.0
      %1726 = vmatprep.subr.mxu0 0.0
      %1727 = vmatpush1.msra.mxu0 0.0
      %1728 = vmatprep.subr.mxu0 0.0
      %1729 = vmatpush1.msra.mxu0 0.0
      %1730 = vmatprep.subr.mxu0 0.0
      %1731 = vmatpush1.msra.mxu0 0.0
      %1732 = vmatprep.subr.mxu0 0.0
      %1733 = vmatpush1.msra.mxu0 0.0
      %1734 = vmatprep.subr.mxu0 0.0
      %1735 = vmatpush1.msra.mxu0 0.0
      %1736 = vmatprep.subr.mxu0 0.0
      %1737 = vmatpush1.msra.mxu0 0.0
      %1738 = vmatprep.subr.mxu0 0.0
      %1739 = vmatpush1.msra.mxu0 0.0
      %1740 = vmatprep.subr.mxu0 0.0
      %1741 = vmatpush1.msra.mxu0 0.0
      %1742 = vmatprep.subr.mxu0 0.0
      %1743 = vmatpush1.msra.mxu0 0.0
      %1744 = vmatprep.subr.mxu0 0.0
      %1745 = vmatpush1.msra.mxu0 0.0
      %1746 = vmatprep.subr.mxu0 0.0
      %1747 = vmatpush1.msra.mxu0 0.0
      %1748 = vmatprep.subr.mxu0 0.0
      %1749 = vmatpush1.msra.mxu0 0.0
      %1750 = vmatprep.mubr.f32.mxu0 0.0
      %1751 = vmatmul.mubr.f32.gmra.mrb[0].mxu0 %v1680
      %v1752 = vpop.f32.mrb[0].mxu0
      %v1753 = vadd.f32 0.0, %v1752
      %v1754 = vpop.f32.mrb[0].mxu0
      %1755 = vdwg.mxu0
      %1756 = vrot.lane.b32.xlu0 %v1583, 120
      %v1757 = vpop.permute.xlu0 %1756
      %1758 = vrot.lane.b32.xlu0 %v1483, 120
      %v1759 = vpop.permute.xlu0 %1758
      %1760 = vrot.lane.b32.xlu0 %v1488, 120
      %v1761 = vpop.permute.xlu0 %1760
      %v1762 = vsel %vm535, %v1757, 0
      %v1764 = vsel %vm535, %v1759, 0
      %v1766 = vsel %vm535, %v1761, 0
      %1768 = vmatprep.subr.mxu0 0.0
      %1769 = vmatpush1.xpose.msra.mxu0 %v1764
      %1770 = vmatprep.subr.mxu0 0.0
      %1771 = vmatpush1.xpose.msra.mxu0 %v1766
      %1772 = vmatprep.subr.mxu0 0.0
      %1773 = vmatpush1.xpose.msra.mxu0 0.0
      %1774 = vmatprep.subr.mxu0 0.0
      %1775 = vmatpush1.xpose.msra.mxu0 0.0
      %1776 = vmatprep.subr.mxu0 0.0
      %1777 = vmatpush1.xpose.msra.mxu0 0.0
      %1778 = vmatprep.subr.mxu0 0.0
      %1779 = vmatpush1.xpose.msra.mxu0 0.0
      %1780 = vmatprep.subr.mxu0 0.0
      %1781 = vmatpush1.xpose.msra.mxu0 0.0
      %1782 = vmatprep.subr.mxu0 0.0
      %1783 = vmatpush1.xpose.msra.mxu0 0.0
      %1784 = vmatprep.subr.mxu0 0.0
      %1785 = vmatpush1.xpose.msra.mxu0 0.0
      %1786 = vmatprep.subr.mxu0 0.0
      %1787 = vmatpush1.xpose.msra.mxu0 0.0
      %1788 = vmatprep.subr.mxu0 0.0
      %1789 = vmatpush1.xpose.msra.mxu0 0.0
      %1790 = vmatprep.subr.mxu0 0.0
      %1791 = vmatpush1.xpose.msra.mxu0 0.0
      %1792 = vmatprep.subr.mxu0 0.0
      %1793 = vmatpush1.xpose.msra.mxu0 0.0
      %1794 = vmatprep.subr.mxu0 0.0
      %1795 = vmatpush1.xpose.msra.mxu0 0.0
      %1796 = vmatprep.subr.mxu0 0.0
      %1797 = vmatpush1.xpose.msra.mxu0 0.0
      %1798 = vmatprep.subr.mxu0 0.0
      %1799 = vmatpush1.xpose.msra.mxu0 0.0
      %1800 = vmatprep.subr.mxu0 0.0
      %1801 = vmatpush1.xpose.msra.mxu0 0.0
      %1802 = vmatprep.subr.mxu0 0.0
      %1803 = vmatpush1.xpose.msra.mxu0 0.0
      %1804 = vmatprep.subr.mxu0 0.0
      %1805 = vmatpush1.xpose.msra.mxu0 0.0
      %1806 = vmatprep.subr.mxu0 0.0
      %1807 = vmatpush1.xpose.msra.mxu0 0.0
      %1808 = vmatprep.subr.mxu0 0.0
      %1809 = vmatpush1.xpose.msra.mxu0 0.0
      %1810 = vmatprep.subr.mxu0 0.0
      %1811 = vmatpush1.xpose.msra.mxu0 0.0
      %1812 = vmatprep.subr.mxu0 0.0
      %1813 = vmatpush1.xpose.msra.mxu0 0.0
      %1814 = vmatprep.subr.mxu0 0.0
      %1815 = vmatpush1.xpose.msra.mxu0 0.0
      %1816 = vmatprep.subr.mxu0 0.0
      %1817 = vmatpush1.xpose.msra.mxu0 0.0
      %1818 = vmatprep.subr.mxu0 0.0
      %1819 = vmatpush1.xpose.msra.mxu0 0.0
      %1820 = vmatprep.subr.mxu0 0.0
      %1821 = vmatpush1.xpose.msra.mxu0 0.0
      %1822 = vmatprep.subr.mxu0 0.0
      %1823 = vmatpush1.xpose.msra.mxu0 0.0
      %1824 = vmatprep.subr.mxu0 0.0
      %1825 = vmatpush1.xpose.msra.mxu0 0.0
      %1826 = vmatprep.subr.mxu0 0.0
      %1827 = vmatpush1.xpose.msra.mxu0 0.0
      %1828 = vmatprep.subr.mxu0 0.0
      %1829 = vmatpush1.xpose.msra.mxu0 0.0
      %1830 = vmatprep.subr.mxu0 0.0
      %1831 = vmatpush1.xpose.msra.mxu0 0.0
      %1832 = vmatprep.mubr.f32.mxu0 0.0
      %1833 = vmatmul.mubr.f32.gmra.mrb[0].mxu0 %v1762
      %v1834 = vpop.f32.mrb[0].mxu0
      %v1835 = vadd.f32 %v1587, %v1834
      %v1836 = vpop.f32.mrb[0].mxu0
      %1837 = vdwg.mxu0
      %v1838 = vsel %vm1667, %v1835, -inf
      %1839 = vmax.xlane.f32.xlu0 %v1838
      %v1840 = vpop.xlane.xlu0 %1839
      %v1841 = vsub.f32 %v1835, %v1840
      %v1842 = vmul.f32 %v1841, 1.442695
      %v1843 = vpow.pop %v1842
      %v1844 = vsel %vm1667, %v1843, 0.0
      %1845 = vadd.xlane.f32.xlu0 %v1844
      %v1846 = vpop.xlane.xlu0 %1845
      %v1847 = vrcp.pop %v1846
      %v1848 = vmul.f32 %v1843, %v1847
      %1850 = vrot.lane.b32.xlu0 %v1573, 120
      %v1851 = vpop.permute.xlu0 %1850
      %1852 = vrot.lane.b32.xlu0 %v1578, 120
      %v1853 = vpop.permute.xlu0 %1852
      %v1856 = vsel %vm1667, %v1848, 0
      %v1858 = vsel %vm1682, %v1853, 0
      %1860 = vmatprep.subr.mxu0 0.0
      %1861 = vmatpush1.msra.mxu0 %v1851
      %1862 = vmatprep.subr.mxu0 0.0
      %1863 = vmatpush1.msra.mxu0 %v1858
      %1864 = vmatprep.subr.mxu0 0.0
      %1865 = vmatpush1.msra.mxu0 0.0
      %1866 = vmatprep.subr.mxu0 0.0
      %1867 = vmatpush1.msra.mxu0 0.0
      %1868 = vmatprep.subr.mxu0 0.0
      %1869 = vmatpush1.msra.mxu0 0.0
      %1870 = vmatprep.subr.mxu0 0.0
      %1871 = vmatpush1.msra.mxu0 0.0
      %1872 = vmatprep.subr.mxu0 0.0
      %1873 = vmatpush1.msra.mxu0 0.0
      %1874 = vmatprep.subr.mxu0 0.0
      %1875 = vmatpush1.msra.mxu0 0.0
      %1876 = vmatprep.subr.mxu0 0.0
      %1877 = vmatpush1.msra.mxu0 0.0
      %1878 = vmatprep.subr.mxu0 0.0
      %1879 = vmatpush1.msra.mxu0 0.0
      %1880 = vmatprep.subr.mxu0 0.0
      %1881 = vmatpush1.msra.mxu0 0.0
      %1882 = vmatprep.subr.mxu0 0.0
      %1883 = vmatpush1.msra.mxu0 0.0
      %1884 = vmatprep.subr.mxu0 0.0
      %1885 = vmatpush1.msra.mxu0 0.0
      %1886 = vmatprep.subr.mxu0 0.0
      %1887 = vmatpush1.msra.mxu0 0.0
      %1888 = vmatprep.subr.mxu0 0.0
      %1889 = vmatpush1.msra.mxu0 0.0
      %1890 = vmatprep.subr.mxu0 0.0
      %1891 = vmatpush1.msra.mxu0 0.0
      %1892 = vmatprep.subr.mxu0 0.0
      %1893 = vmatpush1.msra.mxu0 0.0
      %1894 = vmatprep.subr.mxu0 0.0
      %1895 = vmatpush1.msra.mxu0 0.0
      %1896 = vmatprep.subr.mxu0 0.0
      %1897 = vmatpush1.msra.mxu0 0.0
      %1898 = vmatprep.subr.mxu0 0.0
      %1899 = vmatpush1.msra.mxu0 0.0
      %1900 = vmatprep.subr.mxu0 0.0
      %1901 = vmatpush1.msra.mxu0 0.0
      %1902 = vmatprep.subr.mxu0 0.0
      %1903 = vmatpush1.msra.mxu0 0.0
      %1904 = vmatprep.subr.mxu0 0.0
      %1905 = vmatpush1.msra.mxu0 0.0
      %1906 = vmatprep.subr.mxu0 0.0
      %1907 = vmatpush1.msra.mxu0 0.0
      %1908 = vmatprep.subr.mxu0 0.0
      %1909 = vmatpush1.msra.mxu0 0.0
      %1910 = vmatprep.subr.mxu0 0.0
      %1911 = vmatpush1.msra.mxu0 0.0
      %1912 = vmatprep.subr.mxu0 0.0
      %1913 = vmatpush1.msra.mxu0 0.0
      %1914 = vmatprep.subr.mxu0 0.0
      %1915 = vmatpush1.msra.mxu0 0.0
      %1916 = vmatprep.subr.mxu0 0.0
      %1917 = vmatpush1.msra.mxu0 0.0
      %1918 = vmatprep.subr.mxu0 0.0
      %1919 = vmatpush1.msra.mxu0 0.0
      %1920 = vmatprep.subr.mxu0 0.0
      %1921 = vmatpush1.msra.mxu0 0.0
      %1922 = vmatprep.subr.mxu0 0.0
      %1923 = vmatpush1.msra.mxu0 0.0
      %1924 = vmatprep.mubr.f32.mxu0 0.0
      %1925 = vmatmul.mubr.f32.gmra.mrb[0].mxu0 %v1856
      %v1926 = vpop.f32.mrb[0].mxu0
      %v1927 = vadd.f32 0.0, %v1926
      %v1928 = vpop.f32.mrb[0].mxu0
      %1929 = vdwg.mxu0
      %1930 = vrot.lane.b32.xlu0 %v1583, 112
      %v1931 = vpop.permute.xlu0 %1930
      %1932 = vrot.lane.b32.xlu0 %v1483, 112
      %v1933 = vpop.permute.xlu0 %1932
      %1934 = vrot.lane.b32.xlu0 %v1488, 112
      %v1935 = vpop.permute.xlu0 %1934
      %v1936 = vsel %vm535, %v1931, 0
      %v1938 = vsel %vm535, %v1933, 0
      %v1940 = vsel %vm535, %v1935, 0
      %1942 = vmatprep.subr.mxu0 0.0
      %1943 = vmatpush1.xpose.msra.mxu0 %v1938
      %1944 = vmatprep.subr.mxu0 0.0
      %1945 = vmatpush1.xpose.msra.mxu0 %v1940
      %1946 = vmatprep.subr.mxu0 0.0
      %1947 = vmatpush1.xpose.msra.mxu0 0.0
      %1948 = vmatprep.subr.mxu0 0.0
      %1949 = vmatpush1.xpose.msra.mxu0 0.0
      %1950 = vmatprep.subr.mxu0 0.0
      %1951 = vmatpush1.xpose.msra.mxu0 0.0
      %1952 = vmatprep.subr.mxu0 0.0
      %1953 = vmatpush1.xpose.msra.mxu0 0.0
      %1954 = vmatprep.subr.mxu0 0.0
      %1955 = vmatpush1.xpose.msra.mxu0 0.0
      %1956 = vmatprep.subr.mxu0 0.0
      %1957 = vmatpush1.xpose.msra.mxu0 0.0
      %1958 = vmatprep.subr.mxu0 0.0
      %1959 = vmatpush1.xpose.msra.mxu0 0.0
      %1960 = vmatprep.subr.mxu0 0.0
      %1961 = vmatpush1.xpose.msra.mxu0 0.0
      %1962 = vmatprep.subr.mxu0 0.0
      %1963 = vmatpush1.xpose.msra.mxu0 0.0
      %1964 = vmatprep.subr.mxu0 0.0
      %1965 = vmatpush1.xpose.msra.mxu0 0.0
      %1966 = vmatprep.subr.mxu0 0.0
      %1967 = vmatpush1.xpose.msra.mxu0 0.0
      %1968 = vmatprep.subr.mxu0 0.0
      %1969 = vmatpush1.xpose.msra.mxu0 0.0
      %1970 = vmatprep.subr.mxu0 0.0
      %1971 = vmatpush1.xpose.msra.mxu0 0.0
      %1972 = vmatprep.subr.mxu0 0.0
      %1973 = vmatpush1.xpose.msra.mxu0 0.0
      %1974 = vmatprep.subr.mxu0 0.0
      %1975 = vmatpush1.xpose.msra.mxu0 0.0
      %1976 = vmatprep.subr.mxu0 0.0
      %1977 = vmatpush1.xpose.msra.mxu0 0.0
      %1978 = vmatprep.subr.mxu0 0.0
      %1979 = vmatpush1.xpose.msra.mxu0 0.0
      %1980 = vmatprep.subr.mxu0 0.0
      %1981 = vmatpush1.xpose.msra.mxu0 0.0
      %1982 = vmatprep.subr.mxu0 0.0
      %1983 = vmatpush1.xpose.msra.mxu0 0.0
      %1984 = vmatprep.subr.mxu0 0.0
      %1985 = vmatpush1.xpose.msra.mxu0 0.0
      %1986 = vmatprep.subr.mxu0 0.0
      %1987 = vmatpush1.xpose.msra.mxu0 0.0
      %1988 = vmatprep.subr.mxu0 0.0
      %1989 = vmatpush1.xpose.msra.mxu0 0.0
      %1990 = vmatprep.subr.mxu0 0.0
      %1991 = vmatpush1.xpose.msra.mxu0 0.0
      %1992 = vmatprep.subr.mxu0 0.0
      %1993 = vmatpush1.xpose.msra.mxu0 0.0
      %1994 = vmatprep.subr.mxu0 0.0
      %1995 = vmatpush1.xpose.msra.mxu0 0.0
      %1996 = vmatprep.subr.mxu0 0.0
      %1997 = vmatpush1.xpose.msra.mxu0 0.0
      %1998 = vmatprep.subr.mxu0 0.0
      %1999 = vmatpush1.xpose.msra.mxu0 0.0
      %2000 = vmatprep.subr.mxu0 0.0
      %2001 = vmatpush1.xpose.msra.mxu0 0.0
      %2002 = vmatprep.subr.mxu0 0.0
      %2003 = vmatpush1.xpose.msra.mxu0 0.0
      %2004 = vmatprep.subr.mxu0 0.0
      %2005 = vmatpush1.xpose.msra.mxu0 0.0
      %2006 = vmatprep.mubr.f32.mxu0 0.0
      %2007 = vmatmul.mubr.f32.gmra.mrb[0].mxu0 %v1936
      %v2008 = vpop.f32.mrb[0].mxu0
      %v2009 = vadd.f32 %v1587, %v2008
      %v2010 = vpop.f32.mrb[0].mxu0
      %2011 = vdwg.mxu0
      %v2012 = vsel %vm1667, %v2009, -inf
      %2013 = vmax.xlane.f32.xlu0 %v2012
      %v2014 = vpop.xlane.xlu0 %2013
      %v2015 = vsub.f32 %v2009, %v2014
      %v2016 = vmul.f32 %v2015, 1.442695
      %v2017 = vpow.pop %v2016
      %v2018 = vsel %vm1667, %v2017, 0.0
      %2019 = vadd.xlane.f32.xlu0 %v2018
      %v2020 = vpop.xlane.xlu0 %2019
      %v2021 = vrcp.pop %v2020
      %v2022 = vmul.f32 %v2017, %v2021
      %2023 = vrot.lane.b32.xlu0 %v1573, 112
      %v2024 = vpop.permute.xlu0 %2023
      %2025 = vrot.lane.b32.xlu0 %v1578, 112
      %v2026 = vpop.permute.xlu0 %2025
      %v2029 = vsel %vm1667, %v2022, 0
      %v2031 = vsel %vm1682, %v2026, 0
      %2033 = vmatprep.subr.mxu0 0.0
      %2034 = vmatpush1.msra.mxu0 %v2024
      %2035 = vmatprep.subr.mxu0 0.0
      %2036 = vmatpush1.msra.mxu0 %v2031
      %2037 = vmatprep.subr.mxu0 0.0
      %2038 = vmatpush1.msra.mxu0 0.0
      %2039 = vmatprep.subr.mxu0 0.0
      %2040 = vmatpush1.msra.mxu0 0.0
      %2041 = vmatprep.subr.mxu0 0.0
      %2042 = vmatpush1.msra.mxu0 0.0
      %2043 = vmatprep.subr.mxu0 0.0
      %2044 = vmatpush1.msra.mxu0 0.0
      %2045 = vmatprep.subr.mxu0 0.0
      %2046 = vmatpush1.msra.mxu0 0.0
      %2047 = vmatprep.subr.mxu0 0.0
      %2048 = vmatpush1.msra.mxu0 0.0
      %2049 = vmatprep.subr.mxu0 0.0
      %2050 = vmatpush1.msra.mxu0 0.0
      %2051 = vmatprep.subr.mxu0 0.0
      %2052 = vmatpush1.msra.mxu0 0.0
      %2053 = vmatprep.subr.mxu0 0.0
      %2054 = vmatpush1.msra.mxu0 0.0
      %2055 = vmatprep.subr.mxu0 0.0
      %2056 = vmatpush1.msra.mxu0 0.0
      %2057 = vmatprep.subr.mxu0 0.0
      %2058 = vmatpush1.msra.mxu0 0.0
      %2059 = vmatprep.subr.mxu0 0.0
      %2060 = vmatpush1.msra.mxu0 0.0
      %2061 = vmatprep.subr.mxu0 0.0
      %2062 = vmatpush1.msra.mxu0 0.0
      %2063 = vmatprep.subr.mxu0 0.0
      %2064 = vmatpush1.msra.mxu0 0.0
      %2065 = vmatprep.subr.mxu0 0.0
      %2066 = vmatpush1.msra.mxu0 0.0
      %2067 = vmatprep.subr.mxu0 0.0
      %2068 = vmatpush1.msra.mxu0 0.0
      %2069 = vmatprep.subr.mxu0 0.0
      %2070 = vmatpush1.msra.mxu0 0.0
      %2071 = vmatprep.subr.mxu0 0.0
      %2072 = vmatpush1.msra.mxu0 0.0
      %2073 = vmatprep.subr.mxu0 0.0
      %2074 = vmatpush1.msra.mxu0 0.0
      %2075 = vmatprep.subr.mxu0 0.0
      %2076 = vmatpush1.msra.mxu0 0.0
      %2077 = vmatprep.subr.mxu0 0.0
      %2078 = vmatpush1.msra.mxu0 0.0
      %2079 = vmatprep.subr.mxu0 0.0
      %2080 = vmatpush1.msra.mxu0 0.0
      %2081 = vmatprep.subr.mxu0 0.0
      %2082 = vmatpush1.msra.mxu0 0.0
      %2083 = vmatprep.subr.mxu0 0.0
      %2084 = vmatpush1.msra.mxu0 0.0
      %2085 = vmatprep.subr.mxu0 0.0
      %2086 = vmatpush1.msra.mxu0 0.0
      %2087 = vmatprep.subr.mxu0 0.0
      %2088 = vmatpush1.msra.mxu0 0.0
      %2089 = vmatprep.subr.mxu0 0.0
      %2090 = vmatpush1.msra.mxu0 0.0
      %2091 = vmatprep.subr.mxu0 0.0
      %2092 = vmatpush1.msra.mxu0 0.0
      %2093 = vmatprep.subr.mxu0 0.0
      %2094 = vmatpush1.msra.mxu0 0.0
      %2095 = vmatprep.subr.mxu0 0.0
      %2096 = vmatpush1.msra.mxu0 0.0
      %2097 = vmatprep.mubr.f32.mxu0 0.0
      %2098 = vmatmul.mubr.f32.gmra.mrb[0].mxu0 %v2029
      %v2099 = vpop.f32.mrb[0].mxu0
      %v2100 = vadd.f32 0.0, %v2099
      %v2101 = vpop.f32.mrb[0].mxu0
      %2102 = vdwg.mxu0
      %2103 = vrot.lane.b32.xlu0 %v1583, 104
      %v2104 = vpop.permute.xlu0 %2103
      %2105 = vrot.lane.b32.xlu0 %v1483, 104
      %v2106 = vpop.permute.xlu0 %2105
      %2107 = vrot.lane.b32.xlu0 %v1488, 104
      %v2108 = vpop.permute.xlu0 %2107
      %v2109 = vsel %vm535, %v2104, 0
      %v2111 = vsel %vm535, %v2106, 0
      %v2113 = vsel %vm535, %v2108, 0
      %2115 = vmatprep.subr.mxu0 0.0
      %2116 = vmatpush1.xpose.msra.mxu0 %v2111
      %2117 = vmatprep.subr.mxu0 0.0
      %2118 = vmatpush1.xpose.msra.mxu0 %v2113
      %2119 = vmatprep.subr.mxu0 0.0
      %2120 = vmatpush1.xpose.msra.mxu0 0.0
      %2121 = vmatprep.subr.mxu0 0.0
      %2122 = vmatpush1.xpose.msra.mxu0 0.0
      %2123 = vmatprep.subr.mxu0 0.0
      %2124 = vmatpush1.xpose.msra.mxu0 0.0
      %2125 = vmatprep.subr.mxu0 0.0
      %2126 = vmatpush1.xpose.msra.mxu0 0.0
      %2127 = vmatprep.subr.mxu0 0.0
      %2128 = vmatpush1.xpose.msra.mxu0 0.0
      %2129 = vmatprep.subr.mxu0 0.0
      %2130 = vmatpush1.xpose.msra.mxu0 0.0
      %2131 = vmatprep.subr.mxu0 0.0
      %2132 = vmatpush1.xpose.msra.mxu0 0.0
      %2133 = vmatprep.subr.mxu0 0.0
      %2134 = vmatpush1.xpose.msra.mxu0 0.0
      %2135 = vmatprep.subr.mxu0 0.0
      %2136 = vmatpush1.xpose.msra.mxu0 0.0
      %2137 = vmatprep.subr.mxu0 0.0
      %2138 = vmatpush1.xpose.msra.mxu0 0.0
      %2139 = vmatprep.subr.mxu0 0.0
      %2140 = vmatpush1.xpose.msra.mxu0 0.0
      %2141 = vmatprep.subr.mxu0 0.0
      %2142 = vmatpush1.xpose.msra.mxu0 0.0
      %2143 = vmatprep.subr.mxu0 0.0
      %2144 = vmatpush1.xpose.msra.mxu0 0.0
      %2145 = vmatprep.subr.mxu0 0.0
      %2146 = vmatpush1.xpose.msra.mxu0 0.0
      %2147 = vmatprep.subr.mxu0 0.0
      %2148 = vmatpush1.xpose.msra.mxu0 0.0
      %2149 = vmatprep.subr.mxu0 0.0
      %2150 = vmatpush1.xpose.msra.mxu0 0.0
      %2151 = vmatprep.subr.mxu0 0.0
      %2152 = vmatpush1.xpose.msra.mxu0 0.0
      %2153 = vmatprep.subr.mxu0 0.0
      %2154 = vmatpush1.xpose.msra.mxu0 0.0
      %2155 = vmatprep.subr.mxu0 0.0
      %2156 = vmatpush1.xpose.msra.mxu0 0.0
      %2157 = vmatprep.subr.mxu0 0.0
      %2158 = vmatpush1.xpose.msra.mxu0 0.0
      %2159 = vmatprep.subr.mxu0 0.0
      %2160 = vmatpush1.xpose.msra.mxu0 0.0
      %2161 = vmatprep.subr.mxu0 0.0
      %2162 = vmatpush1.xpose.msra.mxu0 0.0
      %2163 = vmatprep.subr.mxu0 0.0
      %2164 = vmatpush1.xpose.msra.mxu0 0.0
      %2165 = vmatprep.subr.mxu0 0.0
      %2166 = vmatpush1.xpose.msra.mxu0 0.0
      %2167 = vmatprep.subr.mxu0 0.0
      %2168 = vmatpush1.xpose.msra.mxu0 0.0
      %2169 = vmatprep.subr.mxu0 0.0
      %2170 = vmatpush1.xpose.msra.mxu0 0.0
      %2171 = vmatprep.subr.mxu0 0.0
      %2172 = vmatpush1.xpose.msra.mxu0 0.0
      %2173 = vmatprep.subr.mxu0 0.0
      %2174 = vmatpush1.xpose.msra.mxu0 0.0
      %2175 = vmatprep.subr.mxu0 0.0
      %2176 = vmatpush1.xpose.msra.mxu0 0.0
      %2177 = vmatprep.subr.mxu0 0.0
      %2178 = vmatpush1.xpose.msra.mxu0 0.0
      %2179 = vmatprep.mubr.f32.mxu0 0.0
      %2180 = vmatmul.mubr.f32.gmra.mrb[0].mxu0 %v2109
      %v2181 = vpop.f32.mrb[0].mxu0
      %v2182 = vadd.f32 %v1587, %v2181
      %v2183 = vpop.f32.mrb[0].mxu0
      %2184 = vdwg.mxu0
      %v2185 = vsel %vm1667, %v2182, -inf
      %2186 = vmax.xlane.f32.xlu0 %v2185
      %v2187 = vpop.xlane.xlu0 %2186
      %v2188 = vsub.f32 %v2182, %v2187
      %v2189 = vmul.f32 %v2188, 1.442695
      %v2190 = vpow.pop %v2189
      %v2191 = vsel %vm1667, %v2190, 0.0
      %2192 = vadd.xlane.f32.xlu0 %v2191
      %v2193 = vpop.xlane.xlu0 %2192
      %v2194 = vrcp.pop %v2193
      %v2195 = vmul.f32 %v2190, %v2194
      %2196 = vrot.lane.b32.xlu0 %v1573, 104
      %v2197 = vpop.permute.xlu0 %2196
      %2198 = vrot.lane.b32.xlu0 %v1578, 104
      %v2199 = vpop.permute.xlu0 %2198
      %v2202 = vsel %vm1667, %v2195, 0
      %v2204 = vsel %vm1682, %v2199, 0
      %2206 = vmatprep.subr.mxu0 0.0
      %2207 = vmatpush1.msra.mxu0 %v2197
      %2208 = vmatprep.subr.mxu0 0.0
      %2209 = vmatpush1.msra.mxu0 %v2204
      %2210 = vmatprep.subr.mxu0 0.0
      %2211 = vmatpush1.msra.mxu0 0.0
      %2212 = vmatprep.subr.mxu0 0.0
      %2213 = vmatpush1.msra.mxu0 0.0
      %2214 = vmatprep.subr.mxu0 0.0
      %2215 = vmatpush1.msra.mxu0 0.0
      %2216 = vmatprep.subr.mxu0 0.0
      %2217 = vmatpush1.msra.mxu0 0.0
      %2218 = vmatprep.subr.mxu0 0.0
      %2219 = vmatpush1.msra.mxu0 0.0
      %2220 = vmatprep.subr.mxu0 0.0
      %2221 = vmatpush1.msra.mxu0 0.0
      %2222 = vmatprep.subr.mxu0 0.0
      %2223 = vmatpush1.msra.mxu0 0.0
      %2224 = vmatprep.subr.mxu0 0.0
      %2225 = vmatpush1.msra.mxu0 0.0
      %2226 = vmatprep.subr.mxu0 0.0
      %2227 = vmatpush1.msra.mxu0 0.0
      %2228 = vmatprep.subr.mxu0 0.0
      %2229 = vmatpush1.msra.mxu0 0.0
      %2230 = vmatprep.subr.mxu0 0.0
      %2231 = vmatpush1.msra.mxu0 0.0
      %2232 = vmatprep.subr.mxu0 0.0
      %2233 = vmatpush1.msra.mxu0 0.0
      %2234 = vmatprep.subr.mxu0 0.0
      %2235 = vmatpush1.msra.mxu0 0.0
      %2236 = vmatprep.subr.mxu0 0.0
      %2237 = vmatpush1.msra.mxu0 0.0
      %2238 = vmatprep.subr.mxu0 0.0
      %2239 = vmatpush1.msra.mxu0 0.0
      %2240 = vmatprep.subr.mxu0 0.0
      %2241 = vmatpush1.msra.mxu0 0.0
      %2242 = vmatprep.subr.mxu0 0.0
      %2243 = vmatpush1.msra.mxu0 0.0
      %2244 = vmatprep.subr.mxu0 0.0
      %2245 = vmatpush1.msra.mxu0 0.0
      %2246 = vmatprep.subr.mxu0 0.0
      %2247 = vmatpush1.msra.mxu0 0.0
      %2248 = vmatprep.subr.mxu0 0.0
      %2249 = vmatpush1.msra.mxu0 0.0
      %2250 = vmatprep.subr.mxu0 0.0
      %2251 = vmatpush1.msra.mxu0 0.0
      %2252 = vmatprep.subr.mxu0 0.0
      %2253 = vmatpush1.msra.mxu0 0.0
      %2254 = vmatprep.subr.mxu0 0.0
      %2255 = vmatpush1.msra.mxu0 0.0
      %2256 = vmatprep.subr.mxu0 0.0
      %2257 = vmatpush1.msra.mxu0 0.0
      %2258 = vmatprep.subr.mxu0 0.0
      %2259 = vmatpush1.msra.mxu0 0.0
      %2260 = vmatprep.subr.mxu0 0.0
      %2261 = vmatpush1.msra.mxu0 0.0
      %2262 = vmatprep.subr.mxu0 0.0
      %2263 = vmatpush1.msra.mxu0 0.0
      %2264 = vmatprep.subr.mxu0 0.0
      %2265 = vmatpush1.msra.mxu0 0.0
      %2266 = vmatprep.subr.mxu0 0.0
      %2267 = vmatpush1.msra.mxu0 0.0
      %2268 = vmatprep.subr.mxu0 0.0
      %2269 = vmatpush1.msra.mxu0 0.0
      %2270 = vmatprep.mubr.f32.mxu0 0.0
      %2271 = vmatmul.mubr.f32.gmra.mrb[0].mxu0 %v2202
      %v2272 = vpop.f32.mrb[0].mxu0
      %v2273 = vadd.f32 0.0, %v2272
      %v2274 = vpop.f32.mrb[0].mxu0
      %2275 = vdwg.mxu0
      %2277 = vrot.lane.b32.xlu0 %v1927, 8
      %v2278 = vpop.permute.xlu0 %2277
      %2281 = vrot.lane.b32.xlu0 %v2100, 16
      %v2282 = vpop.permute.xlu0 %2281
      %2285 = vrot.lane.b32.xlu0 %v2273, 24
      %v2286 = vpop.permute.xlu0 %2285
      %v2288 = vsel %vm535, %v1753, %v2278
      %v2289 = vsel %vm1206, %v2288, %v2282
      %v2290 = vsel %vm1208, %v2289, %v2286
      %s2291 = scalar_lea.vmem %s6, 128
      %v2292 = vld [vmem:[%s2291] sm:$0xff]
      %v2293 = vld [vmem:[%s2291 + $0x8] sm:$0xff]
      %v2294 = vld [vmem:[%s2291 + $0x10] sm:$0xff]
      %v2295 = vld [vmem:[%s2291 + $0x18] sm:$0xff]
      %v2296 = vlaneseq
      %v2297 = vshrl.u32 %v2296, 7
      %v2298 = vsub.s32 2, %v2297
      %v2299 = vrot.slane %v446, %v2298
      %v2301 = vsel %vm457, %v2290, 0
      %2303 = vmatprep.subr.mxu0 0.0
      %2304 = vmatpush1.msra.mxu0 %v2292
      %2305 = vmatprep.subr.mxu0 0.0
      %2306 = vmatpush1.msra.mxu0 %v2293
      %2307 = vmatprep.subr.mxu0 0.0
      %2308 = vmatpush1.msra.mxu0 %v2294
      %2309 = vmatprep.subr.mxu0 0.0
      %2310 = vmatpush1.msra.mxu0 %v2295
      %2311 = vmatprep.subr.mxu0 0.0
      %2312 = vmatpush1.msra.mxu0 0.0
      %2313 = vmatprep.subr.mxu0 0.0
      %2314 = vmatpush1.msra.mxu0 0.0
      %2315 = vmatprep.subr.mxu0 0.0
      %2316 = vmatpush1.msra.mxu0 0.0
      %2317 = vmatprep.subr.mxu0 0.0
      %2318 = vmatpush1.msra.mxu0 0.0
      %2319 = vmatprep.subr.mxu0 0.0
      %2320 = vmatpush1.msra.mxu0 0.0
      %2321 = vmatprep.subr.mxu0 0.0
      %2322 = vmatpush1.msra.mxu0 0.0
      %2323 = vmatprep.subr.mxu0 0.0
      %2324 = vmatpush1.msra.mxu0 0.0
      %2325 = vmatprep.subr.mxu0 0.0
      %2326 = vmatpush1.msra.mxu0 0.0
      %2327 = vmatprep.subr.mxu0 0.0
      %2328 = vmatpush1.msra.mxu0 0.0
      %2329 = vmatprep.subr.mxu0 0.0
      %2330 = vmatpush1.msra.mxu0 0.0
      %2331 = vmatprep.subr.mxu0 0.0
      %2332 = vmatpush1.msra.mxu0 0.0
      %2333 = vmatprep.subr.mxu0 0.0
      %2334 = vmatpush1.msra.mxu0 0.0
      %2335 = vmatprep.subr.mxu0 0.0
      %2336 = vmatpush1.msra.mxu0 0.0
      %2337 = vmatprep.subr.mxu0 0.0
      %2338 = vmatpush1.msra.mxu0 0.0
      %2339 = vmatprep.subr.mxu0 0.0
      %2340 = vmatpush1.msra.mxu0 0.0
      %2341 = vmatprep.subr.mxu0 0.0
      %2342 = vmatpush1.msra.mxu0 0.0
      %2343 = vmatprep.subr.mxu0 0.0
      %2344 = vmatpush1.msra.mxu0 0.0
      %2345 = vmatprep.subr.mxu0 0.0
      %2346 = vmatpush1.msra.mxu0 0.0
      %2347 = vmatprep.subr.mxu0 0.0
      %2348 = vmatpush1.msra.mxu0 0.0
      %2349 = vmatprep.subr.mxu0 0.0
      %2350 = vmatpush1.msra.mxu0 0.0
      %2351 = vmatprep.subr.mxu0 0.0
      %2352 = vmatpush1.msra.mxu0 0.0
      %2353 = vmatprep.subr.mxu0 0.0
      %2354 = vmatpush1.msra.mxu0 0.0
      %2355 = vmatprep.subr.mxu0 0.0
      %2356 = vmatpush1.msra.mxu0 0.0
      %2357 = vmatprep.subr.mxu0 0.0
      %2358 = vmatpush1.msra.mxu0 0.0
      %2359 = vmatprep.subr.mxu0 0.0
      %2360 = vmatpush1.msra.mxu0 0.0
      %2361 = vmatprep.subr.mxu0 0.0
      %2362 = vmatpush1.msra.mxu0 0.0
      %2363 = vmatprep.subr.mxu0 0.0
      %2364 = vmatpush1.msra.mxu0 0.0
      %2365 = vmatprep.subr.mxu0 0.0
      %2366 = vmatpush1.msra.mxu0 0.0
      %2367 = vmatprep.mubr.f32.mxu0 0.0
      %2368 = vmatmul.mubr.f32.gmra.mrb[0].mxu0 %v2301
      %v2369 = vpop.f32.mrb[0].mxu0
      %v2370 = vadd.f32 %v2299, %v2369
      %v2371 = vpop.f32.mrb[0].mxu0
      %2372 = vdwg.mxu0
      %v2373 = vadd.f32 %v1315, %v2370
      %v2374 = vsel %vm457, %v2373, 0.0
      %2375 = vadd.xlane.f32.xlu0 %v2374
      %v2376 = vpop.xlane.xlu0 %2375
      %v2377 = vmul.f32 %v2376, %v1295
      %v2378 = vsub.f32 %v2373, %v2377
      %v2379 = vmul.f32 %v2378, %v2378
      %v2380 = vsel %vm457, %v2379, 0.0
      %2381 = vadd.xlane.f32.xlu0 %v2380
      %v2382 = vpop.xlane.xlu0 %2381
      %v2383 = vmul.f32 %v2382, %v1295
      %v2384 = vadd.f32 %v2383, 1e-05
      %v2385 = vrsqrt.pop %v2384
      %v2386 = vmul.f32 %v2378, %v2385
      %v2387 = vlaneseq
      %v2388 = vshrl.u32 %v2387, 7
      %v2389 = vsub.s32 2, %v2388
      %v2390 = vrot.slane %v445, %v2389
      %v2391 = vmul.f32 %v2386, %v2390
      %v2392 = vlaneseq
      %v2393 = vshrl.u32 %v2392, 7
      %v2394 = vsub.s32 3, %v2393
      %v2395 = vrot.slane %v445, %v2394
      %v2396 = vadd.f32 %v2391, %v2395
      %v2397 = vld [vmem:[%s7] sm:$0xff]
      %v2398 = vld [vmem:[%s7 + $0x8] sm:$0xff]
      %v2399 = vld [vmem:[%s7 + $0x10] sm:$0xff]
      %v2400 = vld [vmem:[%s7 + $0x18] sm:$0xff]
      %v2401 = vld [vmem:[%s10 + $0x1] sm:$0x1]
      %v2402 = vlaneseq
      %v2403 = vshrl.u32 %v2402, 7
      %v2404 = vsub.s32 0, %v2403
      %v2405 = vrot.slane %v2401, %v2404
      %v2407 = vsel %vm457, %v2396, 0
      %2409 = vmatprep.subr.mxu0 0.0
      %2410 = vmatpush1.msra.mxu0 %v2397
      %2411 = vmatprep.subr.mxu0 0.0
      %2412 = vmatpush1.msra.mxu0 %v2398
      %2413 = vmatprep.subr.mxu0 0.0
      %2414 = vmatpush1.msra.mxu0 %v2399
      %2415 = vmatprep.subr.mxu0 0.0
      %2416 = vmatpush1.msra.mxu0 %v2400
      %2417 = vmatprep.subr.mxu0 0.0
      %2418 = vmatpush1.msra.mxu0 0.0
      %2419 = vmatprep.subr.mxu0 0.0
      %2420 = vmatpush1.msra.mxu0 0.0
      %2421 = vmatprep.subr.mxu0 0.0
      %2422 = vmatpush1.msra.mxu0 0.0
      %2423 = vmatprep.subr.mxu0 0.0
      %2424 = vmatpush1.msra.mxu0 0.0
      %2425 = vmatprep.subr.mxu0 0.0
      %2426 = vmatpush1.msra.mxu0 0.0
      %2427 = vmatprep.subr.mxu0 0.0
      %2428 = vmatpush1.msra.mxu0 0.0
      %2429 = vmatprep.subr.mxu0 0.0
      %2430 = vmatpush1.msra.mxu0 0.0
      %2431 = vmatprep.subr.mxu0 0.0
      %2432 = vmatpush1.msra.mxu0 0.0
      %2433 = vmatprep.subr.mxu0 0.0
      %2434 = vmatpush1.msra.mxu0 0.0
      %2435 = vmatprep.subr.mxu0 0.0
      %2436 = vmatpush1.msra.mxu0 0.0
      %2437 = vmatprep.subr.mxu0 0.0
      %2438 = vmatpush1.msra.mxu0 0.0
      %2439 = vmatprep.subr.mxu0 0.0
      %2440 = vmatpush1.msra.mxu0 0.0
      %2441 = vmatprep.subr.mxu0 0.0
      %2442 = vmatpush1.msra.mxu0 0.0
      %2443 = vmatprep.subr.mxu0 0.0
      %2444 = vmatpush1.msra.mxu0 0.0
      %2445 = vmatprep.subr.mxu0 0.0
      %2446 = vmatpush1.msra.mxu0 0.0
      %2447 = vmatprep.subr.mxu0 0.0
      %2448 = vmatpush1.msra.mxu0 0.0
      %2449 = vmatprep.subr.mxu0 0.0
      %2450 = vmatpush1.msra.mxu0 0.0
      %2451 = vmatprep.subr.mxu0 0.0
      %2452 = vmatpush1.msra.mxu0 0.0
      %2453 = vmatprep.subr.mxu0 0.0
      %2454 = vmatpush1.msra.mxu0 0.0
      %2455 = vmatprep.subr.mxu0 0.0
      %2456 = vmatpush1.msra.mxu0 0.0
      %2457 = vmatprep.subr.mxu0 0.0
      %2458 = vmatpush1.msra.mxu0 0.0
      %2459 = vmatprep.subr.mxu0 0.0
      %2460 = vmatpush1.msra.mxu0 0.0
      %2461 = vmatprep.subr.mxu0 0.0
      %2462 = vmatpush1.msra.mxu0 0.0
      %2463 = vmatprep.subr.mxu0 0.0
      %2464 = vmatpush1.msra.mxu0 0.0
      %2465 = vmatprep.subr.mxu0 0.0
      %2466 = vmatpush1.msra.mxu0 0.0
      %2467 = vmatprep.subr.mxu0 0.0
      %2468 = vmatpush1.msra.mxu0 0.0
      %2469 = vmatprep.subr.mxu0 0.0
      %2470 = vmatpush1.msra.mxu0 0.0
      %2471 = vmatprep.subr.mxu0 0.0
      %2472 = vmatpush1.msra.mxu0 0.0
      %2473 = vmatprep.mubr.f32.mxu0 0.0
      %2474 = vmatmul.mubr.f32.gmra.mrb[0].mxu0 %v2407
      %v2475 = vpop.f32.mrb[0].mxu0
      %v2476 = vadd.f32 %v2405, %v2475
      %v2477 = vpop.f32.mrb[0].mxu0
      %2478 = vdwg.mxu0
      %v2479 = vmax.f32 %v2476, 0.0
      %v2480 = vld [vmem:[%s8] sm:$0xff]
      %v2481 = vld [vmem:[%s8 + $0x8] sm:$0xff]
      %v2482 = vld [vmem:[%s8 + $0x10] sm:$0xff]
      %v2483 = vld [vmem:[%s8 + $0x18] sm:$0xff]
      %v2484 = vld [vmem:[%s8 + $0x20] sm:$0xff]
      %v2485 = vld [vmem:[%s8 + $0x28] sm:$0xff]
      %v2486 = vld [vmem:[%s8 + $0x30] sm:$0xff]
      %v2487 = vld [vmem:[%s8 + $0x38] sm:$0xff]
      %v2488 = vlaneseq
      %v2489 = vshrl.u32 %v2488, 7
      %v2490 = vsub.s32 3, %v2489
      %v2491 = vrot.slane %v446, %v2490
      %vm2492 = vcmask 523264
      %v2494 = vsel %vm2492, %v2479, 0
      %2496 = vmatprep.subr.mxu0 0.0
      %2497 = vmatpush1.msra.mxu0 %v2480
      %2498 = vmatprep.subr.mxu0 0.0
      %2499 = vmatpush1.msra.mxu0 %v2481
      %2500 = vmatprep.subr.mxu0 0.0
      %2501 = vmatpush1.msra.mxu0 %v2482
      %2502 = vmatprep.subr.mxu0 0.0
      %2503 = vmatpush1.msra.mxu0 %v2483
      %2504 = vmatprep.subr.mxu0 0.0
      %2505 = vmatpush1.msra.mxu0 %v2484
      %2506 = vmatprep.subr.mxu0 0.0
      %2507 = vmatpush1.msra.mxu0 %v2485
      %2508 = vmatprep.subr.mxu0 0.0
      %2509 = vmatpush1.msra.mxu0 %v2486
      %2510 = vmatprep.subr.mxu0 0.0
      %2511 = vmatpush1.msra.mxu0 %v2487
      %2512 = vmatprep.subr.mxu0 0.0
      %2513 = vmatpush1.msra.mxu0 0.0
      %2514 = vmatprep.subr.mxu0 0.0
      %2515 = vmatpush1.msra.mxu0 0.0
      %2516 = vmatprep.subr.mxu0 0.0
      %2517 = vmatpush1.msra.mxu0 0.0
      %2518 = vmatprep.subr.mxu0 0.0
      %2519 = vmatpush1.msra.mxu0 0.0
      %2520 = vmatprep.subr.mxu0 0.0
      %2521 = vmatpush1.msra.mxu0 0.0
      %2522 = vmatprep.subr.mxu0 0.0
      %2523 = vmatpush1.msra.mxu0 0.0
      %2524 = vmatprep.subr.mxu0 0.0
      %2525 = vmatpush1.msra.mxu0 0.0
      %2526 = vmatprep.subr.mxu0 0.0
      %2527 = vmatpush1.msra.mxu0 0.0
      %2528 = vmatprep.subr.mxu0 0.0
      %2529 = vmatpush1.msra.mxu0 0.0
      %2530 = vmatprep.subr.mxu0 0.0
      %2531 = vmatpush1.msra.mxu0 0.0
      %2532 = vmatprep.subr.mxu0 0.0
      %2533 = vmatpush1.msra.mxu0 0.0
      %2534 = vmatprep.subr.mxu0 0.0
      %2535 = vmatpush1.msra.mxu0 0.0
      %2536 = vmatprep.subr.mxu0 0.0
      %2537 = vmatpush1.msra.mxu0 0.0
      %2538 = vmatprep.subr.mxu0 0.0
      %2539 = vmatpush1.msra.mxu0 0.0
      %2540 = vmatprep.subr.mxu0 0.0
      %2541 = vmatpush1.msra.mxu0 0.0
      %2542 = vmatprep.subr.mxu0 0.0
      %2543 = vmatpush1.msra.mxu0 0.0
      %2544 = vmatprep.subr.mxu0 0.0
      %2545 = vmatpush1.msra.mxu0 0.0
      %2546 = vmatprep.subr.mxu0 0.0
      %2547 = vmatpush1.msra.mxu0 0.0
      %2548 = vmatprep.subr.mxu0 0.0
      %2549 = vmatpush1.msra.mxu0 0.0
      %2550 = vmatprep.subr.mxu0 0.0
      %2551 = vmatpush1.msra.mxu0 0.0
      %2552 = vmatprep.subr.mxu0 0.0
      %2553 = vmatpush1.msra.mxu0 0.0
      %2554 = vmatprep.subr.mxu0 0.0
      %2555 = vmatpush1.msra.mxu0 0.0
      %2556 = vmatprep.subr.mxu0 0.0
      %2557 = vmatpush1.msra.mxu0 0.0
      %2558 = vmatprep.subr.mxu0 0.0
      %2559 = vmatpush1.msra.mxu0 0.0
      %2560 = vmatprep.mubr.f32.mxu0 0.0
      %2561 = vmatmul.mubr.f32.gmra.mrb[0].mxu0 %v2494
      %v2562 = vpop.f32.mrb[0].mxu0
      %v2563 = vadd.f32 %v2491, %v2562
      %v2564 = vpop.f32.mrb[0].mxu0
      %2565 = vdwg.mxu0
      %v2566 = vadd.f32 %v2396, %v2563
      %v2567 = vsel %vm457, %v2566, 0.0
      %2568 = vadd.xlane.f32.xlu0 %v2567
      %v2569 = vpop.xlane.xlu0 %2568
      %v2570 = vmul.f32 %v2569, %v1295
      %v2571 = vsub.f32 %v2566, %v2570
      %v2572 = vmul.f32 %v2571, %v2571
      %v2573 = vsel %vm457, %v2572, 0.0
      %2574 = vadd.xlane.f32.xlu0 %v2573
      %v2575 = vpop.xlane.xlu0 %2574
      %v2576 = vmul.f32 %v2575, %v1295
      %v2577 = vadd.f32 %v2576, 1e-05
      %v2578 = vrsqrt.pop %v2577
      %v2579 = vmul.f32 %v2571, %v2578
      %v2580 = vlaneseq
      %v2581 = vshrl.u32 %v2580, 7
      %v2582 = vsub.s32 4, %v2581
      %v2583 = vrot.slane %v445, %v2582
      %v2584 = vmul.f32 %v2579, %v2583
      %v2585 = vlaneseq
      %v2586 = vshrl.u32 %v2585, 7
      %v2587 = vsub.s32 5, %v2586
      %v2588 = vrot.slane %v445, %v2587
      %v2589 = vadd.f32 %v2584, %v2588
      %2590 = vst.msk [vmem:[%s438] sm:$0xff] %vm457, %v2589
      %p2591 = scmp.lt.s32.totalorder %s22, 1
      %s2592 = scalar_select %p2591, %s22, 1
      %s2593 = smul.addr %s2592, 8
      %s2594 = scalar_lea.vmem %s11, %s2593
      // Predicated region
      $region65: #{transformer_decoder_layer.1} parent=63 // pred_check
        %p2595 = pneg %p291
      $region66: #{transformer_decoder_layer.1} parent=63 // pred_check_branch
        %2597 = sbr.rel (%p2595) target = $region68
      $region67: #{transformer_decoder_layer.1} parent=63 // pred_region
        _
      $region68: #{transformer_decoder_layer.1} parent=63 // pred_fallthru
        _
    $region64: #{transformer_decoder_layer.1} parent=5 // pred_fallthru
      _
    %p2598 = scmp.le.s32.totalorder 2, %s17
    // Predicated region
    $region69: #{transformer_decoder_layer.1} parent=5 // pred_check
      %p2599 = pneg %p2598
    $region70: #{transformer_decoder_layer.1} parent=5 // pred_check_branch
      %2601 = sbr.rel (%p2599) target = $region72
    $region71: #{transformer_decoder_layer.1} parent=5 // pred_region
      %s2602 = ssub.s32 %s17, 2
      // Predicated region
      $region73: #{transformer_decoder_layer.1} parent=71 // pred_check
        %p2603 = pneg %p297
      $region74: #{transformer_decoder_layer.1} parent=71 // pred_check_branch
        %2605 = sbr.rel (%p2603) target = $region76
      $region75: #{transformer_decoder_layer.1} parent=71 // pred_region
        %p2606 = scmp.lt.s32.totalorder %s23, 1
        %s2607 = scalar_select %p2606, %s23, 1
        %s2608 = smul.addr %s2607, 8
        %s2609 = scalar_lea.vmem %s11, %s2608
      $region76: #{transformer_decoder_layer.1} parent=71 // pred_fallthru
        _
    $region72: #{transformer_decoder_layer.1} parent=5 // pred_fallthru
      _
  $region6: #{transformer_decoder_layer.1} parent=0 // loop_footer
    %s21 = sadd.s32 1, %s17
  $region7: #{transformer_decoder_layer.1} parent=0 // loop_footer_branch
    %16 = sbr.rel target = $region3
  $region8: #{transformer_decoder_layer.1} parent=0 // loop_exit
    _

</llo_original>
